<compile_context>
chip_gen: v7x
topology: tpu7x:2x2x1
jax: 0.10.0
libtpu: 0.0.40
codegen_flags: <defaults>
</compile_context>

<pallas_src>
import functools

import jax
import jax.numpy as jnp
from jax.experimental import pallas as pl
from jax.experimental.pallas import tpu as pltpu


NEG_BIG = -1e30   # behaves like -inf in the softmax (exp underflows to 0)


def simclr_kernel(q_ref, kT_ref, part_ref, loss_ref, m_ref, l_ref, *,
                  inv_temp, block):
    qi = pl.program_id(0)          # row-tile index  ("parallel")
    ki = pl.program_id(1)          # col-tile index  ("arbitrary" reduction)

    @pl.when(ki == 0)
    def _init():
        m_ref[...] = jnp.full_like(m_ref, NEG_BIG)
        l_ref[...] = jnp.zeros_like(l_ref)

    # Fold 1/temp into the LHS tile: O(T*D) multiply instead of O(T*T) on sim.
    q = q_ref[...]
    q_scaled = q * inv_temp

    # (T, D) x (D, T) on the MXU with f32 accumulation (works for f32 or bf16 X).
    s = jnp.dot(q_scaled, kT_ref[...], preferred_element_type=jnp.float32)

    def online_update(s_blk):
        m_prev = m_ref[...]
        m_new = jnp.maximum(m_prev, jnp.max(s_blk, axis=1, keepdims=True))
        alpha = jnp.exp(m_prev - m_new)
        p = jnp.exp(s_blk - m_new)
        l_ref[...] = alpha * l_ref[...] + jnp.sum(p, axis=1, keepdims=True)
        m_ref[...] = m_new

    # Only diagonal blocks need the self-similarity mask. With TQ == TK == block,
    # global row == col  <=>  (qi == ki) and (local row == local col).
    @pl.when(qi == ki)
    def _diag_block():
        row = jax.lax.broadcasted_iota(jnp.int32, (block, block), 0)
        col = jax.lax.broadcasted_iota(jnp.int32, (block, block), 1)
        online_update(jnp.where(row == col, NEG_BIG, s))

    @pl.when(qi != ki)
    def _off_diag_block():
        online_update(s)

    @pl.when(ki == pl.num_programs(1) - 1)
    def _finalize():
        # Positive logit: rowwise dot with the other view of the same sample
        # (q_scaled already carries the 1/temp factor).  O(T*D) per row tile.
        pos = jnp.sum(q_scaled.astype(jnp.float32) *
                      part_ref[...].astype(jnp.float32),
                      axis=1, keepdims=True)
        loss_ref[...] = -pos + m_ref[...] + jnp.log(l_ref[...])


def simclr_loss(x, *, temperature=0.5, n_views=2, block=None):
    """Mean InfoNCE loss, matching SimCLR.forward with CrossEntropyLoss."""
    n, d = x.shape
    bs = n // n_views

    # Lane-dense feature dim: zero-pad D to a multiple of 128 lanes. Zero
    # padding changes no dot product, hence neither sim nor the loss.
    d_pad = ((d + 127) // 128) * 128
    if d_pad != d:
        x = jnp.pad(x, ((0, 0), (0, d_pad - d)))

    if block is None:
        block = 256 if n % 256 == 0 else 128
    assert n % block == 0, f"N={n} must be a multiple of the tile size {block}"

    x_partner = jnp.roll(x, shift=-bs, axis=0)   # partner(i) = (i + bs) % N
    xT = x.T                                     # pre-transposed RHS (D, N)

    n_blocks = n // block
    itemsize = jnp.dtype(x.dtype).itemsize
    cost = pl.CostEstimate(
        flops=2 * n * n * d_pad,
        transcendentals=n * n,
        bytes_accessed=(2 * n * d_pad * itemsize             # row + partner tiles
                        + n * d_pad * itemsize * n_blocks    # column tiles (re-read per row tile)
                        + n * 4),                            # per-row losses
    )

    per_row = pl.pallas_call(
        functools.partial(simclr_kernel,
                          inv_temp=1.0 / float(temperature),
                          block=block),
        out_shape=jax.ShapeDtypeStruct((n, 1), jnp.float32),
        grid_spec=pltpu.PrefetchScalarGridSpec(
            num_scalar_prefetch=0,
            grid=(n_blocks, n_blocks),
            in_specs=[
                pl.BlockSpec((block, d_pad), lambda qi, ki: (qi, 0)),   # X row tile
                pl.BlockSpec((d_pad, block), lambda qi, ki: (0, ki)),   # X^T col tile
                pl.BlockSpec((block, d_pad), lambda qi, ki: (qi, 0)),   # partner rows
            ],
            out_specs=pl.BlockSpec((block, 1), lambda qi, ki: (qi, 0)),
            scratch_shapes=[pltpu.VMEM((block, 1), jnp.float32),   # running max
                            pltpu.VMEM((block, 1), jnp.float32)],  # running sum
        ),
        compiler_params=pltpu.CompilerParams(
            dimension_semantics=("parallel", "arbitrary")),
        cost_estimate=cost,
    )(x, xT, x_partner)

    return jnp.mean(per_row)


def simclr_loss_ref(x, *, temperature=0.5, n_views=2):
    # Pure-JAX reference mirroring the PyTorch forward, for a sanity check.
    x = x.astype(jnp.float32)
    n = x.shape[0]
    bs = n // n_views
    sim = (x @ x.T) / temperature
    masked = jnp.where(jnp.eye(n, dtype=bool), -jnp.inf, sim)
    lse = jax.scipy.special.logsumexp(masked, axis=1)
    pos = sim[jnp.arange(n), (jnp.arange(n) + bs) % n]
    return jnp.mean(-pos + lse)


if __name__ == "__main__":
    key = jax.random.PRNGKey(0)
    bs, n_views, d = 256, 2, 96          # N = 512 rows, feature dim 96 (padded to 128)
    x = jax.random.normal(key, (n_views * bs, d), dtype=jnp.float32)
    # SimCLR-style L2-normalized embeddings (also keeps logits well conditioned).
    x = x / jnp.linalg.norm(x, axis=-1, keepdims=True)

    loss = simclr_loss(x, temperature=0.5, n_views=n_views)   # grid = (2, 2)
    loss = jax.block_until_ready(loss)

    ref = simclr_loss_ref(x, temperature=0.5, n_views=n_views)
    assert jnp.allclose(loss, ref, rtol=1e-4, atol=1e-4), (loss, ref)

    print("KERNEL_OK")
</pallas_src>

<mosaic_0001>
module attributes {stable_mosaic.version = 11 : i64} {
  func.func @simclr_kernel(%arg0: i32, %arg1: i32, %arg2: memref<256x128xf32, #tpu.memory_space<vmem>>, %arg3: memref<128x256xf32, #tpu.memory_space<vmem>>, %arg4: memref<256x128xf32, #tpu.memory_space<vmem>>, %arg5: memref<256x1xf32, #tpu.memory_space<vmem>>, %arg6: memref<256x1xf32, #tpu.memory_space<vmem>>, %arg7: memref<256x1xf32, #tpu.memory_space<vmem>>) attributes {dimension_semantics = [#tpu.dimension_semantics<parallel>, #tpu.dimension_semantics<arbitrary>], iteration_bounds = array<i64: 2, 2>, scalar_prefetch = 0 : i64, scratch_operands = 2 : i64, tpu.core_type = #tpu.core_type<tc>, window_params = [{transform_indices = @transform_0, window_bounds = array<i64: 256, 128>}, {transform_indices = @transform_1, window_bounds = array<i64: 128, 256>}, {transform_indices = @transform_2, window_bounds = array<i64: 256, 128>}, {transform_indices = @transform_3, window_bounds = array<i64: 256, 1>}]} {
    %c0_i32 = arith.constant 0 : i32
    %0 = arith.cmpi eq, %arg1, %c0_i32 : i32
    %1 = arith.extui %0 : i1 to i32
    %c0_i32_0 = arith.constant 0 : i32
    %2 = arith.cmpi ne, %1, %c0_i32_0 : i32
    scf.if %2 {
      %cst_8 = arith.constant -1.000000e+30 : f32
      %17 = vector.broadcast %cst_8 : f32 to vector<256x1xf32>
      %c0_9 = arith.constant 0 : index
      %c0_10 = arith.constant 0 : index
      %18 = vector.load %arg6[%c0_9, %c0_10] : memref<256x1xf32, #tpu.memory_space<vmem>>, vector<256x1xf32>
      tpu.vector_store %arg6[%c0_9, %c0_10], %17 {strides = array<i32>} : memref<256x1xf32, #tpu.memory_space<vmem>>, vector<256x1xf32>,
      %cst_11 = arith.constant 0.000000e+00 : f32
      %19 = vector.broadcast %cst_11 : f32 to vector<256x1xf32>
      %c0_12 = arith.constant 0 : index
      %c0_13 = arith.constant 0 : index
      %20 = vector.load %arg7[%c0_12, %c0_13] : memref<256x1xf32, #tpu.memory_space<vmem>>, vector<256x1xf32>
      tpu.vector_store %arg7[%c0_12, %c0_13], %19 {strides = array<i32>} : memref<256x1xf32, #tpu.memory_space<vmem>>, vector<256x1xf32>,
    } else {
    }
    %c0 = arith.constant 0 : index
    %c0_1 = arith.constant 0 : index
    %3 = vector.load %arg2[%c0, %c0_1] : memref<256x128xf32, #tpu.memory_space<vmem>>, vector<256x128xf32>
    %cst = arith.constant 2.000000e+00 : f32
    %4 = vector.broadcast %cst : f32 to vector<256x128xf32>
    %5 = arith.mulf %3, %4 : vector<256x128xf32>
    %c0_2 = arith.constant 0 : index
    %c0_3 = arith.constant 0 : index
    %6 = vector.load %arg3[%c0_2, %c0_3] : memref<128x256xf32, #tpu.memory_space<vmem>>, vector<128x256xf32>
    %cst_4 = arith.constant dense<0.000000e+00> : vector<256x256xf32>
    %7 = tpu.matmul %5, %6, %cst_4 {dimension_numbers = #tpu.dot_dimension_numbers<[1], [0], [0], [1], [0, 0, 1, 1], [], []>} : vector<256x128xf32>, vector<128x256xf32>, vector<256x256xf32> -> vector<256x256xf32>
    %8 = arith.cmpi eq, %arg0, %arg1 : i32
    %9 = arith.extui %8 : i1 to i32
    %c0_i32_5 = arith.constant 0 : i32
    %10 = arith.cmpi ne, %9, %c0_i32_5 : i32
    scf.if %10 {
      %17 = tpu.iota {dimensions = array<i32: 0>} : vector<256x256xi32>
      %18 = tpu.iota {dimensions = array<i32: 1>} : vector<256x256xi32>
      %19 = arith.cmpi eq, %17, %18 : vector<256x256xi32>
      %cst_8 = arith.constant -1.000000e+30 : f32
      %20 = vector.broadcast %cst_8 : f32 to vector<256x256xf32>
      %21 = arith.select %19, %20, %7 : vector<256x256xi1>, vector<256x256xf32>
      %c0_9 = arith.constant 0 : index
      %c0_10 = arith.constant 0 : index
      %22 = vector.load %arg6[%c0_9, %c0_10] : memref<256x1xf32, #tpu.memory_space<vmem>>, vector<256x1xf32>
      %cst_11 = arith.constant dense<0xFF800000> : vector<256xf32>
      %23 = vector.multi_reduction <maximumf>, %21, %cst_11 [1] : vector<256x256xf32> to vector<256xf32>
      %24 = vector.shape_cast %23 : vector<256xf32> to vector<256x1xf32>
      %25 = arith.maximumf %22, %24 : vector<256x1xf32>
      %26 = arith.subf %22, %25 : vector<256x1xf32>
      %27 = math.exp %26 : vector<256x1xf32>
      %28 = vector.broadcast %25 : vector<256x1xf32> to vector<256x256xf32>
      %29 = arith.subf %21, %28 : vector<256x256xf32>
      %30 = math.exp %29 : vector<256x256xf32>
      %c0_12 = arith.constant 0 : index
      %c0_13 = arith.constant 0 : index
      %31 = vector.load %arg7[%c0_12, %c0_13] : memref<256x1xf32, #tpu.memory_space<vmem>>, vector<256x1xf32>
      %32 = arith.mulf %27, %31 : vector<256x1xf32>
      %cst_14 = arith.constant dense<0.000000e+00> : vector<256xf32>
      %33 = vector.multi_reduction <add>, %30, %cst_14 [1] : vector<256x256xf32> to vector<256xf32>
      %34 = vector.shape_cast %33 : vector<256xf32> to vector<256x1xf32>
      %35 = arith.addf %32, %34 : vector<256x1xf32>
      %c0_15 = arith.constant 0 : index
      %c0_16 = arith.constant 0 : index
      %36 = vector.load %arg7[%c0_15, %c0_16] : memref<256x1xf32, #tpu.memory_space<vmem>>, vector<256x1xf32>
      tpu.vector_store %arg7[%c0_15, %c0_16], %35 {strides = array<i32>} : memref<256x1xf32, #tpu.memory_space<vmem>>, vector<256x1xf32>,
      %c0_17 = arith.constant 0 : index
      %c0_18 = arith.constant 0 : index
      %37 = vector.load %arg6[%c0_17, %c0_18] : memref<256x1xf32, #tpu.memory_space<vmem>>, vector<256x1xf32>
      tpu.vector_store %arg6[%c0_17, %c0_18], %25 {strides = array<i32>} : memref<256x1xf32, #tpu.memory_space<vmem>>, vector<256x1xf32>,
    } else {
    }
    %11 = arith.cmpi ne, %arg0, %arg1 : i32
    %12 = arith.extui %11 : i1 to i32
    %c0_i32_6 = arith.constant 0 : i32
    %13 = arith.cmpi ne, %12, %c0_i32_6 : i32
    scf.if %13 {
      %c0_8 = arith.constant 0 : index
      %c0_9 = arith.constant 0 : index
      %17 = vector.load %arg6[%c0_8, %c0_9] : memref<256x1xf32, #tpu.memory_space<vmem>>, vector<256x1xf32>
      %cst_10 = arith.constant dense<0xFF800000> : vector<256xf32>
      %18 = vector.multi_reduction <maximumf>, %7, %cst_10 [1] : vector<256x256xf32> to vector<256xf32>
      %19 = vector.shape_cast %18 : vector<256xf32> to vector<256x1xf32>
      %20 = arith.maximumf %17, %19 : vector<256x1xf32>
      %21 = arith.subf %17, %20 : vector<256x1xf32>
      %22 = math.exp %21 : vector<256x1xf32>
      %23 = vector.broadcast %20 : vector<256x1xf32> to vector<256x256xf32>
      %24 = arith.subf %7, %23 : vector<256x256xf32>
      %25 = math.exp %24 : vector<256x256xf32>
      %c0_11 = arith.constant 0 : index
      %c0_12 = arith.constant 0 : index
      %26 = vector.load %arg7[%c0_11, %c0_12] : memref<256x1xf32, #tpu.memory_space<vmem>>, vector<256x1xf32>
      %27 = arith.mulf %22, %26 : vector<256x1xf32>
      %cst_13 = arith.constant dense<0.000000e+00> : vector<256xf32>
      %28 = vector.multi_reduction <add>, %25, %cst_13 [1] : vector<256x256xf32> to vector<256xf32>
      %29 = vector.shape_cast %28 : vector<256xf32> to vector<256x1xf32>
      %30 = arith.addf %27, %29 : vector<256x1xf32>
      %c0_14 = arith.constant 0 : index
      %c0_15 = arith.constant 0 : index
      %31 = vector.load %arg7[%c0_14, %c0_15] : memref<256x1xf32, #tpu.memory_space<vmem>>, vector<256x1xf32>
      tpu.vector_store %arg7[%c0_14, %c0_15], %30 {strides = array<i32>} : memref<256x1xf32, #tpu.memory_space<vmem>>, vector<256x1xf32>,
      %c0_16 = arith.constant 0 : index
      %c0_17 = arith.constant 0 : index
      %32 = vector.load %arg6[%c0_16, %c0_17] : memref<256x1xf32, #tpu.memory_space<vmem>>, vector<256x1xf32>
      tpu.vector_store %arg6[%c0_16, %c0_17], %20 {strides = array<i32>} : memref<256x1xf32, #tpu.memory_space<vmem>>, vector<256x1xf32>,
    } else {
    }
    %c1_i32 = arith.constant 1 : i32
    %14 = arith.cmpi eq, %arg1, %c1_i32 : i32
    %15 = arith.extui %14 : i1 to i32
    %c0_i32_7 = arith.constant 0 : i32
    %16 = arith.cmpi ne, %15, %c0_i32_7 : i32
    scf.if %16 {
      %c0_8 = arith.constant 0 : index
      %c0_9 = arith.constant 0 : index
      %17 = vector.load %arg4[%c0_8, %c0_9] : memref<256x128xf32, #tpu.memory_space<vmem>>, vector<256x128xf32>
      %18 = arith.mulf %5, %17 : vector<256x128xf32>
      %cst_10 = arith.constant dense<0.000000e+00> : vector<256xf32>
      %19 = vector.multi_reduction <add>, %18, %cst_10 [1] : vector<256x128xf32> to vector<256xf32>
      %20 = vector.shape_cast %19 : vector<256xf32> to vector<256x1xf32>
      %cst_11 = arith.constant 0.000000e+00 : f32
      %21 = vector.broadcast %cst_11 : f32 to vector<256x1xf32>
      %22 = arith.subf %21, %20 : vector<256x1xf32>
      %c0_12 = arith.constant 0 : index
      %c0_13 = arith.constant 0 : index
      %23 = vector.load %arg6[%c0_12, %c0_13] : memref<256x1xf32, #tpu.memory_space<vmem>>, vector<256x1xf32>
      %24 = arith.addf %22, %23 : vector<256x1xf32>
      %c0_14 = arith.constant 0 : index
      %c0_15 = arith.constant 0 : index
      %25 = vector.load %arg7[%c0_14, %c0_15] : memref<256x1xf32, #tpu.memory_space<vmem>>, vector<256x1xf32>
      %26 = math.log %25 : vector<256x1xf32>
      %27 = arith.addf %24, %26 : vector<256x1xf32>
      %c0_16 = arith.constant 0 : index
      %c0_17 = arith.constant 0 : index
      %28 = vector.load %arg5[%c0_16, %c0_17] : memref<256x1xf32, #tpu.memory_space<vmem>>, vector<256x1xf32>
      tpu.vector_store %arg5[%c0_16, %c0_17], %27 {strides = array<i32>} : memref<256x1xf32, #tpu.memory_space<vmem>>, vector<256x1xf32>,
    } else {
    }
    return
  }
  func.func @transform_0(%arg0: i32, %arg1: i32) -> (i32, i32) {
    %c0_i32 = arith.constant 0 : i32
    %c0_i32_0 = arith.constant 0 : i32
    return %arg0, %c0_i32 : i32, i32
  }
  func.func @transform_1(%arg0: i32, %arg1: i32) -> (i32, i32) {
    %c0_i32 = arith.constant 0 : i32
    %c0_i32_0 = arith.constant 0 : i32
    return %c0_i32, %arg1 : i32, i32
  }
  func.func @transform_2(%arg0: i32, %arg1: i32) -> (i32, i32) {
    %c0_i32 = arith.constant 0 : i32
    %c0_i32_0 = arith.constant 0 : i32
    return %arg0, %c0_i32 : i32, i32
  }
  func.func @transform_3(%arg0: i32, %arg1: i32) -> (i32, i32) {
    %c0_i32 = arith.constant 0 : i32
    %c0_i32_0 = arith.constant 0 : i32
    return %arg0, %c0_i32 : i32, i32
  }
}

</mosaic_0001>

<llo_original>
// kernel: tpu_custom_call.1
$region0: #{tpu_custom_call.1}
  #allocation0 [shape = 'u32[]', space=smem, size = 0x4, offset = 0x4, fixed_abs, tag = 'smem constant byte address 0x4 - core index']
  #allocation1 [shape = 'u32[144,128]{1,0:T(1,128)}', space=vmem, size = 0x12000, scoped, tag = 'internal scratch']
  #allocation2 [shape = 'f32[256,1]{1,0:T(8,128)}', space=vmem, size = 0x20000, scoped, tag = 'scratch operand']
  #allocation3 [shape = 'f32[256,1]{1,0:T(8,128)}', space=vmem, size = 0x20000, scoped, tag = 'scratch operand']
  %s0 = inlined_call_operand.hbm [shape: f32[512,128], index: 0, kind: input, shape index: {}]
  %s1 = inlined_call_operand.hbm [shape: f32[128,512], index: 1, kind: input, shape index: {}]
  %s2 = inlined_call_operand.hbm [shape: f32[512,128], index: 2, kind: input, shape index: {}]
  %s3 = inlined_call_operand.vmem [shape: f32[512,1], index: 3, kind: output, shape index: {}]
  %s4 = sld [smem:[#allocation0]]
  $region73: #{tpu_custom_call.1} parent=0
    _
  %s6 = ssub.s32 1, %s4
  %s7 = scalar_select 0, %s6, %s4
  $region1: #{tpu_custom_call.1} parent=0
    #allocation4 [shape = 'u8[262144]{0}', space=vmem, size = 0x40000, scoped, tag = 'input window, operand 0']
    #allocation5 [shape = 's32[2]{0}', space=sflag, size = 0x8, scoped, tag = 'scoped memory for tpu_custom_call.1']
    #allocation6 [shape = 'u8[262144]{0}', space=vmem, size = 0x40000, scoped, tag = 'input window, operand 1']
    #allocation7 [shape = 's32[2]{0}', space=sflag, size = 0x8, scoped, tag = 'scoped memory for tpu_custom_call.1']
    #allocation8 [shape = 'u8[262144]{0}', space=vmem, size = 0x40000, scoped, tag = 'input window, operand 2']
    %8 = vsyncpa [#allocation5], 0
    %s9 = scalar_lea.sflag [#allocation5], 1
    %10 = vsyncpa %s9, 0
    %11 = vsyncpa [#allocation7], 0
    %s12 = scalar_lea.sflag [#allocation7], 1
    %13 = vsyncpa %s12, 0
    loop: start=0, step=1, limit=6
    $region2: #{tpu_custom_call.1} parent=1 // loop_pre_header
      _
    $region3: #{tpu_custom_call.1} parent=1 // loop_header
      %s15 = sphi 0, %s19
      %p16 = scmp.ge.s32.totalorder %s15, 6
      %s22 = sphi 0, %s34
      %s23 = sphi 0, %s30
      %s24 = sphi 0, %s22
      %s25 = sphi 0, %s23
      %s26 = sphi 0, %s24
      %s27 = sphi 0, %s25
      %s37 = sphi 0, %s39
      %s40 = sphi 0, %s37
      %s41 = sphi 0, %s40
      %s57 = sphi 0, %s41
      %s63 = sphi 0, %s65
      %s66 = sphi 0, %s63
      %s67 = sphi 0, %s66
      %s83 = sphi 0, %s67
      %s89 = sphi 0, %s91
      %s92 = sphi 0, %s89
      %s93 = sphi 0, %s92
      %s109 = sphi 0, %s93
      %s115 = sphi 0, %s117
      %s118 = sphi 0, %s115
      %s119 = sphi 0, %s118
      %s135 = sphi 0, %s119
    $region4: #{tpu_custom_call.1} parent=1 // loop_header_branch
      %18 = sbr.rel (%p16) target = $region8
    $region5: #{tpu_custom_call.1} parent=1 // loop_body
      %s20 = ssub.s32 %s15, 1
      %s21 = ssub.s32 %s15, 2
      %s28 = sadd.s32 1, %s23
      %p29 = scmp.ge.s32.totalorder %s28, 2
      %s30 = scalar_select %p29, 0, %s28
      %s31 = sadd.s32 1, %s22
      %s32 = scalar_select %p29, %s31, %s22
      %p33 = scmp.ge.s32.totalorder %s32, 2
      %s34 = scalar_select %p33, 0, %s32
      %s35 = ssub.s32 %s22, %s34
      %p36 = scmp.eq.s32.totalorder %s35, 0
      %s38 = sadd.s32 %s37, 1
      %s39 = scalar_select %p36, %s37, %s38
      %p42 = pneg %p36
      %p43 = scmp.eq.s32.totalorder %s15, 3
      %p44 = por %p42, %p43
      %p45 = scmp.ne.s32.totalorder %s37, %s40
      %p46 = scmp.eq.s32.totalorder %s15, 0
      %p47 = por %p45, %p46
      %p48 = scmp.ne.s32.totalorder %s37, %s40
      %p49 = scmp.eq.s32.totalorder %s20, 3
      %p50 = por %p48, %p49
      %p51 = scmp.ne.s32.totalorder %s40, %s41
      %p52 = scmp.eq.s32.totalorder %s20, 0
      %p53 = por %p51, %p52
      %p54 = scmp.ne.s32.totalorder %s40, %s41
      %p55 = scmp.eq.s32.totalorder %s21, 3
      %p56 = por %p54, %p55
      %p58 = scmp.ne.s32.totalorder %s41, %s57
      %p59 = scmp.eq.s32.totalorder %s21, 0
      %p60 = por %p58, %p59
      %s61 = ssub.s32 %s23, %s30
      %p62 = scmp.eq.s32.totalorder %s61, 0
      %s64 = sadd.s32 %s63, 1
      %s65 = scalar_select %p62, %s63, %s64
      %p68 = pneg %p62
      %p69 = scmp.eq.s32.totalorder %s15, 3
      %p70 = por %p68, %p69
      %p71 = scmp.ne.s32.totalorder %s63, %s66
      %p72 = scmp.eq.s32.totalorder %s15, 0
      %p73 = por %p71, %p72
      %p74 = scmp.ne.s32.totalorder %s63, %s66
      %p75 = scmp.eq.s32.totalorder %s20, 3
      %p76 = por %p74, %p75
      %p77 = scmp.ne.s32.totalorder %s66, %s67
      %p78 = scmp.eq.s32.totalorder %s20, 0
      %p79 = por %p77, %p78
      %p80 = scmp.ne.s32.totalorder %s66, %s67
      %p81 = scmp.eq.s32.totalorder %s21, 3
      %p82 = por %p80, %p81
      %p84 = scmp.ne.s32.totalorder %s67, %s83
      %p85 = scmp.eq.s32.totalorder %s21, 0
      %p86 = por %p84, %p85
      %s87 = ssub.s32 %s22, %s34
      %p88 = scmp.eq.s32.totalorder %s87, 0
      %s90 = sadd.s32 %s89, 1
      %s91 = scalar_select %p88, %s89, %s90
      %p94 = pneg %p88
      %p95 = scmp.eq.s32.totalorder %s15, 3
      %p96 = por %p94, %p95
      %p97 = scmp.ne.s32.totalorder %s89, %s92
      %p98 = scmp.eq.s32.totalorder %s15, 0
      %p99 = por %p97, %p98
      %p100 = scmp.ne.s32.totalorder %s89, %s92
      %p101 = scmp.eq.s32.totalorder %s20, 3
      %p102 = por %p100, %p101
      %p103 = scmp.ne.s32.totalorder %s92, %s93
      %p104 = scmp.eq.s32.totalorder %s20, 0
      %p105 = por %p103, %p104
      %p106 = scmp.ne.s32.totalorder %s92, %s93
      %p107 = scmp.eq.s32.totalorder %s21, 3
      %p108 = por %p106, %p107
      %p110 = scmp.ne.s32.totalorder %s93, %s109
      %p111 = scmp.eq.s32.totalorder %s21, 0
      %p112 = por %p110, %p111
      %s113 = ssub.s32 %s22, %s34
      %p114 = scmp.eq.s32.totalorder %s113, 0
      %s116 = sadd.s32 %s115, 1
      %s117 = scalar_select %p114, %s115, %s116
      %p120 = pneg %p114
      %p121 = scmp.eq.s32.totalorder %s15, 3
      %p122 = por %p120, %p121
      %p123 = scmp.ne.s32.totalorder %s115, %s118
      %p124 = scmp.eq.s32.totalorder %s15, 0
      %p125 = por %p123, %p124
      %p126 = scmp.ne.s32.totalorder %s115, %s118
      %p127 = scmp.eq.s32.totalorder %s20, 3
      %p128 = por %p126, %p127
      %p129 = scmp.ne.s32.totalorder %s118, %s119
      %p130 = scmp.eq.s32.totalorder %s20, 0
      %p131 = por %p129, %p130
      %p132 = scmp.ne.s32.totalorder %s118, %s119
      %p133 = scmp.eq.s32.totalorder %s21, 3
      %p134 = por %p132, %p133
      %p136 = scmp.ne.s32.totalorder %s119, %s135
      %p137 = scmp.eq.s32.totalorder %s21, 0
      %p138 = por %p136, %p137
      %p139 = scmp.le.s32.totalorder 1, %s15
      %p140 = scmp.lt.s32.totalorder %s15, 5
      %p141 = pnand %p139, %p140
      %p142 = pneg %p141
      // Predicated region
      $region9: #{tpu_custom_call.1} parent=5 // pred_check
        _
      $region10: #{tpu_custom_call.1} parent=5 // pred_check_branch
        %144 = sbr.rel (%p141) target = $region12
      $region11: #{tpu_custom_call.1} parent=5 // pred_region
        %s145 = ssub.s32 %s15, 1
      $region12: #{tpu_custom_call.1} parent=5 // pred_fallthru
        _
      %p146 = scmp.lt.s32.totalorder %s15, 4
      // Predicated region
      $region13: #{tpu_custom_call.1} parent=5 // pred_check
        %p147 = pneg %p146
      $region14: #{tpu_custom_call.1} parent=5 // pred_check_branch
        %149 = sbr.rel (%p147) target = $region16
      $region15: #{tpu_custom_call.1} parent=5 // pred_region
        // Predicated region
        $region17: #{tpu_custom_call.1} parent=15 // pred_check
          %p150 = pneg %p47
        $region18: #{tpu_custom_call.1} parent=15 // pred_check_branch
          %152 = sbr.rel (%p150) target = $region20
        $region19: #{tpu_custom_call.1} parent=15 // pred_region
          %s153 = sand.u32 %s37, 1
          %s154 = scalar_lea.sflag [#allocation5], %s153
          %s155 = sand.u32 %s37, 1
          %s156 = smul.addr %s155, 256
          %s157 = scalar_lea.vmem [#allocation4], %s156
          %s158 = smul.u32 32, %s22
          %s160 = ssub.s32 4096, 4096
          %161 = vsyncadd %s154, %s160
          %s162 = smul.addr %s158, 128
          %s163 = scalar_lea.hbm %s0, %s162
          %s164 = sshll.u32 %s157, 4
          %s165 = int_to_ptr.vmem [resolvable:$true] %s164
          %170 = dma.hbm_to_vmem [thread:$0]  %s163, 4096, %s165, %s154, 128, 128, 8
        $region20: #{tpu_custom_call.1} parent=15 // pred_fallthru
          _
        // Predicated region
        $region21: #{tpu_custom_call.1} parent=15 // pred_check
          %p171 = pneg %p73
        $region22: #{tpu_custom_call.1} parent=15 // pred_check_branch
          %173 = sbr.rel (%p171) target = $region24
        $region23: #{tpu_custom_call.1} parent=15 // pred_region
          %s174 = sand.u32 %s15, 1
          %s175 = scalar_lea.sflag [#allocation7], %s174
          %s176 = sand.u32 %s63, 1
          %s177 = smul.addr %s176, 256
          %s178 = scalar_lea.vmem [#allocation6], %s177
          %s179 = smul.u32 2, %s23
          %s181 = ssub.s32 4096, 4096
          %182 = vsyncadd %s175, %s181
          %s183 = smul.addr %s179, 128
          %s184 = scalar_lea.hbm %s1, %s183
          %s185 = sshll.u32 %s178, 4
          %s186 = int_to_ptr.vmem [resolvable:$true] %s185
          %191 = dma.hbm_to_vmem [thread:$0]  %s184, 4096, %s186, %s175, 512, 256, 16
        $region24: #{tpu_custom_call.1} parent=15 // pred_fallthru
          _
        // Predicated region
        $region25: #{tpu_custom_call.1} parent=15 // pred_check
          %p192 = pneg %p99
        $region26: #{tpu_custom_call.1} parent=15 // pred_check_branch
          %194 = sbr.rel (%p192) target = $region28
        $region27: #{tpu_custom_call.1} parent=15 // pred_region
          %s195 = sand.u32 %s15, 1
          %s196 = scalar_lea.sflag [#allocation7], %s195
          %s197 = sand.u32 %s89, 1
          %s198 = smul.addr %s197, 256
          %s199 = scalar_lea.vmem [#allocation8], %s198
          %s200 = smul.u32 32, %s22
          %s202 = ssub.s32 4096, 4096
          %203 = vsyncadd %s196, %s202
          %s204 = smul.addr %s200, 128
          %s205 = scalar_lea.hbm %s2, %s204
          %s206 = sshll.u32 %s199, 4
          %s207 = int_to_ptr.vmem [resolvable:$true] %s206
          %212 = dma.hbm_to_vmem [thread:$0]  %s205, 4096, %s207, %s196, 128, 128, 8
        $region28: #{tpu_custom_call.1} parent=15 // pred_fallthru
          _
      $region16: #{tpu_custom_call.1} parent=5 // pred_fallthru
        _
      %p213 = scmp.le.s32.totalorder 1, %s15
      %p214 = scmp.lt.s32.totalorder %s15, 5
      %p215 = pnand %p213, %p214
      %p216 = pneg %p215
      // Predicated region
      $region29: #{tpu_custom_call.1} parent=5 // pred_check
        _
      $region30: #{tpu_custom_call.1} parent=5 // pred_check_branch
        %218 = sbr.rel (%p215) target = $region32
      $region31: #{tpu_custom_call.1} parent=5 // pred_region
        %s219 = ssub.s32 %s15, 1
        %s220 = sand.u32 %s40, 1
        %s221 = scalar_lea.sflag [#allocation5], %s220
        %s222 = sand.u32 %s40, 1
        %s223 = smul.addr %s222, 256
        %s224 = scalar_lea.vmem [#allocation4], %s223
        // Predicated region
        $region33: #{tpu_custom_call.1} parent=31 // pred_check
          %p225 = pneg %p53
        $region34: #{tpu_custom_call.1} parent=31 // pred_check_branch
          %227 = sbr.rel (%p225) target = $region36
        $region35: #{tpu_custom_call.1} parent=31 // pred_region
          %228 = dma.done %s221, 4096
        $region36: #{tpu_custom_call.1} parent=31 // pred_fallthru
          _
        %s229 = sand.u32 %s20, 1
        %s230 = scalar_lea.sflag [#allocation7], %s229
        %s231 = sand.u32 %s66, 1
        %s232 = smul.addr %s231, 256
        %s233 = scalar_lea.vmem [#allocation6], %s232
        // Predicated region
        $region37: #{tpu_custom_call.1} parent=31 // pred_check
          %p234 = pneg %p79
        $region38: #{tpu_custom_call.1} parent=31 // pred_check_branch
          %236 = sbr.rel (%p234) target = $region40
        $region39: #{tpu_custom_call.1} parent=31 // pred_region
          %237 = dma.done %s230, 4096
        $region40: #{tpu_custom_call.1} parent=31 // pred_fallthru
          _
        %s238 = sand.u32 %s20, 1
        %s239 = scalar_lea.sflag [#allocation7], %s238
        %s240 = sand.u32 %s92, 1
        %s241 = smul.addr %s240, 256
        %s242 = scalar_lea.vmem [#allocation8], %s241
        // Predicated region
        $region41: #{tpu_custom_call.1} parent=31 // pred_check
          %p243 = pneg %p105
        $region42: #{tpu_custom_call.1} parent=31 // pred_check_branch
          %245 = sbr.rel (%p243) target = $region44
        $region43: #{tpu_custom_call.1} parent=31 // pred_region
          %246 = dma.done %s239, 4096
        $region44: #{tpu_custom_call.1} parent=31 // pred_fallthru
          _
        %s247 = sand.u32 %s40, 1
        %s248 = scalar_lea.sflag [#allocation5], %s247
        %s249 = sand.u32 %s40, 1
        %s250 = smul.addr %s249, 256
        %s251 = scalar_lea.vmem [#allocation4], %s250
        %p252 = pneg %p53
        %p253 = pneg %p50
        %s254 = sand.u32 %s20, 1
        %s255 = scalar_lea.sflag [#allocation7], %s254
        %s256 = sand.u32 %s66, 1
        %s257 = smul.addr %s256, 256
        %s258 = scalar_lea.vmem [#allocation6], %s257
        %p259 = pneg %p79
        %p260 = pneg %p76
        %s261 = sand.u32 %s20, 1
        %s262 = scalar_lea.sflag [#allocation7], %s261
        %s263 = sand.u32 %s92, 1
        %s264 = smul.addr %s263, 256
        %s265 = scalar_lea.vmem [#allocation8], %s264
        %p266 = pneg %p105
        %p267 = pneg %p102
        %p268 = pneg %p131
        %p269 = pneg %p128
        %s270 = smul.u32 32, %s24
        %p271 = scmp.lt.s32.totalorder %s270, 63
        %s272 = scalar_select %p271, %s270, 63
        %s273 = smul.addr %s272, 8
        %s274 = scalar_lea.vmem %s3, %s273
        %s275 = smul.u32 32, %s24
        %s276 = smul.u32 2, %s25
        %s277 = smul.u32 32, %s24
        %s278 = smul.u32 32, %s24
        %p279 = scmp.lt.s32.totalorder %s278, 63
        %s280 = scalar_select %p279, %s278, 63
        %s281 = smul.addr %s280, 8
        %s282 = scalar_lea.vmem %s3, %s281
        %s283 = smul.u32 32, %s24
        %p284 = scmp.eq.s32.totalorder %s25, 0
        // Predicated region
        $region45: #{tpu_custom_call.1} parent=31 // pred_check
          %p285 = pneg %p284
        $region46: #{tpu_custom_call.1} parent=31 // pred_check_branch
          %287 = sbr.rel (%p285) target = $region48
        $region47: #{tpu_custom_call.1} parent=31 // pred_region
          %vm288 = vcmask 7168
          %289 = vst.msk [vmem:[#allocation2] sm:$0xff] %vm288, -1e+30
          %290 = vst.msk [vmem:[#allocation2 + $0x8] sm:$0xff] %vm288, -1e+30
          %291 = vst.msk [vmem:[#allocation2 + $0x10] sm:$0xff] %vm288, -1e+30
          %292 = vst.msk [vmem:[#allocation2 + $0x18] sm:$0xff] %vm288, -1e+30
          %293 = vst.msk [vmem:[#allocation2 + $0x20] sm:$0xff] %vm288, -1e+30
          %294 = vst.msk [vmem:[#allocation2 + $0x28] sm:$0xff] %vm288, -1e+30
          %295 = vst.msk [vmem:[#allocation2 + $0x30] sm:$0xff] %vm288, -1e+30
          %296 = vst.msk [vmem:[#allocation2 + $0x38] sm:$0xff] %vm288, -1e+30
          %297 = vst.msk [vmem:[#allocation2 + $0x40] sm:$0xff] %vm288, -1e+30
          %298 = vst.msk [vmem:[#allocation2 + $0x48] sm:$0xff] %vm288, -1e+30
          %299 = vst.msk [vmem:[#allocation2 + $0x50] sm:$0xff] %vm288, -1e+30
          %300 = vst.msk [vmem:[#allocation2 + $0x58] sm:$0xff] %vm288, -1e+30
          %301 = vst.msk [vmem:[#allocation2 + $0x60] sm:$0xff] %vm288, -1e+30
          %302 = vst.msk [vmem:[#allocation2 + $0x68] sm:$0xff] %vm288, -1e+30
          %303 = vst.msk [vmem:[#allocation2 + $0x70] sm:$0xff] %vm288, -1e+30
          %304 = vst.msk [vmem:[#allocation2 + $0x78] sm:$0xff] %vm288, -1e+30
          %305 = vst.msk [vmem:[#allocation2 + $0x80] sm:$0xff] %vm288, -1e+30
          %306 = vst.msk [vmem:[#allocation2 + $0x88] sm:$0xff] %vm288, -1e+30
          %307 = vst.msk [vmem:[#allocation2 + $0x90] sm:$0xff] %vm288, -1e+30
          %308 = vst.msk [vmem:[#allocation2 + $0x98] sm:$0xff] %vm288, -1e+30
          %309 = vst.msk [vmem:[#allocation2 + $0xa0] sm:$0xff] %vm288, -1e+30
          %310 = vst.msk [vmem:[#allocation2 + $0xa8] sm:$0xff] %vm288, -1e+30
          %311 = vst.msk [vmem:[#allocation2 + $0xb0] sm:$0xff] %vm288, -1e+30
          %312 = vst.msk [vmem:[#allocation2 + $0xb8] sm:$0xff] %vm288, -1e+30
          %313 = vst.msk [vmem:[#allocation2 + $0xc0] sm:$0xff] %vm288, -1e+30
          %314 = vst.msk [vmem:[#allocation2 + $0xc8] sm:$0xff] %vm288, -1e+30
          %315 = vst.msk [vmem:[#allocation2 + $0xd0] sm:$0xff] %vm288, -1e+30
          %316 = vst.msk [vmem:[#allocation2 + $0xd8] sm:$0xff] %vm288, -1e+30
          %317 = vst.msk [vmem:[#allocation2 + $0xe0] sm:$0xff] %vm288, -1e+30
          %318 = vst.msk [vmem:[#allocation2 + $0xe8] sm:$0xff] %vm288, -1e+30
          %319 = vst.msk [vmem:[#allocation2 + $0xf0] sm:$0xff] %vm288, -1e+30
          %320 = vst.msk [vmem:[#allocation2 + $0xf8] sm:$0xff] %vm288, -1e+30
          %321 = vst.msk [vmem:[#allocation3] sm:$0xff] %vm288, 0.0
          %322 = vst.msk [vmem:[#allocation3 + $0x8] sm:$0xff] %vm288, 0.0
          %323 = vst.msk [vmem:[#allocation3 + $0x10] sm:$0xff] %vm288, 0.0
          %324 = vst.msk [vmem:[#allocation3 + $0x18] sm:$0xff] %vm288, 0.0
          %325 = vst.msk [vmem:[#allocation3 + $0x20] sm:$0xff] %vm288, 0.0
          %326 = vst.msk [vmem:[#allocation3 + $0x28] sm:$0xff] %vm288, 0.0
          %327 = vst.msk [vmem:[#allocation3 + $0x30] sm:$0xff] %vm288, 0.0
          %328 = vst.msk [vmem:[#allocation3 + $0x38] sm:$0xff] %vm288, 0.0
          %329 = vst.msk [vmem:[#allocation3 + $0x40] sm:$0xff] %vm288, 0.0
          %330 = vst.msk [vmem:[#allocation3 + $0x48] sm:$0xff] %vm288, 0.0
          %331 = vst.msk [vmem:[#allocation3 + $0x50] sm:$0xff] %vm288, 0.0
          %332 = vst.msk [vmem:[#allocation3 + $0x58] sm:$0xff] %vm288, 0.0
          %333 = vst.msk [vmem:[#allocation3 + $0x60] sm:$0xff] %vm288, 0.0
          %334 = vst.msk [vmem:[#allocation3 + $0x68] sm:$0xff] %vm288, 0.0
          %335 = vst.msk [vmem:[#allocation3 + $0x70] sm:$0xff] %vm288, 0.0
          %336 = vst.msk [vmem:[#allocation3 + $0x78] sm:$0xff] %vm288, 0.0
          %337 = vst.msk [vmem:[#allocation3 + $0x80] sm:$0xff] %vm288, 0.0
          %338 = vst.msk [vmem:[#allocation3 + $0x88] sm:$0xff] %vm288, 0.0
          %339 = vst.msk [vmem:[#allocation3 + $0x90] sm:$0xff] %vm288, 0.0
          %340 = vst.msk [vmem:[#allocation3 + $0x98] sm:$0xff] %vm288, 0.0
          %341 = vst.msk [vmem:[#allocation3 + $0xa0] sm:$0xff] %vm288, 0.0
          %342 = vst.msk [vmem:[#allocation3 + $0xa8] sm:$0xff] %vm288, 0.0
          %343 = vst.msk [vmem:[#allocation3 + $0xb0] sm:$0xff] %vm288, 0.0
          %344 = vst.msk [vmem:[#allocation3 + $0xb8] sm:$0xff] %vm288, 0.0
          %345 = vst.msk [vmem:[#allocation3 + $0xc0] sm:$0xff] %vm288, 0.0
          %346 = vst.msk [vmem:[#allocation3 + $0xc8] sm:$0xff] %vm288, 0.0
          %347 = vst.msk [vmem:[#allocation3 + $0xd0] sm:$0xff] %vm288, 0.0
          %348 = vst.msk [vmem:[#allocation3 + $0xd8] sm:$0xff] %vm288, 0.0
          %349 = vst.msk [vmem:[#allocation3 + $0xe0] sm:$0xff] %vm288, 0.0
          %350 = vst.msk [vmem:[#allocation3 + $0xe8] sm:$0xff] %vm288, 0.0
          %351 = vst.msk [vmem:[#allocation3 + $0xf0] sm:$0xff] %vm288, 0.0
          %352 = vst.msk [vmem:[#allocation3 + $0xf8] sm:$0xff] %vm288, 0.0
        $region48: #{tpu_custom_call.1} parent=31 // pred_fallthru
          _
        %v353 = vld [vmem:[%s224] sm:$0xff]
        %v354 = vld [vmem:[%s224 + $0x8] sm:$0xff]
        %v355 = vld [vmem:[%s224 + $0x10] sm:$0xff]
        %v356 = vld [vmem:[%s224 + $0x18] sm:$0xff]
        %v357 = vld [vmem:[%s224 + $0x20] sm:$0xff]
        %v358 = vld [vmem:[%s224 + $0x28] sm:$0xff]
        %v359 = vld [vmem:[%s224 + $0x30] sm:$0xff]
        %v360 = vld [vmem:[%s224 + $0x38] sm:$0xff]
        %v361 = vld [vmem:[%s224 + $0x40] sm:$0xff]
        %v362 = vld [vmem:[%s224 + $0x48] sm:$0xff]
        %v363 = vld [vmem:[%s224 + $0x50] sm:$0xff]
        %v364 = vld [vmem:[%s224 + $0x58] sm:$0xff]
        %v365 = vld [vmem:[%s224 + $0x60] sm:$0xff]
        %v366 = vld [vmem:[%s224 + $0x68] sm:$0xff]
        %v367 = vld [vmem:[%s224 + $0x70] sm:$0xff]
        %v368 = vld [vmem:[%s224 + $0x78] sm:$0xff]
        %v369 = vld [vmem:[%s224 + $0x80] sm:$0xff]
        %v370 = vld [vmem:[%s224 + $0x88] sm:$0xff]
        %v371 = vld [vmem:[%s224 + $0x90] sm:$0xff]
        %v372 = vld [vmem:[%s224 + $0x98] sm:$0xff]
        %v373 = vld [vmem:[%s224 + $0xa0] sm:$0xff]
        %v374 = vld [vmem:[%s224 + $0xa8] sm:$0xff]
        %v375 = vld [vmem:[%s224 + $0xb0] sm:$0xff]
        %v376 = vld [vmem:[%s224 + $0xb8] sm:$0xff]
        %v377 = vld [vmem:[%s224 + $0xc0] sm:$0xff]
        %v378 = vld [vmem:[%s224 + $0xc8] sm:$0xff]
        %v379 = vld [vmem:[%s224 + $0xd0] sm:$0xff]
        %v380 = vld [vmem:[%s224 + $0xd8] sm:$0xff]
        %v381 = vld [vmem:[%s224 + $0xe0] sm:$0xff]
        %v382 = vld [vmem:[%s224 + $0xe8] sm:$0xff]
        %v383 = vld [vmem:[%s224 + $0xf0] sm:$0xff]
        %v384 = vld [vmem:[%s224 + $0xf8] sm:$0xff]
        %v385 = vmul.f32 %v353, 2.0
        %v386 = vmul.f32 %v354, 2.0
        %v387 = vmul.f32 %v355, 2.0
        %v388 = vmul.f32 %v356, 2.0
        %v389 = vmul.f32 %v357, 2.0
        %v390 = vmul.f32 %v358, 2.0
        %v391 = vmul.f32 %v359, 2.0
        %v392 = vmul.f32 %v360, 2.0
        %v393 = vmul.f32 %v361, 2.0
        %v394 = vmul.f32 %v362, 2.0
        %v395 = vmul.f32 %v363, 2.0
        %v396 = vmul.f32 %v364, 2.0
        %v397 = vmul.f32 %v365, 2.0
        %v398 = vmul.f32 %v366, 2.0
        %v399 = vmul.f32 %v367, 2.0
        %v400 = vmul.f32 %v368, 2.0
        %v401 = vmul.f32 %v369, 2.0
        %v402 = vmul.f32 %v370, 2.0
        %v403 = vmul.f32 %v371, 2.0
        %v404 = vmul.f32 %v372, 2.0
        %v405 = vmul.f32 %v373, 2.0
        %v406 = vmul.f32 %v374, 2.0
        %v407 = vmul.f32 %v375, 2.0
        %v408 = vmul.f32 %v376, 2.0
        %v409 = vmul.f32 %v377, 2.0
        %v410 = vmul.f32 %v378, 2.0
        %v411 = vmul.f32 %v379, 2.0
        %v412 = vmul.f32 %v380, 2.0
        %v413 = vmul.f32 %v381, 2.0
        %v414 = vmul.f32 %v382, 2.0
        %v415 = vmul.f32 %v383, 2.0
        %v416 = vmul.f32 %v384, 2.0
        %v417 = vld [vmem:[%s233] sm:$0xff]
        %v418 = vld [vmem:[%s233 + $0x8] sm:$0xff]
        %v419 = vld [vmem:[%s233 + $0x10] sm:$0xff]
        %v420 = vld [vmem:[%s233 + $0x18] sm:$0xff]
        %v421 = vld [vmem:[%s233 + $0x20] sm:$0xff]
        %v422 = vld [vmem:[%s233 + $0x28] sm:$0xff]
        %v423 = vld [vmem:[%s233 + $0x30] sm:$0xff]
        %v424 = vld [vmem:[%s233 + $0x38] sm:$0xff]
        %v425 = vld [vmem:[%s233 + $0x40] sm:$0xff]
        %v426 = vld [vmem:[%s233 + $0x48] sm:$0xff]
        %v427 = vld [vmem:[%s233 + $0x50] sm:$0xff]
        %v428 = vld [vmem:[%s233 + $0x58] sm:$0xff]
        %v429 = vld [vmem:[%s233 + $0x60] sm:$0xff]
        %v430 = vld [vmem:[%s233 + $0x68] sm:$0xff]
        %v431 = vld [vmem:[%s233 + $0x70] sm:$0xff]
        %v432 = vld [vmem:[%s233 + $0x78] sm:$0xff]
        %v433 = vld [vmem:[%s233 + $0x80] sm:$0xff]
        %v434 = vld [vmem:[%s233 + $0x88] sm:$0xff]
        %v435 = vld [vmem:[%s233 + $0x90] sm:$0xff]
        %v436 = vld [vmem:[%s233 + $0x98] sm:$0xff]
        %v437 = vld [vmem:[%s233 + $0xa0] sm:$0xff]
        %v438 = vld [vmem:[%s233 + $0xa8] sm:$0xff]
        %v439 = vld [vmem:[%s233 + $0xb0] sm:$0xff]
        %v440 = vld [vmem:[%s233 + $0xb8] sm:$0xff]
        %v441 = vld [vmem:[%s233 + $0xc0] sm:$0xff]
        %v442 = vld [vmem:[%s233 + $0xc8] sm:$0xff]
        %v443 = vld [vmem:[%s233 + $0xd0] sm:$0xff]
        %v444 = vld [vmem:[%s233 + $0xd8] sm:$0xff]
        %v445 = vld [vmem:[%s233 + $0xe0] sm:$0xff]
        %v446 = vld [vmem:[%s233 + $0xe8] sm:$0xff]
        %v447 = vld [vmem:[%s233 + $0xf0] sm:$0xff]
        %v448 = vld [vmem:[%s233 + $0xf8] sm:$0xff]
        %449 = vmatprep.subr.mxu0 %v418
        %450 = vmatpush1.msra.mxu0 %v417
        %451 = vmatprep.subr.mxu0 %v420
        %452 = vmatpush1.msra.mxu0 %v419
        %453 = vmatprep.subr.mxu0 %v422
        %454 = vmatpush1.msra.mxu0 %v421
        %455 = vmatprep.subr.mxu0 %v424
        %456 = vmatpush1.msra.mxu0 %v423
        %457 = vmatprep.subr.mxu0 %v426
        %458 = vmatpush1.msra.mxu0 %v425
        %459 = vmatprep.subr.mxu0 %v428
        %460 = vmatpush1.msra.mxu0 %v427
        %461 = vmatprep.subr.mxu0 %v430
        %462 = vmatpush1.msra.mxu0 %v429
        %463 = vmatprep.subr.mxu0 %v432
        %464 = vmatpush1.msra.mxu0 %v431
        %465 = vmatprep.subr.mxu0 %v434
        %466 = vmatpush1.msra.mxu0 %v433
        %467 = vmatprep.subr.mxu0 %v436
        %468 = vmatpush1.msra.mxu0 %v435
        %469 = vmatprep.subr.mxu0 %v438
        %470 = vmatpush1.msra.mxu0 %v437
        %471 = vmatprep.subr.mxu0 %v440
        %472 = vmatpush1.msra.mxu0 %v439
        %473 = vmatprep.subr.mxu0 %v442
        %474 = vmatpush1.msra.mxu0 %v441
        %475 = vmatprep.subr.mxu0 %v444
        %476 = vmatpush1.msra.mxu0 %v443
        %477 = vmatprep.subr.mxu0 %v446
        %478 = vmatpush1.msra.mxu0 %v445
        %479 = vmatprep.subr.mxu0 %v448
        %480 = vmatpush1.msra.mxu0 %v447
        %481 = vmatprep.subr.mxu0 0.0
        %482 = vmatpush1.msra.mxu0 0.0
        %483 = vmatprep.subr.mxu0 0.0
        %484 = vmatpush1.msra.mxu0 0.0
        %485 = vmatprep.subr.mxu0 0.0
        %486 = vmatpush1.msra.mxu0 0.0
        %487 = vmatprep.subr.mxu0 0.0
        %488 = vmatpush1.msra.mxu0 0.0
        %489 = vmatprep.subr.mxu0 0.0
        %490 = vmatpush1.msra.mxu0 0.0
        %491 = vmatprep.subr.mxu0 0.0
        %492 = vmatpush1.msra.mxu0 0.0
        %493 = vmatprep.subr.mxu0 0.0
        %494 = vmatpush1.msra.mxu0 0.0
        %495 = vmatprep.subr.mxu0 0.0
        %496 = vmatpush1.msra.mxu0 0.0
        %497 = vmatprep.subr.mxu0 0.0
        %498 = vmatpush1.msra.mxu0 0.0
        %499 = vmatprep.subr.mxu0 0.0
        %500 = vmatpush1.msra.mxu0 0.0
        %501 = vmatprep.subr.mxu0 0.0
        %502 = vmatpush1.msra.mxu0 0.0
        %503 = vmatprep.subr.mxu0 0.0
        %504 = vmatpush1.msra.mxu0 0.0
        %505 = vmatprep.subr.mxu0 0.0
        %506 = vmatpush1.msra.mxu0 0.0
        %507 = vmatprep.subr.mxu0 0.0
        %508 = vmatpush1.msra.mxu0 0.0
        %509 = vmatprep.subr.mxu0 0.0
        %510 = vmatpush1.msra.mxu0 0.0
        %511 = vmatprep.subr.mxu0 0.0
        %512 = vmatpush1.msra.mxu0 0.0
        %513 = vmatprep.mubr.f32.mxu0 0.0
        %514 = vmatmul.mubr.f32.gmra.mrb[0].mxu0 %v385
        %v515 = vpop.f32.mrb[0].mxu0
        %v516 = vadd.f32 0.0, %v515
        %v517 = vpop.f32.mrb[0].mxu0
        %v518 = vadd.f32 0.0, %v517
        %519 = vmatprep.mubr.f32.mxu0 0.0
        %520 = vmatmul.mubr.f32.gmra.mrb[0].mxu0 %v386
        %v521 = vpop.f32.mrb[0].mxu0
        %v522 = vadd.f32 0.0, %v521
        %v523 = vpop.f32.mrb[0].mxu0
        %v524 = vadd.f32 0.0, %v523
        %525 = vmatprep.mubr.f32.mxu0 0.0
        %526 = vmatmul.mubr.f32.gmra.mrb[0].mxu0 %v387
        %v527 = vpop.f32.mrb[0].mxu0
        %v528 = vadd.f32 0.0, %v527
        %v529 = vpop.f32.mrb[0].mxu0
        %v530 = vadd.f32 0.0, %v529
        %531 = vmatprep.mubr.f32.mxu0 0.0
        %532 = vmatmul.mubr.f32.gmra.mrb[0].mxu0 %v388
        %v533 = vpop.f32.mrb[0].mxu0
        %v534 = vadd.f32 0.0, %v533
        %v535 = vpop.f32.mrb[0].mxu0
        %v536 = vadd.f32 0.0, %v535
        %537 = vmatprep.mubr.f32.mxu0 0.0
        %538 = vmatmul.mubr.f32.gmra.mrb[0].mxu0 %v389
        %v539 = vpop.f32.mrb[0].mxu0
        %v540 = vadd.f32 0.0, %v539
        %v541 = vpop.f32.mrb[0].mxu0
        %v542 = vadd.f32 0.0, %v541
        %543 = vmatprep.mubr.f32.mxu0 0.0
        %544 = vmatmul.mubr.f32.gmra.mrb[0].mxu0 %v390
        %v545 = vpop.f32.mrb[0].mxu0
        %v546 = vadd.f32 0.0, %v545
        %v547 = vpop.f32.mrb[0].mxu0
        %v548 = vadd.f32 0.0, %v547
        %549 = vmatprep.mubr.f32.mxu0 0.0
        %550 = vmatmul.mubr.f32.gmra.mrb[0].mxu0 %v391
        %v551 = vpop.f32.mrb[0].mxu0
        %v552 = vadd.f32 0.0, %v551
        %v553 = vpop.f32.mrb[0].mxu0
        %v554 = vadd.f32 0.0, %v553
        %555 = vmatprep.mubr.f32.mxu0 0.0
        %556 = vmatmul.mubr.f32.gmra.mrb[0].mxu0 %v392
        %v557 = vpop.f32.mrb[0].mxu0
        %v558 = vadd.f32 0.0, %v557
        %v559 = vpop.f32.mrb[0].mxu0
        %v560 = vadd.f32 0.0, %v559
        %561 = vmatprep.mubr.f32.mxu0 0.0
        %562 = vmatmul.mubr.f32.gmra.mrb[0].mxu0 %v393
        %v563 = vpop.f32.mrb[0].mxu0
        %v564 = vadd.f32 0.0, %v563
        %v565 = vpop.f32.mrb[0].mxu0
        %v566 = vadd.f32 0.0, %v565
        %567 = vmatprep.mubr.f32.mxu0 0.0
        %568 = vmatmul.mubr.f32.gmra.mrb[0].mxu0 %v394
        %v569 = vpop.f32.mrb[0].mxu0
        %v570 = vadd.f32 0.0, %v569
        %v571 = vpop.f32.mrb[0].mxu0
        %v572 = vadd.f32 0.0, %v571
        %573 = vmatprep.mubr.f32.mxu0 0.0
        %574 = vmatmul.mubr.f32.gmra.mrb[0].mxu0 %v395
        %v575 = vpop.f32.mrb[0].mxu0
        %v576 = vadd.f32 0.0, %v575
        %v577 = vpop.f32.mrb[0].mxu0
        %v578 = vadd.f32 0.0, %v577
        %579 = vmatprep.mubr.f32.mxu0 0.0
        %580 = vmatmul.mubr.f32.gmra.mrb[0].mxu0 %v396
        %v581 = vpop.f32.mrb[0].mxu0
        %v582 = vadd.f32 0.0, %v581
        %v583 = vpop.f32.mrb[0].mxu0
        %v584 = vadd.f32 0.0, %v583
        %585 = vmatprep.mubr.f32.mxu0 0.0
        %586 = vmatmul.mubr.f32.gmra.mrb[0].mxu0 %v397
        %v587 = vpop.f32.mrb[0].mxu0
        %v588 = vadd.f32 0.0, %v587
        %v589 = vpop.f32.mrb[0].mxu0
        %v590 = vadd.f32 0.0, %v589
        %591 = vmatprep.mubr.f32.mxu0 0.0
        %592 = vmatmul.mubr.f32.gmra.mrb[0].mxu0 %v398
        %v593 = vpop.f32.mrb[0].mxu0
        %v594 = vadd.f32 0.0, %v593
        %v595 = vpop.f32.mrb[0].mxu0
        %v596 = vadd.f32 0.0, %v595
        %597 = vmatprep.mubr.f32.mxu0 0.0
        %598 = vmatmul.mubr.f32.gmra.mrb[0].mxu0 %v399
        %v599 = vpop.f32.mrb[0].mxu0
        %v600 = vadd.f32 0.0, %v599
        %v601 = vpop.f32.mrb[0].mxu0
        %v602 = vadd.f32 0.0, %v601
        %603 = vmatprep.mubr.f32.mxu0 0.0
        %604 = vmatmul.mubr.f32.gmra.mrb[0].mxu0 %v400
        %v605 = vpop.f32.mrb[0].mxu0
        %v606 = vadd.f32 0.0, %v605
        %v607 = vpop.f32.mrb[0].mxu0
        %v608 = vadd.f32 0.0, %v607
        %609 = vmatprep.mubr.f32.mxu0 0.0
        %610 = vmatmul.mubr.f32.gmra.mrb[0].mxu0 %v401
        %v611 = vpop.f32.mrb[0].mxu0
        %v612 = vadd.f32 0.0, %v611
        %v613 = vpop.f32.mrb[0].mxu0
        %v614 = vadd.f32 0.0, %v613
        %615 = vmatprep.mubr.f32.mxu0 0.0
        %616 = vmatmul.mubr.f32.gmra.mrb[0].mxu0 %v402
        %v617 = vpop.f32.mrb[0].mxu0
        %v618 = vadd.f32 0.0, %v617
        %v619 = vpop.f32.mrb[0].mxu0
        %v620 = vadd.f32 0.0, %v619
        %621 = vmatprep.mubr.f32.mxu0 0.0
        %622 = vmatmul.mubr.f32.gmra.mrb[0].mxu0 %v403
        %v623 = vpop.f32.mrb[0].mxu0
        %v624 = vadd.f32 0.0, %v623
        %v625 = vpop.f32.mrb[0].mxu0
        %v626 = vadd.f32 0.0, %v625
        %627 = vmatprep.mubr.f32.mxu0 0.0
        %628 = vmatmul.mubr.f32.gmra.mrb[0].mxu0 %v404
        %v629 = vpop.f32.mrb[0].mxu0
        %v630 = vadd.f32 0.0, %v629
        %v631 = vpop.f32.mrb[0].mxu0
        %v632 = vadd.f32 0.0, %v631
        %633 = vmatprep.mubr.f32.mxu0 0.0
        %634 = vmatmul.mubr.f32.gmra.mrb[0].mxu0 %v405
        %v635 = vpop.f32.mrb[0].mxu0
        %v636 = vadd.f32 0.0, %v635
        %v637 = vpop.f32.mrb[0].mxu0
        %v638 = vadd.f32 0.0, %v637
        %639 = vmatprep.mubr.f32.mxu0 0.0
        %640 = vmatmul.mubr.f32.gmra.mrb[0].mxu0 %v406
        %v641 = vpop.f32.mrb[0].mxu0
        %v642 = vadd.f32 0.0, %v641
        %v643 = vpop.f32.mrb[0].mxu0
        %v644 = vadd.f32 0.0, %v643
        %645 = vmatprep.mubr.f32.mxu0 0.0
        %646 = vmatmul.mubr.f32.gmra.mrb[0].mxu0 %v407
        %v647 = vpop.f32.mrb[0].mxu0
        %v648 = vadd.f32 0.0, %v647
        %v649 = vpop.f32.mrb[0].mxu0
        %v650 = vadd.f32 0.0, %v649
        %651 = vmatprep.mubr.f32.mxu0 0.0
        %652 = vmatmul.mubr.f32.gmra.mrb[0].mxu0 %v408
        %v653 = vpop.f32.mrb[0].mxu0
        %v654 = vadd.f32 0.0, %v653
        %v655 = vpop.f32.mrb[0].mxu0
        %v656 = vadd.f32 0.0, %v655
        %657 = vmatprep.mubr.f32.mxu0 0.0
        %658 = vmatmul.mubr.f32.gmra.mrb[0].mxu0 %v409
        %v659 = vpop.f32.mrb[0].mxu0
        %v660 = vadd.f32 0.0, %v659
        %v661 = vpop.f32.mrb[0].mxu0
        %v662 = vadd.f32 0.0, %v661
        %663 = vmatprep.mubr.f32.mxu0 0.0
        %664 = vmatmul.mubr.f32.gmra.mrb[0].mxu0 %v410
        %v665 = vpop.f32.mrb[0].mxu0
        %v666 = vadd.f32 0.0, %v665
        %v667 = vpop.f32.mrb[0].mxu0
        %v668 = vadd.f32 0.0, %v667
        %669 = vmatprep.mubr.f32.mxu0 0.0
        %670 = vmatmul.mubr.f32.gmra.mrb[0].mxu0 %v411
        %v671 = vpop.f32.mrb[0].mxu0
        %v672 = vadd.f32 0.0, %v671
        %v673 = vpop.f32.mrb[0].mxu0
        %v674 = vadd.f32 0.0, %v673
        %675 = vmatprep.mubr.f32.mxu0 0.0
        %676 = vmatmul.mubr.f32.gmra.mrb[0].mxu0 %v412
        %v677 = vpop.f32.mrb[0].mxu0
        %v678 = vadd.f32 0.0, %v677
        %v679 = vpop.f32.mrb[0].mxu0
        %v680 = vadd.f32 0.0, %v679
        %681 = vmatprep.mubr.f32.mxu0 0.0
        %682 = vmatmul.mubr.f32.gmra.mrb[0].mxu0 %v413
        %v683 = vpop.f32.mrb[0].mxu0
        %v684 = vadd.f32 0.0, %v683
        %v685 = vpop.f32.mrb[0].mxu0
        %v686 = vadd.f32 0.0, %v685
        %687 = vmatprep.mubr.f32.mxu0 0.0
        %688 = vmatmul.mubr.f32.gmra.mrb[0].mxu0 %v414
        %v689 = vpop.f32.mrb[0].mxu0
        %v690 = vadd.f32 0.0, %v689
        %v691 = vpop.f32.mrb[0].mxu0
        %v692 = vadd.f32 0.0, %v691
        %693 = vmatprep.mubr.f32.mxu0 0.0
        %694 = vmatmul.mubr.f32.gmra.mrb[0].mxu0 %v415
        %v695 = vpop.f32.mrb[0].mxu0
        %v696 = vadd.f32 0.0, %v695
        %v697 = vpop.f32.mrb[0].mxu0
        %v698 = vadd.f32 0.0, %v697
        %699 = vmatprep.mubr.f32.mxu0 0.0
        %700 = vmatmul.mubr.f32.gmra.mrb[0].mxu0 %v416
        %v701 = vpop.f32.mrb[0].mxu0
        %v702 = vadd.f32 0.0, %v701
        %v703 = vpop.f32.mrb[0].mxu0
        %v704 = vadd.f32 0.0, %v703
        %705 = vdwg.mxu0
        %p706 = scmp.eq.s32.totalorder %s24, %s25
        // Predicated region
        $region49: #{tpu_custom_call.1} parent=31 // pred_check
          %p707 = pneg %p706
        $region50: #{tpu_custom_call.1} parent=31 // pred_check_branch
          %709 = sbr.rel (%p707) target = $region52
        $region51: #{tpu_custom_call.1} parent=31 // pred_region
          %v710 = vlaneseq
          %v711 = vshrl.u32 %v710, 7
          %v712 = vadd.s32 %v711, 8
          %v713 = vadd.s32 %v711, 16
          %v714 = vadd.s32 %v711, 24
          %v715 = vadd.s32 %v711, 32
          %v716 = vadd.s32 %v711, 40
          %v717 = vadd.s32 %v711, 48
          %v718 = vadd.s32 %v711, 56
          %v719 = vadd.s32 %v711, 64
          %v720 = vadd.s32 %v711, 72
          %v721 = vadd.s32 %v711, 80
          %v722 = vadd.s32 %v711, 88
          %v723 = vadd.s32 %v711, 96
          %v724 = vadd.s32 %v711, 104
          %v725 = vadd.s32 %v711, 112
          %v726 = vadd.s32 %v711, 120
          %v727 = vadd.s32 %v711, 128
          %v728 = vadd.s32 %v711, 136
          %v729 = vadd.s32 %v711, 144
          %v730 = vadd.s32 %v711, 152
          %v731 = vadd.s32 %v711, 160
          %v732 = vadd.s32 %v711, 168
          %v733 = vadd.s32 %v711, 176
          %v734 = vadd.s32 %v711, 184
          %v735 = vadd.s32 %v711, 192
          %v736 = vadd.s32 %v711, 200
          %v737 = vadd.s32 %v711, 208
          %v738 = vadd.s32 %v711, 216
          %v739 = vadd.s32 %v711, 224
          %v740 = vadd.s32 %v711, 232
          %v741 = vadd.s32 %v711, 240
          %v742 = vadd.s32 %v711, 248
          %v743 = vlaneseq
          %v744 = vand.u32 %v743, 127
          %v745 = vadd.s32 %v744, 128
          %vm746 = vcmp.eq.s32.totalorder %v711, %v744
          %vm747 = vcmp.eq.s32.totalorder %v711, %v745
          %vm748 = vcmp.eq.s32.totalorder %v712, %v744
          %vm749 = vcmp.eq.s32.totalorder %v712, %v745
          %vm750 = vcmp.eq.s32.totalorder %v713, %v744
          %vm751 = vcmp.eq.s32.totalorder %v713, %v745
          %vm752 = vcmp.eq.s32.totalorder %v714, %v744
          %vm753 = vcmp.eq.s32.totalorder %v714, %v745
          %vm754 = vcmp.eq.s32.totalorder %v715, %v744
          %vm755 = vcmp.eq.s32.totalorder %v715, %v745
          %vm756 = vcmp.eq.s32.totalorder %v716, %v744
          %vm757 = vcmp.eq.s32.totalorder %v716, %v745
          %vm758 = vcmp.eq.s32.totalorder %v717, %v744
          %vm759 = vcmp.eq.s32.totalorder %v717, %v745
          %vm760 = vcmp.eq.s32.totalorder %v718, %v744
          %vm761 = vcmp.eq.s32.totalorder %v718, %v745
          %vm762 = vcmp.eq.s32.totalorder %v719, %v744
          %vm763 = vcmp.eq.s32.totalorder %v719, %v745
          %vm764 = vcmp.eq.s32.totalorder %v720, %v744
          %vm765 = vcmp.eq.s32.totalorder %v720, %v745
          %vm766 = vcmp.eq.s32.totalorder %v721, %v744
          %vm767 = vcmp.eq.s32.totalorder %v721, %v745
          %vm768 = vcmp.eq.s32.totalorder %v722, %v744
          %vm769 = vcmp.eq.s32.totalorder %v722, %v745
          %vm770 = vcmp.eq.s32.totalorder %v723, %v744
          %vm771 = vcmp.eq.s32.totalorder %v723, %v745
          %vm772 = vcmp.eq.s32.totalorder %v724, %v744
          %vm773 = vcmp.eq.s32.totalorder %v724, %v745
          %vm774 = vcmp.eq.s32.totalorder %v725, %v744
          %vm775 = vcmp.eq.s32.totalorder %v725, %v745
          %vm776 = vcmp.eq.s32.totalorder %v726, %v744
          %vm777 = vcmp.eq.s32.totalorder %v726, %v745
          %vm778 = vcmp.eq.s32.totalorder %v727, %v744
          %vm779 = vcmp.eq.s32.totalorder %v727, %v745
          %vm780 = vcmp.eq.s32.totalorder %v728, %v744
          %vm781 = vcmp.eq.s32.totalorder %v728, %v745
          %vm782 = vcmp.eq.s32.totalorder %v729, %v744
          %vm783 = vcmp.eq.s32.totalorder %v729, %v745
          %vm784 = vcmp.eq.s32.totalorder %v730, %v744
          %vm785 = vcmp.eq.s32.totalorder %v730, %v745
          %vm786 = vcmp.eq.s32.totalorder %v731, %v744
          %vm787 = vcmp.eq.s32.totalorder %v731, %v745
          %vm788 = vcmp.eq.s32.totalorder %v732, %v744
          %vm789 = vcmp.eq.s32.totalorder %v732, %v745
          %vm790 = vcmp.eq.s32.totalorder %v733, %v744
          %vm791 = vcmp.eq.s32.totalorder %v733, %v745
          %vm792 = vcmp.eq.s32.totalorder %v734, %v744
          %vm793 = vcmp.eq.s32.totalorder %v734, %v745
          %vm794 = vcmp.eq.s32.totalorder %v735, %v744
          %vm795 = vcmp.eq.s32.totalorder %v735, %v745
          %vm796 = vcmp.eq.s32.totalorder %v736, %v744
          %vm797 = vcmp.eq.s32.totalorder %v736, %v745
          %vm798 = vcmp.eq.s32.totalorder %v737, %v744
          %vm799 = vcmp.eq.s32.totalorder %v737, %v745
          %vm800 = vcmp.eq.s32.totalorder %v738, %v744
          %vm801 = vcmp.eq.s32.totalorder %v738, %v745
          %vm802 = vcmp.eq.s32.totalorder %v739, %v744
          %vm803 = vcmp.eq.s32.totalorder %v739, %v745
          %vm804 = vcmp.eq.s32.totalorder %v740, %v744
          %vm805 = vcmp.eq.s32.totalorder %v740, %v745
          %vm806 = vcmp.eq.s32.totalorder %v741, %v744
          %vm807 = vcmp.eq.s32.totalorder %v741, %v745
          %vm808 = vcmp.eq.s32.totalorder %v742, %v744
          %vm809 = vcmp.eq.s32.totalorder %v742, %v745
          %v810 = vsel %vm746, -1e+30, %v516
          %v811 = vsel %vm747, -1e+30, %v518
          %v812 = vsel %vm748, -1e+30, %v522
          %v813 = vsel %vm749, -1e+30, %v524
          %v814 = vsel %vm750, -1e+30, %v528
          %v815 = vsel %vm751, -1e+30, %v530
          %v816 = vsel %vm752, -1e+30, %v534
          %v817 = vsel %vm753, -1e+30, %v536
          %v818 = vsel %vm754, -1e+30, %v540
          %v819 = vsel %vm755, -1e+30, %v542
          %v820 = vsel %vm756, -1e+30, %v546
          %v821 = vsel %vm757, -1e+30, %v548
          %v822 = vsel %vm758, -1e+30, %v552
          %v823 = vsel %vm759, -1e+30, %v554
          %v824 = vsel %vm760, -1e+30, %v558
          %v825 = vsel %vm761, -1e+30, %v560
          %v826 = vsel %vm762, -1e+30, %v564
          %v827 = vsel %vm763, -1e+30, %v566
          %v828 = vsel %vm764, -1e+30, %v570
          %v829 = vsel %vm765, -1e+30, %v572
          %v830 = vsel %vm766, -1e+30, %v576
          %v831 = vsel %vm767, -1e+30, %v578
          %v832 = vsel %vm768, -1e+30, %v582
          %v833 = vsel %vm769, -1e+30, %v584
          %v834 = vsel %vm770, -1e+30, %v588
          %v835 = vsel %vm771, -1e+30, %v590
          %v836 = vsel %vm772, -1e+30, %v594
          %v837 = vsel %vm773, -1e+30, %v596
          %v838 = vsel %vm774, -1e+30, %v600
          %v839 = vsel %vm775, -1e+30, %v602
          %v840 = vsel %vm776, -1e+30, %v606
          %v841 = vsel %vm777, -1e+30, %v608
          %v842 = vsel %vm778, -1e+30, %v612
          %v843 = vsel %vm779, -1e+30, %v614
          %v844 = vsel %vm780, -1e+30, %v618
          %v845 = vsel %vm781, -1e+30, %v620
          %v846 = vsel %vm782, -1e+30, %v624
          %v847 = vsel %vm783, -1e+30, %v626
          %v848 = vsel %vm784, -1e+30, %v630
          %v849 = vsel %vm785, -1e+30, %v632
          %v850 = vsel %vm786, -1e+30, %v636
          %v851 = vsel %vm787, -1e+30, %v638
          %v852 = vsel %vm788, -1e+30, %v642
          %v853 = vsel %vm789, -1e+30, %v644
          %v854 = vsel %vm790, -1e+30, %v648
          %v855 = vsel %vm791, -1e+30, %v650
          %v856 = vsel %vm792, -1e+30, %v654
          %v857 = vsel %vm793, -1e+30, %v656
          %v858 = vsel %vm794, -1e+30, %v660
          %v859 = vsel %vm795, -1e+30, %v662
          %v860 = vsel %vm796, -1e+30, %v666
          %v861 = vsel %vm797, -1e+30, %v668
          %v862 = vsel %vm798, -1e+30, %v672
          %v863 = vsel %vm799, -1e+30, %v674
          %v864 = vsel %vm800, -1e+30, %v678
          %v865 = vsel %vm801, -1e+30, %v680
          %v866 = vsel %vm802, -1e+30, %v684
          %v867 = vsel %vm803, -1e+30, %v686
          %v868 = vsel %vm804, -1e+30, %v690
          %v869 = vsel %vm805, -1e+30, %v692
          %v870 = vsel %vm806, -1e+30, %v696
          %v871 = vsel %vm807, -1e+30, %v698
          %v872 = vsel %vm808, -1e+30, %v702
          %v873 = vsel %vm809, -1e+30, %v704
          %v874 = vld [vmem:[#allocation2] sm:$0xff]
          %v875 = vld [vmem:[#allocation2 + $0x8] sm:$0xff]
          %v876 = vld [vmem:[#allocation2 + $0x10] sm:$0xff]
          %v877 = vld [vmem:[#allocation2 + $0x18] sm:$0xff]
          %v878 = vld [vmem:[#allocation2 + $0x20] sm:$0xff]
          %v879 = vld [vmem:[#allocation2 + $0x28] sm:$0xff]
          %v880 = vld [vmem:[#allocation2 + $0x30] sm:$0xff]
          %v881 = vld [vmem:[#allocation2 + $0x38] sm:$0xff]
          %v882 = vld [vmem:[#allocation2 + $0x40] sm:$0xff]
          %v883 = vld [vmem:[#allocation2 + $0x48] sm:$0xff]
          %v884 = vld [vmem:[#allocation2 + $0x50] sm:$0xff]
          %v885 = vld [vmem:[#allocation2 + $0x58] sm:$0xff]
          %v886 = vld [vmem:[#allocation2 + $0x60] sm:$0xff]
          %v887 = vld [vmem:[#allocation2 + $0x68] sm:$0xff]
          %v888 = vld [vmem:[#allocation2 + $0x70] sm:$0xff]
          %v889 = vld [vmem:[#allocation2 + $0x78] sm:$0xff]
          %v890 = vld [vmem:[#allocation2 + $0x80] sm:$0xff]
          %v891 = vld [vmem:[#allocation2 + $0x88] sm:$0xff]
          %v892 = vld [vmem:[#allocation2 + $0x90] sm:$0xff]
          %v893 = vld [vmem:[#allocation2 + $0x98] sm:$0xff]
          %v894 = vld [vmem:[#allocation2 + $0xa0] sm:$0xff]
          %v895 = vld [vmem:[#allocation2 + $0xa8] sm:$0xff]
          %v896 = vld [vmem:[#allocation2 + $0xb0] sm:$0xff]
          %v897 = vld [vmem:[#allocation2 + $0xb8] sm:$0xff]
          %v898 = vld [vmem:[#allocation2 + $0xc0] sm:$0xff]
          %v899 = vld [vmem:[#allocation2 + $0xc8] sm:$0xff]
          %v900 = vld [vmem:[#allocation2 + $0xd0] sm:$0xff]
          %v901 = vld [vmem:[#allocation2 + $0xd8] sm:$0xff]
          %v902 = vld [vmem:[#allocation2 + $0xe0] sm:$0xff]
          %v903 = vld [vmem:[#allocation2 + $0xe8] sm:$0xff]
          %v904 = vld [vmem:[#allocation2 + $0xf0] sm:$0xff]
          %v905 = vld [vmem:[#allocation2 + $0xf8] sm:$0xff]
          %v906 = vmax.f32 %v810, %v811
          %907 = vmax.xlane.f32.xlu0 %v906
          %v908 = vpop.xlane.xlu0 %907
          %v909 = vmax.f32 %v812, %v813
          %910 = vmax.xlane.f32.xlu0 %v909
          %v911 = vpop.xlane.xlu0 %910
          %v912 = vmax.f32 %v814, %v815
          %913 = vmax.xlane.f32.xlu0 %v912
          %v914 = vpop.xlane.xlu0 %913
          %v915 = vmax.f32 %v816, %v817
          %916 = vmax.xlane.f32.xlu0 %v915
          %v917 = vpop.xlane.xlu0 %916
          %v918 = vmax.f32 %v818, %v819
          %919 = vmax.xlane.f32.xlu0 %v918
          %v920 = vpop.xlane.xlu0 %919
          %v921 = vmax.f32 %v820, %v821
          %922 = vmax.xlane.f32.xlu0 %v921
          %v923 = vpop.xlane.xlu0 %922
          %v924 = vmax.f32 %v822, %v823
          %925 = vmax.xlane.f32.xlu0 %v924
          %v926 = vpop.xlane.xlu0 %925
          %v927 = vmax.f32 %v824, %v825
          %928 = vmax.xlane.f32.xlu0 %v927
          %v929 = vpop.xlane.xlu0 %928
          %v930 = vmax.f32 %v826, %v827
          %931 = vmax.xlane.f32.xlu0 %v930
          %v932 = vpop.xlane.xlu0 %931
          %v933 = vmax.f32 %v828, %v829
          %934 = vmax.xlane.f32.xlu0 %v933
          %v935 = vpop.xlane.xlu0 %934
          %v936 = vmax.f32 %v830, %v831
          %937 = vmax.xlane.f32.xlu0 %v936
          %v938 = vpop.xlane.xlu0 %937
          %v939 = vmax.f32 %v832, %v833
          %940 = vmax.xlane.f32.xlu0 %v939
          %v941 = vpop.xlane.xlu0 %940
          %v942 = vmax.f32 %v834, %v835
          %943 = vmax.xlane.f32.xlu0 %v942
          %v944 = vpop.xlane.xlu0 %943
          %v945 = vmax.f32 %v836, %v837
          %946 = vmax.xlane.f32.xlu0 %v945
          %v947 = vpop.xlane.xlu0 %946
          %v948 = vmax.f32 %v838, %v839
          %949 = vmax.xlane.f32.xlu0 %v948
          %v950 = vpop.xlane.xlu0 %949
          %v951 = vmax.f32 %v840, %v841
          %952 = vmax.xlane.f32.xlu0 %v951
          %v953 = vpop.xlane.xlu0 %952
          %v954 = vmax.f32 %v842, %v843
          %955 = vmax.xlane.f32.xlu0 %v954
          %v956 = vpop.xlane.xlu0 %955
          %v957 = vmax.f32 %v844, %v845
          %958 = vmax.xlane.f32.xlu0 %v957
          %v959 = vpop.xlane.xlu0 %958
          %v960 = vmax.f32 %v846, %v847
          %961 = vmax.xlane.f32.xlu0 %v960
          %v962 = vpop.xlane.xlu0 %961
          %v963 = vmax.f32 %v848, %v849
          %964 = vmax.xlane.f32.xlu0 %v963
          %v965 = vpop.xlane.xlu0 %964
          %v966 = vmax.f32 %v850, %v851
          %967 = vmax.xlane.f32.xlu0 %v966
          %v968 = vpop.xlane.xlu0 %967
          %v969 = vmax.f32 %v852, %v853
          %970 = vmax.xlane.f32.xlu0 %v969
          %v971 = vpop.xlane.xlu0 %970
          %v972 = vmax.f32 %v854, %v855
          %973 = vmax.xlane.f32.xlu0 %v972
          %v974 = vpop.xlane.xlu0 %973
          %v975 = vmax.f32 %v856, %v857
          %976 = vmax.xlane.f32.xlu0 %v975
          %v977 = vpop.xlane.xlu0 %976
          %v978 = vmax.f32 %v858, %v859
          %979 = vmax.xlane.f32.xlu0 %v978
          %v980 = vpop.xlane.xlu0 %979
          %v981 = vmax.f32 %v860, %v861
          %982 = vmax.xlane.f32.xlu0 %v981
          %v983 = vpop.xlane.xlu0 %982
          %v984 = vmax.f32 %v862, %v863
          %985 = vmax.xlane.f32.xlu0 %v984
          %v986 = vpop.xlane.xlu0 %985
          %v987 = vmax.f32 %v864, %v865
          %988 = vmax.xlane.f32.xlu0 %v987
          %v989 = vpop.xlane.xlu0 %988
          %v990 = vmax.f32 %v866, %v867
          %991 = vmax.xlane.f32.xlu0 %v990
          %v992 = vpop.xlane.xlu0 %991
          %v993 = vmax.f32 %v868, %v869
          %994 = vmax.xlane.f32.xlu0 %v993
          %v995 = vpop.xlane.xlu0 %994
          %v996 = vmax.f32 %v870, %v871
          %997 = vmax.xlane.f32.xlu0 %v996
          %v998 = vpop.xlane.xlu0 %997
          %v999 = vmax.f32 %v872, %v873
          %1000 = vmax.xlane.f32.xlu0 %v999
          %v1001 = vpop.xlane.xlu0 %1000
          %v1002 = vmax.f32 %v874, %v908
          %v1003 = vmax.f32 %v875, %v911
          %v1004 = vmax.f32 %v876, %v914
          %v1005 = vmax.f32 %v877, %v917
          %v1006 = vmax.f32 %v878, %v920
          %v1007 = vmax.f32 %v879, %v923
          %v1008 = vmax.f32 %v880, %v926
          %v1009 = vmax.f32 %v881, %v929
          %v1010 = vmax.f32 %v882, %v932
          %v1011 = vmax.f32 %v883, %v935
          %v1012 = vmax.f32 %v884, %v938
          %v1013 = vmax.f32 %v885, %v941
          %v1014 = vmax.f32 %v886, %v944
          %v1015 = vmax.f32 %v887, %v947
          %v1016 = vmax.f32 %v888, %v950
          %v1017 = vmax.f32 %v889, %v953
          %v1018 = vmax.f32 %v890, %v956
          %v1019 = vmax.f32 %v891, %v959
          %v1020 = vmax.f32 %v892, %v962
          %v1021 = vmax.f32 %v893, %v965
          %v1022 = vmax.f32 %v894, %v968
          %v1023 = vmax.f32 %v895, %v971
          %v1024 = vmax.f32 %v896, %v974
          %v1025 = vmax.f32 %v897, %v977
          %v1026 = vmax.f32 %v898, %v980
          %v1027 = vmax.f32 %v899, %v983
          %v1028 = vmax.f32 %v900, %v986
          %v1029 = vmax.f32 %v901, %v989
          %v1030 = vmax.f32 %v902, %v992
          %v1031 = vmax.f32 %v903, %v995
          %v1032 = vmax.f32 %v904, %v998
          %v1033 = vmax.f32 %v905, %v1001
          %v1034 = vsub.f32 %v874, %v1002
          %v1035 = vsub.f32 %v875, %v1003
          %v1036 = vsub.f32 %v876, %v1004
          %v1037 = vsub.f32 %v877, %v1005
          %v1038 = vsub.f32 %v878, %v1006
          %v1039 = vsub.f32 %v879, %v1007
          %v1040 = vsub.f32 %v880, %v1008
          %v1041 = vsub.f32 %v881, %v1009
          %v1042 = vsub.f32 %v882, %v1010
          %v1043 = vsub.f32 %v883, %v1011
          %v1044 = vsub.f32 %v884, %v1012
          %v1045 = vsub.f32 %v885, %v1013
          %v1046 = vsub.f32 %v886, %v1014
          %v1047 = vsub.f32 %v887, %v1015
          %v1048 = vsub.f32 %v888, %v1016
          %v1049 = vsub.f32 %v889, %v1017
          %v1050 = vsub.f32 %v890, %v1018
          %v1051 = vsub.f32 %v891, %v1019
          %v1052 = vsub.f32 %v892, %v1020
          %v1053 = vsub.f32 %v893, %v1021
          %v1054 = vsub.f32 %v894, %v1022
          %v1055 = vsub.f32 %v895, %v1023
          %v1056 = vsub.f32 %v896, %v1024
          %v1057 = vsub.f32 %v897, %v1025
          %v1058 = vsub.f32 %v898, %v1026
          %v1059 = vsub.f32 %v899, %v1027
          %v1060 = vsub.f32 %v900, %v1028
          %v1061 = vsub.f32 %v901, %v1029
          %v1062 = vsub.f32 %v902, %v1030
          %v1063 = vsub.f32 %v903, %v1031
          %v1064 = vsub.f32 %v904, %v1032
          %v1065 = vsub.f32 %v905, %v1033
          %v1066 = vmul.f32 %v1034, 1.442695
          %v1067 = vpow.pop %v1066
          %v1068 = vmul.f32 %v1035, 1.442695
          %v1069 = vpow.pop %v1068
          %v1070 = vmul.f32 %v1036, 1.442695
          %v1071 = vpow.pop %v1070
          %v1072 = vmul.f32 %v1037, 1.442695
          %v1073 = vpow.pop %v1072
          %v1074 = vmul.f32 %v1038, 1.442695
          %v1075 = vpow.pop %v1074
          %v1076 = vmul.f32 %v1039, 1.442695
          %v1077 = vpow.pop %v1076
          %v1078 = vmul.f32 %v1040, 1.442695
          %v1079 = vpow.pop %v1078
          %v1080 = vmul.f32 %v1041, 1.442695
          %v1081 = vpow.pop %v1080
          %v1082 = vmul.f32 %v1042, 1.442695
          %v1083 = vpow.pop %v1082
          %v1084 = vmul.f32 %v1043, 1.442695
          %v1085 = vpow.pop %v1084
          %v1086 = vmul.f32 %v1044, 1.442695
          %v1087 = vpow.pop %v1086
          %v1088 = vmul.f32 %v1045, 1.442695
          %v1089 = vpow.pop %v1088
          %v1090 = vmul.f32 %v1046, 1.442695
          %v1091 = vpow.pop %v1090
          %v1092 = vmul.f32 %v1047, 1.442695
          %v1093 = vpow.pop %v1092
          %v1094 = vmul.f32 %v1048, 1.442695
          %v1095 = vpow.pop %v1094
          %v1096 = vmul.f32 %v1049, 1.442695
          %v1097 = vpow.pop %v1096
          %v1098 = vmul.f32 %v1050, 1.442695
          %v1099 = vpow.pop %v1098
          %v1100 = vmul.f32 %v1051, 1.442695
          %v1101 = vpow.pop %v1100
          %v1102 = vmul.f32 %v1052, 1.442695
          %v1103 = vpow.pop %v1102
          %v1104 = vmul.f32 %v1053, 1.442695
          %v1105 = vpow.pop %v1104
          %v1106 = vmul.f32 %v1054, 1.442695
          %v1107 = vpow.pop %v1106
          %v1108 = vmul.f32 %v1055, 1.442695
          %v1109 = vpow.pop %v1108
          %v1110 = vmul.f32 %v1056, 1.442695
          %v1111 = vpow.pop %v1110
          %v1112 = vmul.f32 %v1057, 1.442695
          %v1113 = vpow.pop %v1112
          %v1114 = vmul.f32 %v1058, 1.442695
          %v1115 = vpow.pop %v1114
          %v1116 = vmul.f32 %v1059, 1.442695
          %v1117 = vpow.pop %v1116
          %v1118 = vmul.f32 %v1060, 1.442695
          %v1119 = vpow.pop %v1118
          %v1120 = vmul.f32 %v1061, 1.442695
          %v1121 = vpow.pop %v1120
          %v1122 = vmul.f32 %v1062, 1.442695
          %v1123 = vpow.pop %v1122
          %v1124 = vmul.f32 %v1063, 1.442695
          %v1125 = vpow.pop %v1124
          %v1126 = vmul.f32 %v1064, 1.442695
          %v1127 = vpow.pop %v1126
          %v1128 = vmul.f32 %v1065, 1.442695
          %v1129 = vpow.pop %v1128
          %1131 = vset.pattern.permute.xlu0 0
          %1132 = vperm.xlu0 %1131, %v1002
          %v1133 = vpop.permute.xlu0 %1132
          %1136 = vset.pattern.permute.xlu0 0
          %1137 = vperm.xlu0 %1136, %v1003
          %v1138 = vpop.permute.xlu0 %1137
          %1141 = vset.pattern.permute.xlu0 0
          %1142 = vperm.xlu0 %1141, %v1004
          %v1143 = vpop.permute.xlu0 %1142
          %1146 = vset.pattern.permute.xlu0 0
          %1147 = vperm.xlu0 %1146, %v1005
          %v1148 = vpop.permute.xlu0 %1147
          %1151 = vset.pattern.permute.xlu0 0
          %1152 = vperm.xlu0 %1151, %v1006
          %v1153 = vpop.permute.xlu0 %1152
          %1156 = vset.pattern.permute.xlu0 0
          %1157 = vperm.xlu0 %1156, %v1007
          %v1158 = vpop.permute.xlu0 %1157
          %1161 = vset.pattern.permute.xlu0 0
          %1162 = vperm.xlu0 %1161, %v1008
          %v1163 = vpop.permute.xlu0 %1162
          %1166 = vset.pattern.permute.xlu0 0
          %1167 = vperm.xlu0 %1166, %v1009
          %v1168 = vpop.permute.xlu0 %1167
          %1171 = vset.pattern.permute.xlu0 0
          %1172 = vperm.xlu0 %1171, %v1010
          %v1173 = vpop.permute.xlu0 %1172
          %1176 = vset.pattern.permute.xlu0 0
          %1177 = vperm.xlu0 %1176, %v1011
          %v1178 = vpop.permute.xlu0 %1177
          %1181 = vset.pattern.permute.xlu0 0
          %1182 = vperm.xlu0 %1181, %v1012
          %v1183 = vpop.permute.xlu0 %1182
          %1186 = vset.pattern.permute.xlu0 0
          %1187 = vperm.xlu0 %1186, %v1013
          %v1188 = vpop.permute.xlu0 %1187
          %1191 = vset.pattern.permute.xlu0 0
          %1192 = vperm.xlu0 %1191, %v1014
          %v1193 = vpop.permute.xlu0 %1192
          %1196 = vset.pattern.permute.xlu0 0
          %1197 = vperm.xlu0 %1196, %v1015
          %v1198 = vpop.permute.xlu0 %1197
          %1201 = vset.pattern.permute.xlu0 0
          %1202 = vperm.xlu0 %1201, %v1016
          %v1203 = vpop.permute.xlu0 %1202
          %1206 = vset.pattern.permute.xlu0 0
          %1207 = vperm.xlu0 %1206, %v1017
          %v1208 = vpop.permute.xlu0 %1207
          %1211 = vset.pattern.permute.xlu0 0
          %1212 = vperm.xlu0 %1211, %v1018
          %v1213 = vpop.permute.xlu0 %1212
          %1216 = vset.pattern.permute.xlu0 0
          %1217 = vperm.xlu0 %1216, %v1019
          %v1218 = vpop.permute.xlu0 %1217
          %1221 = vset.pattern.permute.xlu0 0
          %1222 = vperm.xlu0 %1221, %v1020
          %v1223 = vpop.permute.xlu0 %1222
          %1226 = vset.pattern.permute.xlu0 0
          %1227 = vperm.xlu0 %1226, %v1021
          %v1228 = vpop.permute.xlu0 %1227
          %1231 = vset.pattern.permute.xlu0 0
          %1232 = vperm.xlu0 %1231, %v1022
          %v1233 = vpop.permute.xlu0 %1232
          %1236 = vset.pattern.permute.xlu0 0
          %1237 = vperm.xlu0 %1236, %v1023
          %v1238 = vpop.permute.xlu0 %1237
          %1241 = vset.pattern.permute.xlu0 0
          %1242 = vperm.xlu0 %1241, %v1024
          %v1243 = vpop.permute.xlu0 %1242
          %1246 = vset.pattern.permute.xlu0 0
          %1247 = vperm.xlu0 %1246, %v1025
          %v1248 = vpop.permute.xlu0 %1247
          %1251 = vset.pattern.permute.xlu0 0
          %1252 = vperm.xlu0 %1251, %v1026
          %v1253 = vpop.permute.xlu0 %1252
          %1256 = vset.pattern.permute.xlu0 0
          %1257 = vperm.xlu0 %1256, %v1027
          %v1258 = vpop.permute.xlu0 %1257
          %1261 = vset.pattern.permute.xlu0 0
          %1262 = vperm.xlu0 %1261, %v1028
          %v1263 = vpop.permute.xlu0 %1262
          %1266 = vset.pattern.permute.xlu0 0
          %1267 = vperm.xlu0 %1266, %v1029
          %v1268 = vpop.permute.xlu0 %1267
          %1271 = vset.pattern.permute.xlu0 0
          %1272 = vperm.xlu0 %1271, %v1030
          %v1273 = vpop.permute.xlu0 %1272
          %1276 = vset.pattern.permute.xlu0 0
          %1277 = vperm.xlu0 %1276, %v1031
          %v1278 = vpop.permute.xlu0 %1277
          %1281 = vset.pattern.permute.xlu0 0
          %1282 = vperm.xlu0 %1281, %v1032
          %v1283 = vpop.permute.xlu0 %1282
          %1286 = vset.pattern.permute.xlu0 0
          %1287 = vperm.xlu0 %1286, %v1033
          %v1288 = vpop.permute.xlu0 %1287
          %v1290 = vsub.f32 %v810, %v1133
          %v1291 = vsub.f32 %v811, %v1133
          %v1292 = vsub.f32 %v812, %v1138
          %v1293 = vsub.f32 %v813, %v1138
          %v1294 = vsub.f32 %v814, %v1143
          %v1295 = vsub.f32 %v815, %v1143
          %v1296 = vsub.f32 %v816, %v1148
          %v1297 = vsub.f32 %v817, %v1148
          %v1298 = vsub.f32 %v818, %v1153
          %v1299 = vsub.f32 %v819, %v1153
          %v1300 = vsub.f32 %v820, %v1158
          %v1301 = vsub.f32 %v821, %v1158
          %v1302 = vsub.f32 %v822, %v1163
          %v1303 = vsub.f32 %v823, %v1163
          %v1304 = vsub.f32 %v824, %v1168
          %v1305 = vsub.f32 %v825, %v1168
          %v1306 = vsub.f32 %v826, %v1173
          %v1307 = vsub.f32 %v827, %v1173
          %v1308 = vsub.f32 %v828, %v1178
          %v1309 = vsub.f32 %v829, %v1178
          %v1310 = vsub.f32 %v830, %v1183
          %v1311 = vsub.f32 %v831, %v1183
          %v1312 = vsub.f32 %v832, %v1188
          %v1313 = vsub.f32 %v833, %v1188
          %v1314 = vsub.f32 %v834, %v1193
          %v1315 = vsub.f32 %v835, %v1193
          %v1316 = vsub.f32 %v836, %v1198
          %v1317 = vsub.f32 %v837, %v1198
          %v1318 = vsub.f32 %v838, %v1203
          %v1319 = vsub.f32 %v839, %v1203
          %v1320 = vsub.f32 %v840, %v1208
          %v1321 = vsub.f32 %v841, %v1208
          %v1322 = vsub.f32 %v842, %v1213
          %v1323 = vsub.f32 %v843, %v1213
          %v1324 = vsub.f32 %v844, %v1218
          %v1325 = vsub.f32 %v845, %v1218
          %v1326 = vsub.f32 %v846, %v1223
          %v1327 = vsub.f32 %v847, %v1223
          %v1328 = vsub.f32 %v848, %v1228
          %v1329 = vsub.f32 %v849, %v1228
          %v1330 = vsub.f32 %v850, %v1233
          %v1331 = vsub.f32 %v851, %v1233
          %v1332 = vsub.f32 %v852, %v1238
          %v1333 = vsub.f32 %v853, %v1238
          %v1334 = vsub.f32 %v854, %v1243
          %v1335 = vsub.f32 %v855, %v1243
          %v1336 = vsub.f32 %v856, %v1248
          %v1337 = vsub.f32 %v857, %v1248
          %v1338 = vsub.f32 %v858, %v1253
          %v1339 = vsub.f32 %v859, %v1253
          %v1340 = vsub.f32 %v860, %v1258
          %v1341 = vsub.f32 %v861, %v1258
          %v1342 = vsub.f32 %v862, %v1263
          %v1343 = vsub.f32 %v863, %v1263
          %v1344 = vsub.f32 %v864, %v1268
          %v1345 = vsub.f32 %v865, %v1268
          %v1346 = vsub.f32 %v866, %v1273
          %v1347 = vsub.f32 %v867, %v1273
          %v1348 = vsub.f32 %v868, %v1278
          %v1349 = vsub.f32 %v869, %v1278
          %v1350 = vsub.f32 %v870, %v1283
          %v1351 = vsub.f32 %v871, %v1283
          %v1352 = vsub.f32 %v872, %v1288
          %v1353 = vsub.f32 %v873, %v1288
          %v1354 = vmul.f32 %v1290, 1.442695
          %v1355 = vpow.pop %v1354
          %v1356 = vmul.f32 %v1291, 1.442695
          %v1357 = vpow.pop %v1356
          %v1358 = vmul.f32 %v1292, 1.442695
          %v1359 = vpow.pop %v1358
          %v1360 = vmul.f32 %v1293, 1.442695
          %v1361 = vpow.pop %v1360
          %v1362 = vmul.f32 %v1294, 1.442695
          %v1363 = vpow.pop %v1362
          %v1364 = vmul.f32 %v1295, 1.442695
          %v1365 = vpow.pop %v1364
          %v1366 = vmul.f32 %v1296, 1.442695
          %v1367 = vpow.pop %v1366
          %v1368 = vmul.f32 %v1297, 1.442695
          %v1369 = vpow.pop %v1368
          %v1370 = vmul.f32 %v1298, 1.442695
          %v1371 = vpow.pop %v1370
          %v1372 = vmul.f32 %v1299, 1.442695
          %v1373 = vpow.pop %v1372
          %v1374 = vmul.f32 %v1300, 1.442695
          %v1375 = vpow.pop %v1374
          %v1376 = vmul.f32 %v1301, 1.442695
          %v1377 = vpow.pop %v1376
          %v1378 = vmul.f32 %v1302, 1.442695
          %v1379 = vpow.pop %v1378
          %v1380 = vmul.f32 %v1303, 1.442695
          %v1381 = vpow.pop %v1380
          %v1382 = vmul.f32 %v1304, 1.442695
          %v1383 = vpow.pop %v1382
          %v1384 = vmul.f32 %v1305, 1.442695
          %v1385 = vpow.pop %v1384
          %v1386 = vmul.f32 %v1306, 1.442695
          %v1387 = vpow.pop %v1386
          %v1388 = vmul.f32 %v1307, 1.442695
          %v1389 = vpow.pop %v1388
          %v1390 = vmul.f32 %v1308, 1.442695
          %v1391 = vpow.pop %v1390
          %v1392 = vmul.f32 %v1309, 1.442695
          %v1393 = vpow.pop %v1392
          %v1394 = vmul.f32 %v1310, 1.442695
          %v1395 = vpow.pop %v1394
          %v1396 = vmul.f32 %v1311, 1.442695
          %v1397 = vpow.pop %v1396
          %v1398 = vmul.f32 %v1312, 1.442695
          %v1399 = vpow.pop %v1398
          %v1400 = vmul.f32 %v1313, 1.442695
          %v1401 = vpow.pop %v1400
          %v1402 = vmul.f32 %v1314, 1.442695
          %v1403 = vpow.pop %v1402
          %v1404 = vmul.f32 %v1315, 1.442695
          %v1405 = vpow.pop %v1404
          %v1406 = vmul.f32 %v1316, 1.442695
          %v1407 = vpow.pop %v1406
          %v1408 = vmul.f32 %v1317, 1.442695
          %v1409 = vpow.pop %v1408
          %v1410 = vmul.f32 %v1318, 1.442695
          %v1411 = vpow.pop %v1410
          %v1412 = vmul.f32 %v1319, 1.442695
          %v1413 = vpow.pop %v1412
          %v1414 = vmul.f32 %v1320, 1.442695
          %v1415 = vpow.pop %v1414
          %v1416 = vmul.f32 %v1321, 1.442695
          %v1417 = vpow.pop %v1416
          %v1418 = vmul.f32 %v1322, 1.442695
          %v1419 = vpow.pop %v1418
          %v1420 = vmul.f32 %v1323, 1.442695
          %v1421 = vpow.pop %v1420
          %v1422 = vmul.f32 %v1324, 1.442695
          %v1423 = vpow.pop %v1422
          %v1424 = vmul.f32 %v1325, 1.442695
          %v1425 = vpow.pop %v1424
          %v1426 = vmul.f32 %v1326, 1.442695
          %v1427 = vpow.pop %v1426
          %v1428 = vmul.f32 %v1327, 1.442695
          %v1429 = vpow.pop %v1428
          %v1430 = vmul.f32 %v1328, 1.442695
          %v1431 = vpow.pop %v1430
          %v1432 = vmul.f32 %v1329, 1.442695
          %v1433 = vpow.pop %v1432
          %v1434 = vmul.f32 %v1330, 1.442695
          %v1435 = vpow.pop %v1434
          %v1436 = vmul.f32 %v1331, 1.442695
          %v1437 = vpow.pop %v1436
          %v1438 = vmul.f32 %v1332, 1.442695
          %v1439 = vpow.pop %v1438
          %v1440 = vmul.f32 %v1333, 1.442695
          %v1441 = vpow.pop %v1440
          %v1442 = vmul.f32 %v1334, 1.442695
          %v1443 = vpow.pop %v1442
          %v1444 = vmul.f32 %v1335, 1.442695
          %v1445 = vpow.pop %v1444
          %v1446 = vmul.f32 %v1336, 1.442695
          %v1447 = vpow.pop %v1446
          %v1448 = vmul.f32 %v1337, 1.442695
          %v1449 = vpow.pop %v1448
          %v1450 = vmul.f32 %v1338, 1.442695
          %v1451 = vpow.pop %v1450
          %v1452 = vmul.f32 %v1339, 1.442695
          %v1453 = vpow.pop %v1452
          %v1454 = vmul.f32 %v1340, 1.442695
          %v1455 = vpow.pop %v1454
          %v1456 = vmul.f32 %v1341, 1.442695
          %v1457 = vpow.pop %v1456
          %v1458 = vmul.f32 %v1342, 1.442695
          %v1459 = vpow.pop %v1458
          %v1460 = vmul.f32 %v1343, 1.442695
          %v1461 = vpow.pop %v1460
          %v1462 = vmul.f32 %v1344, 1.442695
          %v1463 = vpow.pop %v1462
          %v1464 = vmul.f32 %v1345, 1.442695
          %v1465 = vpow.pop %v1464
          %v1466 = vmul.f32 %v1346, 1.442695
          %v1467 = vpow.pop %v1466
          %v1468 = vmul.f32 %v1347, 1.442695
          %v1469 = vpow.pop %v1468
          %v1470 = vmul.f32 %v1348, 1.442695
          %v1471 = vpow.pop %v1470
          %v1472 = vmul.f32 %v1349, 1.442695
          %v1473 = vpow.pop %v1472
          %v1474 = vmul.f32 %v1350, 1.442695
          %v1475 = vpow.pop %v1474
          %v1476 = vmul.f32 %v1351, 1.442695
          %v1477 = vpow.pop %v1476
          %v1478 = vmul.f32 %v1352, 1.442695
          %v1479 = vpow.pop %v1478
          %v1480 = vmul.f32 %v1353, 1.442695
          %v1481 = vpow.pop %v1480
          %v1482 = vld [vmem:[#allocation3] sm:$0xff]
          %v1483 = vld [vmem:[#allocation3 + $0x8] sm:$0xff]
          %v1484 = vld [vmem:[#allocation3 + $0x10] sm:$0xff]
          %v1485 = vld [vmem:[#allocation3 + $0x18] sm:$0xff]
          %v1486 = vld [vmem:[#allocation3 + $0x20] sm:$0xff]
          %v1487 = vld [vmem:[#allocation3 + $0x28] sm:$0xff]
          %v1488 = vld [vmem:[#allocation3 + $0x30] sm:$0xff]
          %v1489 = vld [vmem:[#allocation3 + $0x38] sm:$0xff]
          %v1490 = vld [vmem:[#allocation3 + $0x40] sm:$0xff]
          %v1491 = vld [vmem:[#allocation3 + $0x48] sm:$0xff]
          %v1492 = vld [vmem:[#allocation3 + $0x50] sm:$0xff]
          %v1493 = vld [vmem:[#allocation3 + $0x58] sm:$0xff]
          %v1494 = vld [vmem:[#allocation3 + $0x60] sm:$0xff]
          %v1495 = vld [vmem:[#allocation3 + $0x68] sm:$0xff]
          %v1496 = vld [vmem:[#allocation3 + $0x70] sm:$0xff]
          %v1497 = vld [vmem:[#allocation3 + $0x78] sm:$0xff]
          %v1498 = vld [vmem:[#allocation3 + $0x80] sm:$0xff]
          %v1499 = vld [vmem:[#allocation3 + $0x88] sm:$0xff]
          %v1500 = vld [vmem:[#allocation3 + $0x90] sm:$0xff]
          %v1501 = vld [vmem:[#allocation3 + $0x98] sm:$0xff]
          %v1502 = vld [vmem:[#allocation3 + $0xa0] sm:$0xff]
          %v1503 = vld [vmem:[#allocation3 + $0xa8] sm:$0xff]
          %v1504 = vld [vmem:[#allocation3 + $0xb0] sm:$0xff]
          %v1505 = vld [vmem:[#allocation3 + $0xb8] sm:$0xff]
          %v1506 = vld [vmem:[#allocation3 + $0xc0] sm:$0xff]
          %v1507 = vld [vmem:[#allocation3 + $0xc8] sm:$0xff]
          %v1508 = vld [vmem:[#allocation3 + $0xd0] sm:$0xff]
          %v1509 = vld [vmem:[#allocation3 + $0xd8] sm:$0xff]
          %v1510 = vld [vmem:[#allocation3 + $0xe0] sm:$0xff]
          %v1511 = vld [vmem:[#allocation3 + $0xe8] sm:$0xff]
          %v1512 = vld [vmem:[#allocation3 + $0xf0] sm:$0xff]
          %v1513 = vld [vmem:[#allocation3 + $0xf8] sm:$0xff]
          %v1514 = vmul.f32 %v1067, %v1482
          %v1515 = vmul.f32 %v1069, %v1483
          %v1516 = vmul.f32 %v1071, %v1484
          %v1517 = vmul.f32 %v1073, %v1485
          %v1518 = vmul.f32 %v1075, %v1486
          %v1519 = vmul.f32 %v1077, %v1487
          %v1520 = vmul.f32 %v1079, %v1488
          %v1521 = vmul.f32 %v1081, %v1489
          %v1522 = vmul.f32 %v1083, %v1490
          %v1523 = vmul.f32 %v1085, %v1491
          %v1524 = vmul.f32 %v1087, %v1492
          %v1525 = vmul.f32 %v1089, %v1493
          %v1526 = vmul.f32 %v1091, %v1494
          %v1527 = vmul.f32 %v1093, %v1495
          %v1528 = vmul.f32 %v1095, %v1496
          %v1529 = vmul.f32 %v1097, %v1497
          %v1530 = vmul.f32 %v1099, %v1498
          %v1531 = vmul.f32 %v1101, %v1499
          %v1532 = vmul.f32 %v1103, %v1500
          %v1533 = vmul.f32 %v1105, %v1501
          %v1534 = vmul.f32 %v1107, %v1502
          %v1535 = vmul.f32 %v1109, %v1503
          %v1536 = vmul.f32 %v1111, %v1504
          %v1537 = vmul.f32 %v1113, %v1505
          %v1538 = vmul.f32 %v1115, %v1506
          %v1539 = vmul.f32 %v1117, %v1507
          %v1540 = vmul.f32 %v1119, %v1508
          %v1541 = vmul.f32 %v1121, %v1509
          %v1542 = vmul.f32 %v1123, %v1510
          %v1543 = vmul.f32 %v1125, %v1511
          %v1544 = vmul.f32 %v1127, %v1512
          %v1545 = vmul.f32 %v1129, %v1513
          %v1546 = vadd.f32 %v1355, %v1357
          %1547 = vadd.xlane.f32.xlu0 %v1546
          %v1548 = vpop.xlane.xlu0 %1547
          %v1549 = vadd.f32 %v1359, %v1361
          %1550 = vadd.xlane.f32.xlu0 %v1549
          %v1551 = vpop.xlane.xlu0 %1550
          %v1552 = vadd.f32 %v1363, %v1365
          %1553 = vadd.xlane.f32.xlu0 %v1552
          %v1554 = vpop.xlane.xlu0 %1553
          %v1555 = vadd.f32 %v1367, %v1369
          %1556 = vadd.xlane.f32.xlu0 %v1555
          %v1557 = vpop.xlane.xlu0 %1556
          %v1558 = vadd.f32 %v1371, %v1373
          %1559 = vadd.xlane.f32.xlu0 %v1558
          %v1560 = vpop.xlane.xlu0 %1559
          %v1561 = vadd.f32 %v1375, %v1377
          %1562 = vadd.xlane.f32.xlu0 %v1561
          %v1563 = vpop.xlane.xlu0 %1562
          %v1564 = vadd.f32 %v1379, %v1381
          %1565 = vadd.xlane.f32.xlu0 %v1564
          %v1566 = vpop.xlane.xlu0 %1565
          %v1567 = vadd.f32 %v1383, %v1385
          %1568 = vadd.xlane.f32.xlu0 %v1567
          %v1569 = vpop.xlane.xlu0 %1568
          %v1570 = vadd.f32 %v1387, %v1389
          %1571 = vadd.xlane.f32.xlu0 %v1570
          %v1572 = vpop.xlane.xlu0 %1571
          %v1573 = vadd.f32 %v1391, %v1393
          %1574 = vadd.xlane.f32.xlu0 %v1573
          %v1575 = vpop.xlane.xlu0 %1574
          %v1576 = vadd.f32 %v1395, %v1397
          %1577 = vadd.xlane.f32.xlu0 %v1576
          %v1578 = vpop.xlane.xlu0 %1577
          %v1579 = vadd.f32 %v1399, %v1401
          %1580 = vadd.xlane.f32.xlu0 %v1579
          %v1581 = vpop.xlane.xlu0 %1580
          %v1582 = vadd.f32 %v1403, %v1405
          %1583 = vadd.xlane.f32.xlu0 %v1582
          %v1584 = vpop.xlane.xlu0 %1583
          %v1585 = vadd.f32 %v1407, %v1409
          %1586 = vadd.xlane.f32.xlu0 %v1585
          %v1587 = vpop.xlane.xlu0 %1586
          %v1588 = vadd.f32 %v1411, %v1413
          %1589 = vadd.xlane.f32.xlu0 %v1588
          %v1590 = vpop.xlane.xlu0 %1589
          %v1591 = vadd.f32 %v1415, %v1417
          %1592 = vadd.xlane.f32.xlu0 %v1591
          %v1593 = vpop.xlane.xlu0 %1592
          %v1594 = vadd.f32 %v1419, %v1421
          %1595 = vadd.xlane.f32.xlu0 %v1594
          %v1596 = vpop.xlane.xlu0 %1595
          %v1597 = vadd.f32 %v1423, %v1425
          %1598 = vadd.xlane.f32.xlu0 %v1597
          %v1599 = vpop.xlane.xlu0 %1598
          %v1600 = vadd.f32 %v1427, %v1429
          %1601 = vadd.xlane.f32.xlu0 %v1600
          %v1602 = vpop.xlane.xlu0 %1601
          %v1603 = vadd.f32 %v1431, %v1433
          %1604 = vadd.xlane.f32.xlu0 %v1603
          %v1605 = vpop.xlane.xlu0 %1604
          %v1606 = vadd.f32 %v1435, %v1437
          %1607 = vadd.xlane.f32.xlu0 %v1606
          %v1608 = vpop.xlane.xlu0 %1607
          %v1609 = vadd.f32 %v1439, %v1441
          %1610 = vadd.xlane.f32.xlu0 %v1609
          %v1611 = vpop.xlane.xlu0 %1610
          %v1612 = vadd.f32 %v1443, %v1445
          %1613 = vadd.xlane.f32.xlu0 %v1612
          %v1614 = vpop.xlane.xlu0 %1613
          %v1615 = vadd.f32 %v1447, %v1449
          %1616 = vadd.xlane.f32.xlu0 %v1615
          %v1617 = vpop.xlane.xlu0 %1616
          %v1618 = vadd.f32 %v1451, %v1453
          %1619 = vadd.xlane.f32.xlu0 %v1618
          %v1620 = vpop.xlane.xlu0 %1619
          %v1621 = vadd.f32 %v1455, %v1457
          %1622 = vadd.xlane.f32.xlu0 %v1621
          %v1623 = vpop.xlane.xlu0 %1622
          %v1624 = vadd.f32 %v1459, %v1461
          %1625 = vadd.xlane.f32.xlu0 %v1624
          %v1626 = vpop.xlane.xlu0 %1625
          %v1627 = vadd.f32 %v1463, %v1465
          %1628 = vadd.xlane.f32.xlu0 %v1627
          %v1629 = vpop.xlane.xlu0 %1628
          %v1630 = vadd.f32 %v1467, %v1469
          %1631 = vadd.xlane.f32.xlu0 %v1630
          %v1632 = vpop.xlane.xlu0 %1631
          %v1633 = vadd.f32 %v1471, %v1473
          %1634 = vadd.xlane.f32.xlu0 %v1633
          %v1635 = vpop.xlane.xlu0 %1634
          %v1636 = vadd.f32 %v1475, %v1477
          %1637 = vadd.xlane.f32.xlu0 %v1636
          %v1638 = vpop.xlane.xlu0 %1637
          %v1639 = vadd.f32 %v1479, %v1481
          %1640 = vadd.xlane.f32.xlu0 %v1639
          %v1641 = vpop.xlane.xlu0 %1640
          %v1642 = vadd.f32 %v1514, %v1548
          %v1643 = vadd.f32 %v1515, %v1551
          %v1644 = vadd.f32 %v1516, %v1554
          %v1645 = vadd.f32 %v1517, %v1557
          %v1646 = vadd.f32 %v1518, %v1560
          %v1647 = vadd.f32 %v1519, %v1563
          %v1648 = vadd.f32 %v1520, %v1566
          %v1649 = vadd.f32 %v1521, %v1569
          %v1650 = vadd.f32 %v1522, %v1572
          %v1651 = vadd.f32 %v1523, %v1575
          %v1652 = vadd.f32 %v1524, %v1578
          %v1653 = vadd.f32 %v1525, %v1581
          %v1654 = vadd.f32 %v1526, %v1584
          %v1655 = vadd.f32 %v1527, %v1587
          %v1656 = vadd.f32 %v1528, %v1590
          %v1657 = vadd.f32 %v1529, %v1593
          %v1658 = vadd.f32 %v1530, %v1596
          %v1659 = vadd.f32 %v1531, %v1599
          %v1660 = vadd.f32 %v1532, %v1602
          %v1661 = vadd.f32 %v1533, %v1605
          %v1662 = vadd.f32 %v1534, %v1608
          %v1663 = vadd.f32 %v1535, %v1611
          %v1664 = vadd.f32 %v1536, %v1614
          %v1665 = vadd.f32 %v1537, %v1617
          %v1666 = vadd.f32 %v1538, %v1620
          %v1667 = vadd.f32 %v1539, %v1623
          %v1668 = vadd.f32 %v1540, %v1626
          %v1669 = vadd.f32 %v1541, %v1629
          %v1670 = vadd.f32 %v1542, %v1632
          %v1671 = vadd.f32 %v1543, %v1635
          %v1672 = vadd.f32 %v1544, %v1638
          %v1673 = vadd.f32 %v1545, %v1641
          %vm1674 = vcmask 7168
          %1675 = vst.msk [vmem:[#allocation3] sm:$0xff] %vm1674, %v1642
          %1676 = vst.msk [vmem:[#allocation3 + $0x8] sm:$0xff] %vm1674, %v1643
          %1677 = vst.msk [vmem:[#allocation3 + $0x10] sm:$0xff] %vm1674, %v1644
          %1678 = vst.msk [vmem:[#allocation3 + $0x18] sm:$0xff] %vm1674, %v1645
          %1679 = vst.msk [vmem:[#allocation3 + $0x20] sm:$0xff] %vm1674, %v1646
          %1680 = vst.msk [vmem:[#allocation3 + $0x28] sm:$0xff] %vm1674, %v1647
          %1681 = vst.msk [vmem:[#allocation3 + $0x30] sm:$0xff] %vm1674, %v1648
          %1682 = vst.msk [vmem:[#allocation3 + $0x38] sm:$0xff] %vm1674, %v1649
          %1683 = vst.msk [vmem:[#allocation3 + $0x40] sm:$0xff] %vm1674, %v1650
          %1684 = vst.msk [vmem:[#allocation3 + $0x48] sm:$0xff] %vm1674, %v1651
          %1685 = vst.msk [vmem:[#allocation3 + $0x50] sm:$0xff] %vm1674, %v1652
          %1686 = vst.msk [vmem:[#allocation3 + $0x58] sm:$0xff] %vm1674, %v1653
          %1687 = vst.msk [vmem:[#allocation3 + $0x60] sm:$0xff] %vm1674, %v1654
          %1688 = vst.msk [vmem:[#allocation3 + $0x68] sm:$0xff] %vm1674, %v1655
          %1689 = vst.msk [vmem:[#allocation3 + $0x70] sm:$0xff] %vm1674, %v1656
          %1690 = vst.msk [vmem:[#allocation3 + $0x78] sm:$0xff] %vm1674, %v1657
          %1691 = vst.msk [vmem:[#allocation3 + $0x80] sm:$0xff] %vm1674, %v1658
          %1692 = vst.msk [vmem:[#allocation3 + $0x88] sm:$0xff] %vm1674, %v1659
          %1693 = vst.msk [vmem:[#allocation3 + $0x90] sm:$0xff] %vm1674, %v1660
          %1694 = vst.msk [vmem:[#allocation3 + $0x98] sm:$0xff] %vm1674, %v1661
          %1695 = vst.msk [vmem:[#allocation3 + $0xa0] sm:$0xff] %vm1674, %v1662
          %1696 = vst.msk [vmem:[#allocation3 + $0xa8] sm:$0xff] %vm1674, %v1663
          %1697 = vst.msk [vmem:[#allocation3 + $0xb0] sm:$0xff] %vm1674, %v1664
          %1698 = vst.msk [vmem:[#allocation3 + $0xb8] sm:$0xff] %vm1674, %v1665
          %1699 = vst.msk [vmem:[#allocation3 + $0xc0] sm:$0xff] %vm1674, %v1666
          %1700 = vst.msk [vmem:[#allocation3 + $0xc8] sm:$0xff] %vm1674, %v1667
          %1701 = vst.msk [vmem:[#allocation3 + $0xd0] sm:$0xff] %vm1674, %v1668
          %1702 = vst.msk [vmem:[#allocation3 + $0xd8] sm:$0xff] %vm1674, %v1669
          %1703 = vst.msk [vmem:[#allocation3 + $0xe0] sm:$0xff] %vm1674, %v1670
          %1704 = vst.msk [vmem:[#allocation3 + $0xe8] sm:$0xff] %vm1674, %v1671
          %1705 = vst.msk [vmem:[#allocation3 + $0xf0] sm:$0xff] %vm1674, %v1672
          %1706 = vst.msk [vmem:[#allocation3 + $0xf8] sm:$0xff] %vm1674, %v1673
          %1707 = vst.msk [vmem:[#allocation2] sm:$0xff] %vm1674, %v1002
          %1708 = vst.msk [vmem:[#allocation2 + $0x8] sm:$0xff] %vm1674, %v1003
          %1709 = vst.msk [vmem:[#allocation2 + $0x10] sm:$0xff] %vm1674, %v1004
          %1710 = vst.msk [vmem:[#allocation2 + $0x18] sm:$0xff] %vm1674, %v1005
          %1711 = vst.msk [vmem:[#allocation2 + $0x20] sm:$0xff] %vm1674, %v1006
          %1712 = vst.msk [vmem:[#allocation2 + $0x28] sm:$0xff] %vm1674, %v1007
          %1713 = vst.msk [vmem:[#allocation2 + $0x30] sm:$0xff] %vm1674, %v1008
          %1714 = vst.msk [vmem:[#allocation2 + $0x38] sm:$0xff] %vm1674, %v1009
          %1715 = vst.msk [vmem:[#allocation2 + $0x40] sm:$0xff] %vm1674, %v1010
          %1716 = vst.msk [vmem:[#allocation2 + $0x48] sm:$0xff] %vm1674, %v1011
          %1717 = vst.msk [vmem:[#allocation2 + $0x50] sm:$0xff] %vm1674, %v1012
          %1718 = vst.msk [vmem:[#allocation2 + $0x58] sm:$0xff] %vm1674, %v1013
          %1719 = vst.msk [vmem:[#allocation2 + $0x60] sm:$0xff] %vm1674, %v1014
          %1720 = vst.msk [vmem:[#allocation2 + $0x68] sm:$0xff] %vm1674, %v1015
          %1721 = vst.msk [vmem:[#allocation2 + $0x70] sm:$0xff] %vm1674, %v1016
          %1722 = vst.msk [vmem:[#allocation2 + $0x78] sm:$0xff] %vm1674, %v1017
          %1723 = vst.msk [vmem:[#allocation2 + $0x80] sm:$0xff] %vm1674, %v1018
          %1724 = vst.msk [vmem:[#allocation2 + $0x88] sm:$0xff] %vm1674, %v1019
          %1725 = vst.msk [vmem:[#allocation2 + $0x90] sm:$0xff] %vm1674, %v1020
          %1726 = vst.msk [vmem:[#allocation2 + $0x98] sm:$0xff] %vm1674, %v1021
          %1727 = vst.msk [vmem:[#allocation2 + $0xa0] sm:$0xff] %vm1674, %v1022
          %1728 = vst.msk [vmem:[#allocation2 + $0xa8] sm:$0xff] %vm1674, %v1023
          %1729 = vst.msk [vmem:[#allocation2 + $0xb0] sm:$0xff] %vm1674, %v1024
          %1730 = vst.msk [vmem:[#allocation2 + $0xb8] sm:$0xff] %vm1674, %v1025
          %1731 = vst.msk [vmem:[#allocation2 + $0xc0] sm:$0xff] %vm1674, %v1026
          %1732 = vst.msk [vmem:[#allocation2 + $0xc8] sm:$0xff] %vm1674, %v1027
          %1733 = vst.msk [vmem:[#allocation2 + $0xd0] sm:$0xff] %vm1674, %v1028
          %1734 = vst.msk [vmem:[#allocation2 + $0xd8] sm:$0xff] %vm1674, %v1029
          %1735 = vst.msk [vmem:[#allocation2 + $0xe0] sm:$0xff] %vm1674, %v1030
          %1736 = vst.msk [vmem:[#allocation2 + $0xe8] sm:$0xff] %vm1674, %v1031
          %1737 = vst.msk [vmem:[#allocation2 + $0xf0] sm:$0xff] %vm1674, %v1032
          %1738 = vst.msk [vmem:[#allocation2 + $0xf8] sm:$0xff] %vm1674, %v1033
        $region52: #{tpu_custom_call.1} parent=31 // pred_fallthru
          _
        %p1739 = scmp.ne.s32.totalorder %s24, %s25
        // Predicated region
        $region53: #{tpu_custom_call.1} parent=31 // pred_check
          %p1740 = pneg %p1739
        $region54: #{tpu_custom_call.1} parent=31 // pred_check_branch
          %1742 = sbr.rel (%p1740) target = $region56
        $region55: #{tpu_custom_call.1} parent=31 // pred_region
          %v1743 = vld [vmem:[#allocation2] sm:$0xff]
          %v1744 = vld [vmem:[#allocation2 + $0x8] sm:$0xff]
          %v1745 = vld [vmem:[#allocation2 + $0x10] sm:$0xff]
          %v1746 = vld [vmem:[#allocation2 + $0x18] sm:$0xff]
          %v1747 = vld [vmem:[#allocation2 + $0x20] sm:$0xff]
          %v1748 = vld [vmem:[#allocation2 + $0x28] sm:$0xff]
          %v1749 = vld [vmem:[#allocation2 + $0x30] sm:$0xff]
          %v1750 = vld [vmem:[#allocation2 + $0x38] sm:$0xff]
          %v1751 = vld [vmem:[#allocation2 + $0x40] sm:$0xff]
          %v1752 = vld [vmem:[#allocation2 + $0x48] sm:$0xff]
          %v1753 = vld [vmem:[#allocation2 + $0x50] sm:$0xff]
          %v1754 = vld [vmem:[#allocation2 + $0x58] sm:$0xff]
          %v1755 = vld [vmem:[#allocation2 + $0x60] sm:$0xff]
          %v1756 = vld [vmem:[#allocation2 + $0x68] sm:$0xff]
          %v1757 = vld [vmem:[#allocation2 + $0x70] sm:$0xff]
          %v1758 = vld [vmem:[#allocation2 + $0x78] sm:$0xff]
          %v1759 = vld [vmem:[#allocation2 + $0x80] sm:$0xff]
          %v1760 = vld [vmem:[#allocation2 + $0x88] sm:$0xff]
          %v1761 = vld [vmem:[#allocation2 + $0x90] sm:$0xff]
          %v1762 = vld [vmem:[#allocation2 + $0x98] sm:$0xff]
          %v1763 = vld [vmem:[#allocation2 + $0xa0] sm:$0xff]
          %v1764 = vld [vmem:[#allocation2 + $0xa8] sm:$0xff]
          %v1765 = vld [vmem:[#allocation2 + $0xb0] sm:$0xff]
          %v1766 = vld [vmem:[#allocation2 + $0xb8] sm:$0xff]
          %v1767 = vld [vmem:[#allocation2 + $0xc0] sm:$0xff]
          %v1768 = vld [vmem:[#allocation2 + $0xc8] sm:$0xff]
          %v1769 = vld [vmem:[#allocation2 + $0xd0] sm:$0xff]
          %v1770 = vld [vmem:[#allocation2 + $0xd8] sm:$0xff]
          %v1771 = vld [vmem:[#allocation2 + $0xe0] sm:$0xff]
          %v1772 = vld [vmem:[#allocation2 + $0xe8] sm:$0xff]
          %v1773 = vld [vmem:[#allocation2 + $0xf0] sm:$0xff]
          %v1774 = vld [vmem:[#allocation2 + $0xf8] sm:$0xff]
          %v1775 = vmax.f32 %v516, %v518
          %1776 = vmax.xlane.f32.xlu0 %v1775
          %v1777 = vpop.xlane.xlu0 %1776
          %v1778 = vmax.f32 %v522, %v524
          %1779 = vmax.xlane.f32.xlu0 %v1778
          %v1780 = vpop.xlane.xlu0 %1779
          %v1781 = vmax.f32 %v528, %v530
          %1782 = vmax.xlane.f32.xlu0 %v1781
          %v1783 = vpop.xlane.xlu0 %1782
          %v1784 = vmax.f32 %v534, %v536
          %1785 = vmax.xlane.f32.xlu0 %v1784
          %v1786 = vpop.xlane.xlu0 %1785
          %v1787 = vmax.f32 %v540, %v542
          %1788 = vmax.xlane.f32.xlu0 %v1787
          %v1789 = vpop.xlane.xlu0 %1788
          %v1790 = vmax.f32 %v546, %v548
          %1791 = vmax.xlane.f32.xlu0 %v1790
          %v1792 = vpop.xlane.xlu0 %1791
          %v1793 = vmax.f32 %v552, %v554
          %1794 = vmax.xlane.f32.xlu0 %v1793
          %v1795 = vpop.xlane.xlu0 %1794
          %v1796 = vmax.f32 %v558, %v560
          %1797 = vmax.xlane.f32.xlu0 %v1796
          %v1798 = vpop.xlane.xlu0 %1797
          %v1799 = vmax.f32 %v564, %v566
          %1800 = vmax.xlane.f32.xlu0 %v1799
          %v1801 = vpop.xlane.xlu0 %1800
          %v1802 = vmax.f32 %v570, %v572
          %1803 = vmax.xlane.f32.xlu0 %v1802
          %v1804 = vpop.xlane.xlu0 %1803
          %v1805 = vmax.f32 %v576, %v578
          %1806 = vmax.xlane.f32.xlu0 %v1805
          %v1807 = vpop.xlane.xlu0 %1806
          %v1808 = vmax.f32 %v582, %v584
          %1809 = vmax.xlane.f32.xlu0 %v1808
          %v1810 = vpop.xlane.xlu0 %1809
          %v1811 = vmax.f32 %v588, %v590
          %1812 = vmax.xlane.f32.xlu0 %v1811
          %v1813 = vpop.xlane.xlu0 %1812
          %v1814 = vmax.f32 %v594, %v596
          %1815 = vmax.xlane.f32.xlu0 %v1814
          %v1816 = vpop.xlane.xlu0 %1815
          %v1817 = vmax.f32 %v600, %v602
          %1818 = vmax.xlane.f32.xlu0 %v1817
          %v1819 = vpop.xlane.xlu0 %1818
          %v1820 = vmax.f32 %v606, %v608
          %1821 = vmax.xlane.f32.xlu0 %v1820
          %v1822 = vpop.xlane.xlu0 %1821
          %v1823 = vmax.f32 %v612, %v614
          %1824 = vmax.xlane.f32.xlu0 %v1823
          %v1825 = vpop.xlane.xlu0 %1824
          %v1826 = vmax.f32 %v618, %v620
          %1827 = vmax.xlane.f32.xlu0 %v1826
          %v1828 = vpop.xlane.xlu0 %1827
          %v1829 = vmax.f32 %v624, %v626
          %1830 = vmax.xlane.f32.xlu0 %v1829
          %v1831 = vpop.xlane.xlu0 %1830
          %v1832 = vmax.f32 %v630, %v632
          %1833 = vmax.xlane.f32.xlu0 %v1832
          %v1834 = vpop.xlane.xlu0 %1833
          %v1835 = vmax.f32 %v636, %v638
          %1836 = vmax.xlane.f32.xlu0 %v1835
          %v1837 = vpop.xlane.xlu0 %1836
          %v1838 = vmax.f32 %v642, %v644
          %1839 = vmax.xlane.f32.xlu0 %v1838
          %v1840 = vpop.xlane.xlu0 %1839
          %v1841 = vmax.f32 %v648, %v650
          %1842 = vmax.xlane.f32.xlu0 %v1841
          %v1843 = vpop.xlane.xlu0 %1842
          %v1844 = vmax.f32 %v654, %v656
          %1845 = vmax.xlane.f32.xlu0 %v1844
          %v1846 = vpop.xlane.xlu0 %1845
          %v1847 = vmax.f32 %v660, %v662
          %1848 = vmax.xlane.f32.xlu0 %v1847
          %v1849 = vpop.xlane.xlu0 %1848
          %v1850 = vmax.f32 %v666, %v668
          %1851 = vmax.xlane.f32.xlu0 %v1850
          %v1852 = vpop.xlane.xlu0 %1851
          %v1853 = vmax.f32 %v672, %v674
          %1854 = vmax.xlane.f32.xlu0 %v1853
          %v1855 = vpop.xlane.xlu0 %1854
          %v1856 = vmax.f32 %v678, %v680
          %1857 = vmax.xlane.f32.xlu0 %v1856
          %v1858 = vpop.xlane.xlu0 %1857
          %v1859 = vmax.f32 %v684, %v686
          %1860 = vmax.xlane.f32.xlu0 %v1859
          %v1861 = vpop.xlane.xlu0 %1860
          %v1862 = vmax.f32 %v690, %v692
          %1863 = vmax.xlane.f32.xlu0 %v1862
          %v1864 = vpop.xlane.xlu0 %1863
          %v1865 = vmax.f32 %v696, %v698
          %1866 = vmax.xlane.f32.xlu0 %v1865
          %v1867 = vpop.xlane.xlu0 %1866
          %v1868 = vmax.f32 %v702, %v704
          %1869 = vmax.xlane.f32.xlu0 %v1868
          %v1870 = vpop.xlane.xlu0 %1869
          %v1871 = vmax.f32 %v1743, %v1777
          %v1872 = vmax.f32 %v1744, %v1780
          %v1873 = vmax.f32 %v1745, %v1783
          %v1874 = vmax.f32 %v1746, %v1786
          %v1875 = vmax.f32 %v1747, %v1789
          %v1876 = vmax.f32 %v1748, %v1792
          %v1877 = vmax.f32 %v1749, %v1795
          %v1878 = vmax.f32 %v1750, %v1798
          %v1879 = vmax.f32 %v1751, %v1801
          %v1880 = vmax.f32 %v1752, %v1804
          %v1881 = vmax.f32 %v1753, %v1807
          %v1882 = vmax.f32 %v1754, %v1810
          %v1883 = vmax.f32 %v1755, %v1813
          %v1884 = vmax.f32 %v1756, %v1816
          %v1885 = vmax.f32 %v1757, %v1819
          %v1886 = vmax.f32 %v1758, %v1822
          %v1887 = vmax.f32 %v1759, %v1825
          %v1888 = vmax.f32 %v1760, %v1828
          %v1889 = vmax.f32 %v1761, %v1831
          %v1890 = vmax.f32 %v1762, %v1834
          %v1891 = vmax.f32 %v1763, %v1837
          %v1892 = vmax.f32 %v1764, %v1840
          %v1893 = vmax.f32 %v1765, %v1843
          %v1894 = vmax.f32 %v1766, %v1846
          %v1895 = vmax.f32 %v1767, %v1849
          %v1896 = vmax.f32 %v1768, %v1852
          %v1897 = vmax.f32 %v1769, %v1855
          %v1898 = vmax.f32 %v1770, %v1858
          %v1899 = vmax.f32 %v1771, %v1861
          %v1900 = vmax.f32 %v1772, %v1864
          %v1901 = vmax.f32 %v1773, %v1867
          %v1902 = vmax.f32 %v1774, %v1870
          %v1903 = vsub.f32 %v1743, %v1871
          %v1904 = vsub.f32 %v1744, %v1872
          %v1905 = vsub.f32 %v1745, %v1873
          %v1906 = vsub.f32 %v1746, %v1874
          %v1907 = vsub.f32 %v1747, %v1875
          %v1908 = vsub.f32 %v1748, %v1876
          %v1909 = vsub.f32 %v1749, %v1877
          %v1910 = vsub.f32 %v1750, %v1878
          %v1911 = vsub.f32 %v1751, %v1879
          %v1912 = vsub.f32 %v1752, %v1880
          %v1913 = vsub.f32 %v1753, %v1881
          %v1914 = vsub.f32 %v1754, %v1882
          %v1915 = vsub.f32 %v1755, %v1883
          %v1916 = vsub.f32 %v1756, %v1884
          %v1917 = vsub.f32 %v1757, %v1885
          %v1918 = vsub.f32 %v1758, %v1886
          %v1919 = vsub.f32 %v1759, %v1887
          %v1920 = vsub.f32 %v1760, %v1888
          %v1921 = vsub.f32 %v1761, %v1889
          %v1922 = vsub.f32 %v1762, %v1890
          %v1923 = vsub.f32 %v1763, %v1891
          %v1924 = vsub.f32 %v1764, %v1892
          %v1925 = vsub.f32 %v1765, %v1893
          %v1926 = vsub.f32 %v1766, %v1894
          %v1927 = vsub.f32 %v1767, %v1895
          %v1928 = vsub.f32 %v1768, %v1896
          %v1929 = vsub.f32 %v1769, %v1897
          %v1930 = vsub.f32 %v1770, %v1898
          %v1931 = vsub.f32 %v1771, %v1899
          %v1932 = vsub.f32 %v1772, %v1900
          %v1933 = vsub.f32 %v1773, %v1901
          %v1934 = vsub.f32 %v1774, %v1902
          %v1935 = vmul.f32 %v1903, 1.442695
          %v1936 = vpow.pop %v1935
          %v1937 = vmul.f32 %v1904, 1.442695
          %v1938 = vpow.pop %v1937
          %v1939 = vmul.f32 %v1905, 1.442695
          %v1940 = vpow.pop %v1939
          %v1941 = vmul.f32 %v1906, 1.442695
          %v1942 = vpow.pop %v1941
          %v1943 = vmul.f32 %v1907, 1.442695
          %v1944 = vpow.pop %v1943
          %v1945 = vmul.f32 %v1908, 1.442695
          %v1946 = vpow.pop %v1945
          %v1947 = vmul.f32 %v1909, 1.442695
          %v1948 = vpow.pop %v1947
          %v1949 = vmul.f32 %v1910, 1.442695
          %v1950 = vpow.pop %v1949
          %v1951 = vmul.f32 %v1911, 1.442695
          %v1952 = vpow.pop %v1951
          %v1953 = vmul.f32 %v1912, 1.442695
          %v1954 = vpow.pop %v1953
          %v1955 = vmul.f32 %v1913, 1.442695
          %v1956 = vpow.pop %v1955
          %v1957 = vmul.f32 %v1914, 1.442695
          %v1958 = vpow.pop %v1957
          %v1959 = vmul.f32 %v1915, 1.442695
          %v1960 = vpow.pop %v1959
          %v1961 = vmul.f32 %v1916, 1.442695
          %v1962 = vpow.pop %v1961
          %v1963 = vmul.f32 %v1917, 1.442695
          %v1964 = vpow.pop %v1963
          %v1965 = vmul.f32 %v1918, 1.442695
          %v1966 = vpow.pop %v1965
          %v1967 = vmul.f32 %v1919, 1.442695
          %v1968 = vpow.pop %v1967
          %v1969 = vmul.f32 %v1920, 1.442695
          %v1970 = vpow.pop %v1969
          %v1971 = vmul.f32 %v1921, 1.442695
          %v1972 = vpow.pop %v1971
          %v1973 = vmul.f32 %v1922, 1.442695
          %v1974 = vpow.pop %v1973
          %v1975 = vmul.f32 %v1923, 1.442695
          %v1976 = vpow.pop %v1975
          %v1977 = vmul.f32 %v1924, 1.442695
          %v1978 = vpow.pop %v1977
          %v1979 = vmul.f32 %v1925, 1.442695
          %v1980 = vpow.pop %v1979
          %v1981 = vmul.f32 %v1926, 1.442695
          %v1982 = vpow.pop %v1981
          %v1983 = vmul.f32 %v1927, 1.442695
          %v1984 = vpow.pop %v1983
          %v1985 = vmul.f32 %v1928, 1.442695
          %v1986 = vpow.pop %v1985
          %v1987 = vmul.f32 %v1929, 1.442695
          %v1988 = vpow.pop %v1987
          %v1989 = vmul.f32 %v1930, 1.442695
          %v1990 = vpow.pop %v1989
          %v1991 = vmul.f32 %v1931, 1.442695
          %v1992 = vpow.pop %v1991
          %v1993 = vmul.f32 %v1932, 1.442695
          %v1994 = vpow.pop %v1993
          %v1995 = vmul.f32 %v1933, 1.442695
          %v1996 = vpow.pop %v1995
          %v1997 = vmul.f32 %v1934, 1.442695
          %v1998 = vpow.pop %v1997
          %2000 = vset.pattern.permute.xlu0 0
          %2001 = vperm.xlu0 %2000, %v1871
          %v2002 = vpop.permute.xlu0 %2001
          %2005 = vset.pattern.permute.xlu0 0
          %2006 = vperm.xlu0 %2005, %v1872
          %v2007 = vpop.permute.xlu0 %2006
          %2010 = vset.pattern.permute.xlu0 0
          %2011 = vperm.xlu0 %2010, %v1873
          %v2012 = vpop.permute.xlu0 %2011
          %2015 = vset.pattern.permute.xlu0 0
          %2016 = vperm.xlu0 %2015, %v1874
          %v2017 = vpop.permute.xlu0 %2016
          %2020 = vset.pattern.permute.xlu0 0
          %2021 = vperm.xlu0 %2020, %v1875
          %v2022 = vpop.permute.xlu0 %2021
          %2025 = vset.pattern.permute.xlu0 0
          %2026 = vperm.xlu0 %2025, %v1876
          %v2027 = vpop.permute.xlu0 %2026
          %2030 = vset.pattern.permute.xlu0 0
          %2031 = vperm.xlu0 %2030, %v1877
          %v2032 = vpop.permute.xlu0 %2031
          %2035 = vset.pattern.permute.xlu0 0
          %2036 = vperm.xlu0 %2035, %v1878
          %v2037 = vpop.permute.xlu0 %2036
          %2040 = vset.pattern.permute.xlu0 0
          %2041 = vperm.xlu0 %2040, %v1879
          %v2042 = vpop.permute.xlu0 %2041
          %2045 = vset.pattern.permute.xlu0 0
          %2046 = vperm.xlu0 %2045, %v1880
          %v2047 = vpop.permute.xlu0 %2046
          %2050 = vset.pattern.permute.xlu0 0
          %2051 = vperm.xlu0 %2050, %v1881
          %v2052 = vpop.permute.xlu0 %2051
          %2055 = vset.pattern.permute.xlu0 0
          %2056 = vperm.xlu0 %2055, %v1882
          %v2057 = vpop.permute.xlu0 %2056
          %2060 = vset.pattern.permute.xlu0 0
          %2061 = vperm.xlu0 %2060, %v1883
          %v2062 = vpop.permute.xlu0 %2061
          %2065 = vset.pattern.permute.xlu0 0
          %2066 = vperm.xlu0 %2065, %v1884
          %v2067 = vpop.permute.xlu0 %2066
          %2070 = vset.pattern.permute.xlu0 0
          %2071 = vperm.xlu0 %2070, %v1885
          %v2072 = vpop.permute.xlu0 %2071
          %2075 = vset.pattern.permute.xlu0 0
          %2076 = vperm.xlu0 %2075, %v1886
          %v2077 = vpop.permute.xlu0 %2076
          %2080 = vset.pattern.permute.xlu0 0
          %2081 = vperm.xlu0 %2080, %v1887
          %v2082 = vpop.permute.xlu0 %2081
          %2085 = vset.pattern.permute.xlu0 0
          %2086 = vperm.xlu0 %2085, %v1888
          %v2087 = vpop.permute.xlu0 %2086
          %2090 = vset.pattern.permute.xlu0 0
          %2091 = vperm.xlu0 %2090, %v1889
          %v2092 = vpop.permute.xlu0 %2091
          %2095 = vset.pattern.permute.xlu0 0
          %2096 = vperm.xlu0 %2095, %v1890
          %v2097 = vpop.permute.xlu0 %2096
          %2100 = vset.pattern.permute.xlu0 0
          %2101 = vperm.xlu0 %2100, %v1891
          %v2102 = vpop.permute.xlu0 %2101
          %2105 = vset.pattern.permute.xlu0 0
          %2106 = vperm.xlu0 %2105, %v1892
          %v2107 = vpop.permute.xlu0 %2106
          %2110 = vset.pattern.permute.xlu0 0
          %2111 = vperm.xlu0 %2110, %v1893
          %v2112 = vpop.permute.xlu0 %2111
          %2115 = vset.pattern.permute.xlu0 0
          %2116 = vperm.xlu0 %2115, %v1894
          %v2117 = vpop.permute.xlu0 %2116
          %2120 = vset.pattern.permute.xlu0 0
          %2121 = vperm.xlu0 %2120, %v1895
          %v2122 = vpop.permute.xlu0 %2121
          %2125 = vset.pattern.permute.xlu0 0
          %2126 = vperm.xlu0 %2125, %v1896
          %v2127 = vpop.permute.xlu0 %2126
          %2130 = vset.pattern.permute.xlu0 0
          %2131 = vperm.xlu0 %2130, %v1897
          %v2132 = vpop.permute.xlu0 %2131
          %2135 = vset.pattern.permute.xlu0 0
          %2136 = vperm.xlu0 %2135, %v1898
          %v2137 = vpop.permute.xlu0 %2136
          %2140 = vset.pattern.permute.xlu0 0
          %2141 = vperm.xlu0 %2140, %v1899
          %v2142 = vpop.permute.xlu0 %2141
          %2145 = vset.pattern.permute.xlu0 0
          %2146 = vperm.xlu0 %2145, %v1900
          %v2147 = vpop.permute.xlu0 %2146
          %2150 = vset.pattern.permute.xlu0 0
          %2151 = vperm.xlu0 %2150, %v1901
          %v2152 = vpop.permute.xlu0 %2151
          %2155 = vset.pattern.permute.xlu0 0
          %2156 = vperm.xlu0 %2155, %v1902
          %v2157 = vpop.permute.xlu0 %2156
          %v2159 = vsub.f32 %v516, %v2002
          %v2160 = vsub.f32 %v518, %v2002
          %v2161 = vsub.f32 %v522, %v2007
          %v2162 = vsub.f32 %v524, %v2007
          %v2163 = vsub.f32 %v528, %v2012
          %v2164 = vsub.f32 %v530, %v2012
          %v2165 = vsub.f32 %v534, %v2017
          %v2166 = vsub.f32 %v536, %v2017
          %v2167 = vsub.f32 %v540, %v2022
          %v2168 = vsub.f32 %v542, %v2022
          %v2169 = vsub.f32 %v546, %v2027
          %v2170 = vsub.f32 %v548, %v2027
          %v2171 = vsub.f32 %v552, %v2032
          %v2172 = vsub.f32 %v554, %v2032
          %v2173 = vsub.f32 %v558, %v2037
          %v2174 = vsub.f32 %v560, %v2037
          %v2175 = vsub.f32 %v564, %v2042
          %v2176 = vsub.f32 %v566, %v2042
          %v2177 = vsub.f32 %v570, %v2047
          %v2178 = vsub.f32 %v572, %v2047
          %v2179 = vsub.f32 %v576, %v2052
          %v2180 = vsub.f32 %v578, %v2052
          %v2181 = vsub.f32 %v582, %v2057
          %v2182 = vsub.f32 %v584, %v2057
          %v2183 = vsub.f32 %v588, %v2062
          %v2184 = vsub.f32 %v590, %v2062
          %v2185 = vsub.f32 %v594, %v2067
          %v2186 = vsub.f32 %v596, %v2067
          %v2187 = vsub.f32 %v600, %v2072
          %v2188 = vsub.f32 %v602, %v2072
          %v2189 = vsub.f32 %v606, %v2077
          %v2190 = vsub.f32 %v608, %v2077
          %v2191 = vsub.f32 %v612, %v2082
          %v2192 = vsub.f32 %v614, %v2082
          %v2193 = vsub.f32 %v618, %v2087
          %v2194 = vsub.f32 %v620, %v2087
          %v2195 = vsub.f32 %v624, %v2092
          %v2196 = vsub.f32 %v626, %v2092
          %v2197 = vsub.f32 %v630, %v2097
          %v2198 = vsub.f32 %v632, %v2097
          %v2199 = vsub.f32 %v636, %v2102
          %v2200 = vsub.f32 %v638, %v2102
          %v2201 = vsub.f32 %v642, %v2107
          %v2202 = vsub.f32 %v644, %v2107
          %v2203 = vsub.f32 %v648, %v2112
          %v2204 = vsub.f32 %v650, %v2112
          %v2205 = vsub.f32 %v654, %v2117
          %v2206 = vsub.f32 %v656, %v2117
          %v2207 = vsub.f32 %v660, %v2122
          %v2208 = vsub.f32 %v662, %v2122
          %v2209 = vsub.f32 %v666, %v2127
          %v2210 = vsub.f32 %v668, %v2127
          %v2211 = vsub.f32 %v672, %v2132
          %v2212 = vsub.f32 %v674, %v2132
          %v2213 = vsub.f32 %v678, %v2137
          %v2214 = vsub.f32 %v680, %v2137
          %v2215 = vsub.f32 %v684, %v2142
          %v2216 = vsub.f32 %v686, %v2142
          %v2217 = vsub.f32 %v690, %v2147
          %v2218 = vsub.f32 %v692, %v2147
          %v2219 = vsub.f32 %v696, %v2152
          %v2220 = vsub.f32 %v698, %v2152
          %v2221 = vsub.f32 %v702, %v2157
          %v2222 = vsub.f32 %v704, %v2157
          %v2223 = vmul.f32 %v2159, 1.442695
          %v2224 = vpow.pop %v2223
          %v2225 = vmul.f32 %v2160, 1.442695
          %v2226 = vpow.pop %v2225
          %v2227 = vmul.f32 %v2161, 1.442695
          %v2228 = vpow.pop %v2227
          %v2229 = vmul.f32 %v2162, 1.442695
          %v2230 = vpow.pop %v2229
          %v2231 = vmul.f32 %v2163, 1.442695
          %v2232 = vpow.pop %v2231
          %v2233 = vmul.f32 %v2164, 1.442695
          %v2234 = vpow.pop %v2233
          %v2235 = vmul.f32 %v2165, 1.442695
          %v2236 = vpow.pop %v2235
          %v2237 = vmul.f32 %v2166, 1.442695
          %v2238 = vpow.pop %v2237
          %v2239 = vmul.f32 %v2167, 1.442695
          %v2240 = vpow.pop %v2239
          %v2241 = vmul.f32 %v2168, 1.442695
          %v2242 = vpow.pop %v2241
          %v2243 = vmul.f32 %v2169, 1.442695
          %v2244 = vpow.pop %v2243
          %v2245 = vmul.f32 %v2170, 1.442695
          %v2246 = vpow.pop %v2245
          %v2247 = vmul.f32 %v2171, 1.442695
          %v2248 = vpow.pop %v2247
          %v2249 = vmul.f32 %v2172, 1.442695
          %v2250 = vpow.pop %v2249
          %v2251 = vmul.f32 %v2173, 1.442695
          %v2252 = vpow.pop %v2251
          %v2253 = vmul.f32 %v2174, 1.442695
          %v2254 = vpow.pop %v2253
          %v2255 = vmul.f32 %v2175, 1.442695
          %v2256 = vpow.pop %v2255
          %v2257 = vmul.f32 %v2176, 1.442695
          %v2258 = vpow.pop %v2257
          %v2259 = vmul.f32 %v2177, 1.442695
          %v2260 = vpow.pop %v2259
          %v2261 = vmul.f32 %v2178, 1.442695
          %v2262 = vpow.pop %v2261
          %v2263 = vmul.f32 %v2179, 1.442695
          %v2264 = vpow.pop %v2263
          %v2265 = vmul.f32 %v2180, 1.442695
          %v2266 = vpow.pop %v2265
          %v2267 = vmul.f32 %v2181, 1.442695
          %v2268 = vpow.pop %v2267
          %v2269 = vmul.f32 %v2182, 1.442695
          %v2270 = vpow.pop %v2269
          %v2271 = vmul.f32 %v2183, 1.442695
          %v2272 = vpow.pop %v2271
          %v2273 = vmul.f32 %v2184, 1.442695
          %v2274 = vpow.pop %v2273
          %v2275 = vmul.f32 %v2185, 1.442695
          %v2276 = vpow.pop %v2275
          %v2277 = vmul.f32 %v2186, 1.442695
          %v2278 = vpow.pop %v2277
          %v2279 = vmul.f32 %v2187, 1.442695
          %v2280 = vpow.pop %v2279
          %v2281 = vmul.f32 %v2188, 1.442695
          %v2282 = vpow.pop %v2281
          %v2283 = vmul.f32 %v2189, 1.442695
          %v2284 = vpow.pop %v2283
          %v2285 = vmul.f32 %v2190, 1.442695
          %v2286 = vpow.pop %v2285
          %v2287 = vmul.f32 %v2191, 1.442695
          %v2288 = vpow.pop %v2287
          %v2289 = vmul.f32 %v2192, 1.442695
          %v2290 = vpow.pop %v2289
          %v2291 = vmul.f32 %v2193, 1.442695
          %v2292 = vpow.pop %v2291
          %v2293 = vmul.f32 %v2194, 1.442695
          %v2294 = vpow.pop %v2293
          %v2295 = vmul.f32 %v2195, 1.442695
          %v2296 = vpow.pop %v2295
          %v2297 = vmul.f32 %v2196, 1.442695
          %v2298 = vpow.pop %v2297
          %v2299 = vmul.f32 %v2197, 1.442695
          %v2300 = vpow.pop %v2299
          %v2301 = vmul.f32 %v2198, 1.442695
          %v2302 = vpow.pop %v2301
          %v2303 = vmul.f32 %v2199, 1.442695
          %v2304 = vpow.pop %v2303
          %v2305 = vmul.f32 %v2200, 1.442695
          %v2306 = vpow.pop %v2305
          %v2307 = vmul.f32 %v2201, 1.442695
          %v2308 = vpow.pop %v2307
          %v2309 = vmul.f32 %v2202, 1.442695
          %v2310 = vpow.pop %v2309
          %v2311 = vmul.f32 %v2203, 1.442695
          %v2312 = vpow.pop %v2311
          %v2313 = vmul.f32 %v2204, 1.442695
          %v2314 = vpow.pop %v2313
          %v2315 = vmul.f32 %v2205, 1.442695
          %v2316 = vpow.pop %v2315
          %v2317 = vmul.f32 %v2206, 1.442695
          %v2318 = vpow.pop %v2317
          %v2319 = vmul.f32 %v2207, 1.442695
          %v2320 = vpow.pop %v2319
          %v2321 = vmul.f32 %v2208, 1.442695
          %v2322 = vpow.pop %v2321
          %v2323 = vmul.f32 %v2209, 1.442695
          %v2324 = vpow.pop %v2323
          %v2325 = vmul.f32 %v2210, 1.442695
          %v2326 = vpow.pop %v2325
          %v2327 = vmul.f32 %v2211, 1.442695
          %v2328 = vpow.pop %v2327
          %v2329 = vmul.f32 %v2212, 1.442695
          %v2330 = vpow.pop %v2329
          %v2331 = vmul.f32 %v2213, 1.442695
          %v2332 = vpow.pop %v2331
          %v2333 = vmul.f32 %v2214, 1.442695
          %v2334 = vpow.pop %v2333
          %v2335 = vmul.f32 %v2215, 1.442695
          %v2336 = vpow.pop %v2335
          %v2337 = vmul.f32 %v2216, 1.442695
          %v2338 = vpow.pop %v2337
          %v2339 = vmul.f32 %v2217, 1.442695
          %v2340 = vpow.pop %v2339
          %v2341 = vmul.f32 %v2218, 1.442695
          %v2342 = vpow.pop %v2341
          %v2343 = vmul.f32 %v2219, 1.442695
          %v2344 = vpow.pop %v2343
          %v2345 = vmul.f32 %v2220, 1.442695
          %v2346 = vpow.pop %v2345
          %v2347 = vmul.f32 %v2221, 1.442695
          %v2348 = vpow.pop %v2347
          %v2349 = vmul.f32 %v2222, 1.442695
          %v2350 = vpow.pop %v2349
          %v2351 = vld [vmem:[#allocation3] sm:$0xff]
          %v2352 = vld [vmem:[#allocation3 + $0x8] sm:$0xff]
          %v2353 = vld [vmem:[#allocation3 + $0x10] sm:$0xff]
          %v2354 = vld [vmem:[#allocation3 + $0x18] sm:$0xff]
          %v2355 = vld [vmem:[#allocation3 + $0x20] sm:$0xff]
          %v2356 = vld [vmem:[#allocation3 + $0x28] sm:$0xff]
          %v2357 = vld [vmem:[#allocation3 + $0x30] sm:$0xff]
          %v2358 = vld [vmem:[#allocation3 + $0x38] sm:$0xff]
          %v2359 = vld [vmem:[#allocation3 + $0x40] sm:$0xff]
          %v2360 = vld [vmem:[#allocation3 + $0x48] sm:$0xff]
          %v2361 = vld [vmem:[#allocation3 + $0x50] sm:$0xff]
          %v2362 = vld [vmem:[#allocation3 + $0x58] sm:$0xff]
          %v2363 = vld [vmem:[#allocation3 + $0x60] sm:$0xff]
          %v2364 = vld [vmem:[#allocation3 + $0x68] sm:$0xff]
          %v2365 = vld [vmem:[#allocation3 + $0x70] sm:$0xff]
          %v2366 = vld [vmem:[#allocation3 + $0x78] sm:$0xff]
          %v2367 = vld [vmem:[#allocation3 + $0x80] sm:$0xff]
          %v2368 = vld [vmem:[#allocation3 + $0x88] sm:$0xff]
          %v2369 = vld [vmem:[#allocation3 + $0x90] sm:$0xff]
          %v2370 = vld [vmem:[#allocation3 + $0x98] sm:$0xff]
          %v2371 = vld [vmem:[#allocation3 + $0xa0] sm:$0xff]
          %v2372 = vld [vmem:[#allocation3 + $0xa8] sm:$0xff]
          %v2373 = vld [vmem:[#allocation3 + $0xb0] sm:$0xff]
          %v2374 = vld [vmem:[#allocation3 + $0xb8] sm:$0xff]
          %v2375 = vld [vmem:[#allocation3 + $0xc0] sm:$0xff]
          %v2376 = vld [vmem:[#allocation3 + $0xc8] sm:$0xff]
          %v2377 = vld [vmem:[#allocation3 + $0xd0] sm:$0xff]
          %v2378 = vld [vmem:[#allocation3 + $0xd8] sm:$0xff]
          %v2379 = vld [vmem:[#allocation3 + $0xe0] sm:$0xff]
          %v2380 = vld [vmem:[#allocation3 + $0xe8] sm:$0xff]
          %v2381 = vld [vmem:[#allocation3 + $0xf0] sm:$0xff]
          %v2382 = vld [vmem:[#allocation3 + $0xf8] sm:$0xff]
          %v2383 = vmul.f32 %v1936, %v2351
          %v2384 = vmul.f32 %v1938, %v2352
          %v2385 = vmul.f32 %v1940, %v2353
          %v2386 = vmul.f32 %v1942, %v2354
          %v2387 = vmul.f32 %v1944, %v2355
          %v2388 = vmul.f32 %v1946, %v2356
          %v2389 = vmul.f32 %v1948, %v2357
          %v2390 = vmul.f32 %v1950, %v2358
          %v2391 = vmul.f32 %v1952, %v2359
          %v2392 = vmul.f32 %v1954, %v2360
          %v2393 = vmul.f32 %v1956, %v2361
          %v2394 = vmul.f32 %v1958, %v2362
          %v2395 = vmul.f32 %v1960, %v2363
          %v2396 = vmul.f32 %v1962, %v2364
          %v2397 = vmul.f32 %v1964, %v2365
          %v2398 = vmul.f32 %v1966, %v2366
          %v2399 = vmul.f32 %v1968, %v2367
          %v2400 = vmul.f32 %v1970, %v2368
          %v2401 = vmul.f32 %v1972, %v2369
          %v2402 = vmul.f32 %v1974, %v2370
          %v2403 = vmul.f32 %v1976, %v2371
          %v2404 = vmul.f32 %v1978, %v2372
          %v2405 = vmul.f32 %v1980, %v2373
          %v2406 = vmul.f32 %v1982, %v2374
          %v2407 = vmul.f32 %v1984, %v2375
          %v2408 = vmul.f32 %v1986, %v2376
          %v2409 = vmul.f32 %v1988, %v2377
          %v2410 = vmul.f32 %v1990, %v2378
          %v2411 = vmul.f32 %v1992, %v2379
          %v2412 = vmul.f32 %v1994, %v2380
          %v2413 = vmul.f32 %v1996, %v2381
          %v2414 = vmul.f32 %v1998, %v2382
          %v2415 = vadd.f32 %v2224, %v2226
          %2416 = vadd.xlane.f32.xlu0 %v2415
          %v2417 = vpop.xlane.xlu0 %2416
          %v2418 = vadd.f32 %v2228, %v2230
          %2419 = vadd.xlane.f32.xlu0 %v2418
          %v2420 = vpop.xlane.xlu0 %2419
          %v2421 = vadd.f32 %v2232, %v2234
          %2422 = vadd.xlane.f32.xlu0 %v2421
          %v2423 = vpop.xlane.xlu0 %2422
          %v2424 = vadd.f32 %v2236, %v2238
          %2425 = vadd.xlane.f32.xlu0 %v2424
          %v2426 = vpop.xlane.xlu0 %2425
          %v2427 = vadd.f32 %v2240, %v2242
          %2428 = vadd.xlane.f32.xlu0 %v2427
          %v2429 = vpop.xlane.xlu0 %2428
          %v2430 = vadd.f32 %v2244, %v2246
          %2431 = vadd.xlane.f32.xlu0 %v2430
          %v2432 = vpop.xlane.xlu0 %2431
          %v2433 = vadd.f32 %v2248, %v2250
          %2434 = vadd.xlane.f32.xlu0 %v2433
          %v2435 = vpop.xlane.xlu0 %2434
          %v2436 = vadd.f32 %v2252, %v2254
          %2437 = vadd.xlane.f32.xlu0 %v2436
          %v2438 = vpop.xlane.xlu0 %2437
          %v2439 = vadd.f32 %v2256, %v2258
          %2440 = vadd.xlane.f32.xlu0 %v2439
          %v2441 = vpop.xlane.xlu0 %2440
          %v2442 = vadd.f32 %v2260, %v2262
          %2443 = vadd.xlane.f32.xlu0 %v2442
          %v2444 = vpop.xlane.xlu0 %2443
          %v2445 = vadd.f32 %v2264, %v2266
          %2446 = vadd.xlane.f32.xlu0 %v2445
          %v2447 = vpop.xlane.xlu0 %2446
          %v2448 = vadd.f32 %v2268, %v2270
          %2449 = vadd.xlane.f32.xlu0 %v2448
          %v2450 = vpop.xlane.xlu0 %2449
          %v2451 = vadd.f32 %v2272, %v2274
          %2452 = vadd.xlane.f32.xlu0 %v2451
          %v2453 = vpop.xlane.xlu0 %2452
          %v2454 = vadd.f32 %v2276, %v2278
          %2455 = vadd.xlane.f32.xlu0 %v2454
          %v2456 = vpop.xlane.xlu0 %2455
          %v2457 = vadd.f32 %v2280, %v2282
          %2458 = vadd.xlane.f32.xlu0 %v2457
          %v2459 = vpop.xlane.xlu0 %2458
          %v2460 = vadd.f32 %v2284, %v2286
          %2461 = vadd.xlane.f32.xlu0 %v2460
          %v2462 = vpop.xlane.xlu0 %2461
          %v2463 = vadd.f32 %v2288, %v2290
          %2464 = vadd.xlane.f32.xlu0 %v2463
          %v2465 = vpop.xlane.xlu0 %2464
          %v2466 = vadd.f32 %v2292, %v2294
          %2467 = vadd.xlane.f32.xlu0 %v2466
          %v2468 = vpop.xlane.xlu0 %2467
          %v2469 = vadd.f32 %v2296, %v2298
          %2470 = vadd.xlane.f32.xlu0 %v2469
          %v2471 = vpop.xlane.xlu0 %2470
          %v2472 = vadd.f32 %v2300, %v2302
          %2473 = vadd.xlane.f32.xlu0 %v2472
          %v2474 = vpop.xlane.xlu0 %2473
          %v2475 = vadd.f32 %v2304, %v2306
          %2476 = vadd.xlane.f32.xlu0 %v2475
          %v2477 = vpop.xlane.xlu0 %2476
          %v2478 = vadd.f32 %v2308, %v2310
          %2479 = vadd.xlane.f32.xlu0 %v2478
          %v2480 = vpop.xlane.xlu0 %2479
          %v2481 = vadd.f32 %v2312, %v2314
          %2482 = vadd.xlane.f32.xlu0 %v2481
          %v2483 = vpop.xlane.xlu0 %2482
          %v2484 = vadd.f32 %v2316, %v2318
          %2485 = vadd.xlane.f32.xlu0 %v2484
          %v2486 = vpop.xlane.xlu0 %2485
          %v2487 = vadd.f32 %v2320, %v2322
          %2488 = vadd.xlane.f32.xlu0 %v2487
          %v2489 = vpop.xlane.xlu0 %2488
          %v2490 = vadd.f32 %v2324, %v2326
          %2491 = vadd.xlane.f32.xlu0 %v2490
          %v2492 = vpop.xlane.xlu0 %2491
          %v2493 = vadd.f32 %v2328, %v2330
          %2494 = vadd.xlane.f32.xlu0 %v2493
          %v2495 = vpop.xlane.xlu0 %2494
          %v2496 = vadd.f32 %v2332, %v2334
          %2497 = vadd.xlane.f32.xlu0 %v2496
          %v2498 = vpop.xlane.xlu0 %2497
          %v2499 = vadd.f32 %v2336, %v2338
          %2500 = vadd.xlane.f32.xlu0 %v2499
          %v2501 = vpop.xlane.xlu0 %2500
          %v2502 = vadd.f32 %v2340, %v2342
          %2503 = vadd.xlane.f32.xlu0 %v2502
          %v2504 = vpop.xlane.xlu0 %2503
          %v2505 = vadd.f32 %v2344, %v2346
          %2506 = vadd.xlane.f32.xlu0 %v2505
          %v2507 = vpop.xlane.xlu0 %2506
          %v2508 = vadd.f32 %v2348, %v2350
          %2509 = vadd.xlane.f32.xlu0 %v2508
          %v2510 = vpop.xlane.xlu0 %2509
          %v2511 = vadd.f32 %v2383, %v2417
          %v2512 = vadd.f32 %v2384, %v2420
          %v2513 = vadd.f32 %v2385, %v2423
          %v2514 = vadd.f32 %v2386, %v2426
          %v2515 = vadd.f32 %v2387, %v2429
          %v2516 = vadd.f32 %v2388, %v2432
          %v2517 = vadd.f32 %v2389, %v2435
          %v2518 = vadd.f32 %v2390, %v2438
          %v2519 = vadd.f32 %v2391, %v2441
          %v2520 = vadd.f32 %v2392, %v2444
          %v2521 = vadd.f32 %v2393, %v2447
          %v2522 = vadd.f32 %v2394, %v2450
          %v2523 = vadd.f32 %v2395, %v2453
          %v2524 = vadd.f32 %v2396, %v2456
          %v2525 = vadd.f32 %v2397, %v2459
          %v2526 = vadd.f32 %v2398, %v2462
          %v2527 = vadd.f32 %v2399, %v2465
          %v2528 = vadd.f32 %v2400, %v2468
          %v2529 = vadd.f32 %v2401, %v2471
          %v2530 = vadd.f32 %v2402, %v2474
          %v2531 = vadd.f32 %v2403, %v2477
          %v2532 = vadd.f32 %v2404, %v2480
          %v2533 = vadd.f32 %v2405, %v2483
          %v2534 = vadd.f32 %v2406, %v2486
          %v2535 = vadd.f32 %v2407, %v2489
          %v2536 = vadd.f32 %v2408, %v2492
          %v2537 = vadd.f32 %v2409, %v2495
          %v2538 = vadd.f32 %v2410, %v2498
          %v2539 = vadd.f32 %v2411, %v2501
          %v2540 = vadd.f32 %v2412, %v2504
          %v2541 = vadd.f32 %v2413, %v2507
          %v2542 = vadd.f32 %v2414, %v2510
          %vm2543 = vcmask 7168
          %2544 = vst.msk [vmem:[#allocation3] sm:$0xff] %vm2543, %v2511
          %2545 = vst.msk [vmem:[#allocation3 + $0x8] sm:$0xff] %vm2543, %v2512
          %2546 = vst.msk [vmem:[#allocation3 + $0x10] sm:$0xff] %vm2543, %v2513
          %2547 = vst.msk [vmem:[#allocation3 + $0x18] sm:$0xff] %vm2543, %v2514
          %2548 = vst.msk [vmem:[#allocation3 + $0x20] sm:$0xff] %vm2543, %v2515
          %2549 = vst.msk [vmem:[#allocation3 + $0x28] sm:$0xff] %vm2543, %v2516
          %2550 = vst.msk [vmem:[#allocation3 + $0x30] sm:$0xff] %vm2543, %v2517
          %2551 = vst.msk [vmem:[#allocation3 + $0x38] sm:$0xff] %vm2543, %v2518
          %2552 = vst.msk [vmem:[#allocation3 + $0x40] sm:$0xff] %vm2543, %v2519
          %2553 = vst.msk [vmem:[#allocation3 + $0x48] sm:$0xff] %vm2543, %v2520
          %2554 = vst.msk [vmem:[#allocation3 + $0x50] sm:$0xff] %vm2543, %v2521
          %2555 = vst.msk [vmem:[#allocation3 + $0x58] sm:$0xff] %vm2543, %v2522
          %2556 = vst.msk [vmem:[#allocation3 + $0x60] sm:$0xff] %vm2543, %v2523
          %2557 = vst.msk [vmem:[#allocation3 + $0x68] sm:$0xff] %vm2543, %v2524
          %2558 = vst.msk [vmem:[#allocation3 + $0x70] sm:$0xff] %vm2543, %v2525
          %2559 = vst.msk [vmem:[#allocation3 + $0x78] sm:$0xff] %vm2543, %v2526
          %2560 = vst.msk [vmem:[#allocation3 + $0x80] sm:$0xff] %vm2543, %v2527
          %2561 = vst.msk [vmem:[#allocation3 + $0x88] sm:$0xff] %vm2543, %v2528
          %2562 = vst.msk [vmem:[#allocation3 + $0x90] sm:$0xff] %vm2543, %v2529
          %2563 = vst.msk [vmem:[#allocation3 + $0x98] sm:$0xff] %vm2543, %v2530
          %2564 = vst.msk [vmem:[#allocation3 + $0xa0] sm:$0xff] %vm2543, %v2531
          %2565 = vst.msk [vmem:[#allocation3 + $0xa8] sm:$0xff] %vm2543, %v2532
          %2566 = vst.msk [vmem:[#allocation3 + $0xb0] sm:$0xff] %vm2543, %v2533
          %2567 = vst.msk [vmem:[#allocation3 + $0xb8] sm:$0xff] %vm2543, %v2534
          %2568 = vst.msk [vmem:[#allocation3 + $0xc0] sm:$0xff] %vm2543, %v2535
          %2569 = vst.msk [vmem:[#allocation3 + $0xc8] sm:$0xff] %vm2543, %v2536
          %2570 = vst.msk [vmem:[#allocation3 + $0xd0] sm:$0xff] %vm2543, %v2537
          %2571 = vst.msk [vmem:[#allocation3 + $0xd8] sm:$0xff] %vm2543, %v2538
          %2572 = vst.msk [vmem:[#allocation3 + $0xe0] sm:$0xff] %vm2543, %v2539
          %2573 = vst.msk [vmem:[#allocation3 + $0xe8] sm:$0xff] %vm2543, %v2540
          %2574 = vst.msk [vmem:[#allocation3 + $0xf0] sm:$0xff] %vm2543, %v2541
          %2575 = vst.msk [vmem:[#allocation3 + $0xf8] sm:$0xff] %vm2543, %v2542
          %2576 = vst.msk [vmem:[#allocation2] sm:$0xff] %vm2543, %v1871
          %2577 = vst.msk [vmem:[#allocation2 + $0x8] sm:$0xff] %vm2543, %v1872
          %2578 = vst.msk [vmem:[#allocation2 + $0x10] sm:$0xff] %vm2543, %v1873
          %2579 = vst.msk [vmem:[#allocation2 + $0x18] sm:$0xff] %vm2543, %v1874
          %2580 = vst.msk [vmem:[#allocation2 + $0x20] sm:$0xff] %vm2543, %v1875
          %2581 = vst.msk [vmem:[#allocation2 + $0x28] sm:$0xff] %vm2543, %v1876
          %2582 = vst.msk [vmem:[#allocation2 + $0x30] sm:$0xff] %vm2543, %v1877
          %2583 = vst.msk [vmem:[#allocation2 + $0x38] sm:$0xff] %vm2543, %v1878
          %2584 = vst.msk [vmem:[#allocation2 + $0x40] sm:$0xff] %vm2543, %v1879
          %2585 = vst.msk [vmem:[#allocation2 + $0x48] sm:$0xff] %vm2543, %v1880
          %2586 = vst.msk [vmem:[#allocation2 + $0x50] sm:$0xff] %vm2543, %v1881
          %2587 = vst.msk [vmem:[#allocation2 + $0x58] sm:$0xff] %vm2543, %v1882
          %2588 = vst.msk [vmem:[#allocation2 + $0x60] sm:$0xff] %vm2543, %v1883
          %2589 = vst.msk [vmem:[#allocation2 + $0x68] sm:$0xff] %vm2543, %v1884
          %2590 = vst.msk [vmem:[#allocation2 + $0x70] sm:$0xff] %vm2543, %v1885
          %2591 = vst.msk [vmem:[#allocation2 + $0x78] sm:$0xff] %vm2543, %v1886
          %2592 = vst.msk [vmem:[#allocation2 + $0x80] sm:$0xff] %vm2543, %v1887
          %2593 = vst.msk [vmem:[#allocation2 + $0x88] sm:$0xff] %vm2543, %v1888
          %2594 = vst.msk [vmem:[#allocation2 + $0x90] sm:$0xff] %vm2543, %v1889
          %2595 = vst.msk [vmem:[#allocation2 + $0x98] sm:$0xff] %vm2543, %v1890
          %2596 = vst.msk [vmem:[#allocation2 + $0xa0] sm:$0xff] %vm2543, %v1891
          %2597 = vst.msk [vmem:[#allocation2 + $0xa8] sm:$0xff] %vm2543, %v1892
          %2598 = vst.msk [vmem:[#allocation2 + $0xb0] sm:$0xff] %vm2543, %v1893
          %2599 = vst.msk [vmem:[#allocation2 + $0xb8] sm:$0xff] %vm2543, %v1894
          %2600 = vst.msk [vmem:[#allocation2 + $0xc0] sm:$0xff] %vm2543, %v1895
          %2601 = vst.msk [vmem:[#allocation2 + $0xc8] sm:$0xff] %vm2543, %v1896
          %2602 = vst.msk [vmem:[#allocation2 + $0xd0] sm:$0xff] %vm2543, %v1897
          %2603 = vst.msk [vmem:[#allocation2 + $0xd8] sm:$0xff] %vm2543, %v1898
          %2604 = vst.msk [vmem:[#allocation2 + $0xe0] sm:$0xff] %vm2543, %v1899
          %2605 = vst.msk [vmem:[#allocation2 + $0xe8] sm:$0xff] %vm2543, %v1900
          %2606 = vst.msk [vmem:[#allocation2 + $0xf0] sm:$0xff] %vm2543, %v1901
          %2607 = vst.msk [vmem:[#allocation2 + $0xf8] sm:$0xff] %vm2543, %v1902
        $region56: #{tpu_custom_call.1} parent=31 // pred_fallthru
          _
        %p2608 = scmp.eq.s32.totalorder %s25, 1
        // Predicated region
        $region57: #{tpu_custom_call.1} parent=31 // pred_check
          %p2609 = pneg %p2608
        $region58: #{tpu_custom_call.1} parent=31 // pred_check_branch
          %2611 = sbr.rel (%p2609) target = $region60
        $region59: #{tpu_custom_call.1} parent=31 // pred_region
          %v2612 = vld [vmem:[%s242] sm:$0xff]
          %v2613 = vld [vmem:[%s242 + $0x8] sm:$0xff]
          %v2614 = vld [vmem:[%s242 + $0x10] sm:$0xff]
          %v2615 = vld [vmem:[%s242 + $0x18] sm:$0xff]
          %v2616 = vld [vmem:[%s242 + $0x20] sm:$0xff]
          %v2617 = vld [vmem:[%s242 + $0x28] sm:$0xff]
          %v2618 = vld [vmem:[%s242 + $0x30] sm:$0xff]
          %v2619 = vld [vmem:[%s242 + $0x38] sm:$0xff]
          %v2620 = vld [vmem:[%s242 + $0x40] sm:$0xff]
          %v2621 = vld [vmem:[%s242 + $0x48] sm:$0xff]
          %v2622 = vld [vmem:[%s242 + $0x50] sm:$0xff]
          %v2623 = vld [vmem:[%s242 + $0x58] sm:$0xff]
          %v2624 = vld [vmem:[%s242 + $0x60] sm:$0xff]
          %v2625 = vld [vmem:[%s242 + $0x68] sm:$0xff]
          %v2626 = vld [vmem:[%s242 + $0x70] sm:$0xff]
          %v2627 = vld [vmem:[%s242 + $0x78] sm:$0xff]
          %v2628 = vld [vmem:[%s242 + $0x80] sm:$0xff]
          %v2629 = vld [vmem:[%s242 + $0x88] sm:$0xff]
          %v2630 = vld [vmem:[%s242 + $0x90] sm:$0xff]
          %v2631 = vld [vmem:[%s242 + $0x98] sm:$0xff]
          %v2632 = vld [vmem:[%s242 + $0xa0] sm:$0xff]
          %v2633 = vld [vmem:[%s242 + $0xa8] sm:$0xff]
          %v2634 = vld [vmem:[%s242 + $0xb0] sm:$0xff]
          %v2635 = vld [vmem:[%s242 + $0xb8] sm:$0xff]
          %v2636 = vld [vmem:[%s242 + $0xc0] sm:$0xff]
          %v2637 = vld [vmem:[%s242 + $0xc8] sm:$0xff]
          %v2638 = vld [vmem:[%s242 + $0xd0] sm:$0xff]
          %v2639 = vld [vmem:[%s242 + $0xd8] sm:$0xff]
          %v2640 = vld [vmem:[%s242 + $0xe0] sm:$0xff]
          %v2641 = vld [vmem:[%s242 + $0xe8] sm:$0xff]
          %v2642 = vld [vmem:[%s242 + $0xf0] sm:$0xff]
          %v2643 = vld [vmem:[%s242 + $0xf8] sm:$0xff]
          %v2644 = vmul.f32 %v385, %v2612
          %v2645 = vmul.f32 %v386, %v2613
          %v2646 = vmul.f32 %v387, %v2614
          %v2647 = vmul.f32 %v388, %v2615
          %v2648 = vmul.f32 %v389, %v2616
          %v2649 = vmul.f32 %v390, %v2617
          %v2650 = vmul.f32 %v391, %v2618
          %v2651 = vmul.f32 %v392, %v2619
          %v2652 = vmul.f32 %v393, %v2620
          %v2653 = vmul.f32 %v394, %v2621
          %v2654 = vmul.f32 %v395, %v2622
          %v2655 = vmul.f32 %v396, %v2623
          %v2656 = vmul.f32 %v397, %v2624
          %v2657 = vmul.f32 %v398, %v2625
          %v2658 = vmul.f32 %v399, %v2626
          %v2659 = vmul.f32 %v400, %v2627
          %v2660 = vmul.f32 %v401, %v2628
          %v2661 = vmul.f32 %v402, %v2629
          %v2662 = vmul.f32 %v403, %v2630
          %v2663 = vmul.f32 %v404, %v2631
          %v2664 = vmul.f32 %v405, %v2632
          %v2665 = vmul.f32 %v406, %v2633
          %v2666 = vmul.f32 %v407, %v2634
          %v2667 = vmul.f32 %v408, %v2635
          %v2668 = vmul.f32 %v409, %v2636
          %v2669 = vmul.f32 %v410, %v2637
          %v2670 = vmul.f32 %v411, %v2638
          %v2671 = vmul.f32 %v412, %v2639
          %v2672 = vmul.f32 %v413, %v2640
          %v2673 = vmul.f32 %v414, %v2641
          %v2674 = vmul.f32 %v415, %v2642
          %v2675 = vmul.f32 %v416, %v2643
          %2676 = vadd.xlane.f32.xlu0 %v2644
          %v2677 = vpop.xlane.xlu0 %2676
          %2678 = vadd.xlane.f32.xlu0 %v2645
          %v2679 = vpop.xlane.xlu0 %2678
          %2680 = vadd.xlane.f32.xlu0 %v2646
          %v2681 = vpop.xlane.xlu0 %2680
          %2682 = vadd.xlane.f32.xlu0 %v2647
          %v2683 = vpop.xlane.xlu0 %2682
          %2684 = vadd.xlane.f32.xlu0 %v2648
          %v2685 = vpop.xlane.xlu0 %2684
          %2686 = vadd.xlane.f32.xlu0 %v2649
          %v2687 = vpop.xlane.xlu0 %2686
          %2688 = vadd.xlane.f32.xlu0 %v2650
          %v2689 = vpop.xlane.xlu0 %2688
          %2690 = vadd.xlane.f32.xlu0 %v2651
          %v2691 = vpop.xlane.xlu0 %2690
          %2692 = vadd.xlane.f32.xlu0 %v2652
          %v2693 = vpop.xlane.xlu0 %2692
          %2694 = vadd.xlane.f32.xlu0 %v2653
          %v2695 = vpop.xlane.xlu0 %2694
          %2696 = vadd.xlane.f32.xlu0 %v2654
          %v2697 = vpop.xlane.xlu0 %2696
          %2698 = vadd.xlane.f32.xlu0 %v2655
          %v2699 = vpop.xlane.xlu0 %2698
          %2700 = vadd.xlane.f32.xlu0 %v2656
          %v2701 = vpop.xlane.xlu0 %2700
          %2702 = vadd.xlane.f32.xlu0 %v2657
          %v2703 = vpop.xlane.xlu0 %2702
          %2704 = vadd.xlane.f32.xlu0 %v2658
          %v2705 = vpop.xlane.xlu0 %2704
          %2706 = vadd.xlane.f32.xlu0 %v2659
          %v2707 = vpop.xlane.xlu0 %2706
          %2708 = vadd.xlane.f32.xlu0 %v2660
          %v2709 = vpop.xlane.xlu0 %2708
          %2710 = vadd.xlane.f32.xlu0 %v2661
          %v2711 = vpop.xlane.xlu0 %2710
          %2712 = vadd.xlane.f32.xlu0 %v2662
          %v2713 = vpop.xlane.xlu0 %2712
          %2714 = vadd.xlane.f32.xlu0 %v2663
          %v2715 = vpop.xlane.xlu0 %2714
          %2716 = vadd.xlane.f32.xlu0 %v2664
          %v2717 = vpop.xlane.xlu0 %2716
          %2718 = vadd.xlane.f32.xlu0 %v2665
          %v2719 = vpop.xlane.xlu0 %2718
          %2720 = vadd.xlane.f32.xlu0 %v2666
          %v2721 = vpop.xlane.xlu0 %2720
          %2722 = vadd.xlane.f32.xlu0 %v2667
          %v2723 = vpop.xlane.xlu0 %2722
          %2724 = vadd.xlane.f32.xlu0 %v2668
          %v2725 = vpop.xlane.xlu0 %2724
          %2726 = vadd.xlane.f32.xlu0 %v2669
          %v2727 = vpop.xlane.xlu0 %2726
          %2728 = vadd.xlane.f32.xlu0 %v2670
          %v2729 = vpop.xlane.xlu0 %2728
          %2730 = vadd.xlane.f32.xlu0 %v2671
          %v2731 = vpop.xlane.xlu0 %2730
          %2732 = vadd.xlane.f32.xlu0 %v2672
          %v2733 = vpop.xlane.xlu0 %2732
          %2734 = vadd.xlane.f32.xlu0 %v2673
          %v2735 = vpop.xlane.xlu0 %2734
          %2736 = vadd.xlane.f32.xlu0 %v2674
          %v2737 = vpop.xlane.xlu0 %2736
          %2738 = vadd.xlane.f32.xlu0 %v2675
          %v2739 = vpop.xlane.xlu0 %2738
          %v2740 = vsub.f32 0.0, %v2677
          %v2741 = vsub.f32 0.0, %v2679
          %v2742 = vsub.f32 0.0, %v2681
          %v2743 = vsub.f32 0.0, %v2683
          %v2744 = vsub.f32 0.0, %v2685
          %v2745 = vsub.f32 0.0, %v2687
          %v2746 = vsub.f32 0.0, %v2689
          %v2747 = vsub.f32 0.0, %v2691
          %v2748 = vsub.f32 0.0, %v2693
          %v2749 = vsub.f32 0.0, %v2695
          %v2750 = vsub.f32 0.0, %v2697
          %v2751 = vsub.f32 0.0, %v2699
          %v2752 = vsub.f32 0.0, %v2701
          %v2753 = vsub.f32 0.0, %v2703
          %v2754 = vsub.f32 0.0, %v2705
          %v2755 = vsub.f32 0.0, %v2707
          %v2756 = vsub.f32 0.0, %v2709
          %v2757 = vsub.f32 0.0, %v2711
          %v2758 = vsub.f32 0.0, %v2713
          %v2759 = vsub.f32 0.0, %v2715
          %v2760 = vsub.f32 0.0, %v2717
          %v2761 = vsub.f32 0.0, %v2719
          %v2762 = vsub.f32 0.0, %v2721
          %v2763 = vsub.f32 0.0, %v2723
          %v2764 = vsub.f32 0.0, %v2725
          %v2765 = vsub.f32 0.0, %v2727
          %v2766 = vsub.f32 0.0, %v2729
          %v2767 = vsub.f32 0.0, %v2731
          %v2768 = vsub.f32 0.0, %v2733
          %v2769 = vsub.f32 0.0, %v2735
          %v2770 = vsub.f32 0.0, %v2737
          %v2771 = vsub.f32 0.0, %v2739
          %v2772 = vld [vmem:[#allocation2] sm:$0xff]
          %v2773 = vld [vmem:[#allocation2 + $0x8] sm:$0xff]
          %v2774 = vld [vmem:[#allocation2 + $0x10] sm:$0xff]
          %v2775 = vld [vmem:[#allocation2 + $0x18] sm:$0xff]
          %v2776 = vld [vmem:[#allocation2 + $0x20] sm:$0xff]
          %v2777 = vld [vmem:[#allocation2 + $0x28] sm:$0xff]
          %v2778 = vld [vmem:[#allocation2 + $0x30] sm:$0xff]
          %v2779 = vld [vmem:[#allocation2 + $0x38] sm:$0xff]
          %v2780 = vld [vmem:[#allocation2 + $0x40] sm:$0xff]
          %v2781 = vld [vmem:[#allocation2 + $0x48] sm:$0xff]
          %v2782 = vld [vmem:[#allocation2 + $0x50] sm:$0xff]
          %v2783 = vld [vmem:[#allocation2 + $0x58] sm:$0xff]
          %v2784 = vld [vmem:[#allocation2 + $0x60] sm:$0xff]
          %v2785 = vld [vmem:[#allocation2 + $0x68] sm:$0xff]
          %v2786 = vld [vmem:[#allocation2 + $0x70] sm:$0xff]
          %v2787 = vld [vmem:[#allocation2 + $0x78] sm:$0xff]
          %v2788 = vld [vmem:[#allocation2 + $0x80] sm:$0xff]
          %v2789 = vld [vmem:[#allocation2 + $0x88] sm:$0xff]
          %v2790 = vld [vmem:[#allocation2 + $0x90] sm:$0xff]
          %v2791 = vld [vmem:[#allocation2 + $0x98] sm:$0xff]
          %v2792 = vld [vmem:[#allocation2 + $0xa0] sm:$0xff]
          %v2793 = vld [vmem:[#allocation2 + $0xa8] sm:$0xff]
          %v2794 = vld [vmem:[#allocation2 + $0xb0] sm:$0xff]
          %v2795 = vld [vmem:[#allocation2 + $0xb8] sm:$0xff]
          %v2796 = vld [vmem:[#allocation2 + $0xc0] sm:$0xff]
          %v2797 = vld [vmem:[#allocation2 + $0xc8] sm:$0xff]
          %v2798 = vld [vmem:[#allocation2 + $0xd0] sm:$0xff]
          %v2799 = vld [vmem:[#allocation2 + $0xd8] sm:$0xff]
          %v2800 = vld [vmem:[#allocation2 + $0xe0] sm:$0xff]
          %v2801 = vld [vmem:[#allocation2 + $0xe8] sm:$0xff]
          %v2802 = vld [vmem:[#allocation2 + $0xf0] sm:$0xff]
          %v2803 = vld [vmem:[#allocation2 + $0xf8] sm:$0xff]
          %v2804 = vadd.f32 %v2740, %v2772
          %v2805 = vadd.f32 %v2741, %v2773
          %v2806 = vadd.f32 %v2742, %v2774
          %v2807 = vadd.f32 %v2743, %v2775
          %v2808 = vadd.f32 %v2744, %v2776
          %v2809 = vadd.f32 %v2745, %v2777
          %v2810 = vadd.f32 %v2746, %v2778
          %v2811 = vadd.f32 %v2747, %v2779
          %v2812 = vadd.f32 %v2748, %v2780
          %v2813 = vadd.f32 %v2749, %v2781
          %v2814 = vadd.f32 %v2750, %v2782
          %v2815 = vadd.f32 %v2751, %v2783
          %v2816 = vadd.f32 %v2752, %v2784
          %v2817 = vadd.f32 %v2753, %v2785
          %v2818 = vadd.f32 %v2754, %v2786
          %v2819 = vadd.f32 %v2755, %v2787
          %v2820 = vadd.f32 %v2756, %v2788
          %v2821 = vadd.f32 %v2757, %v2789
          %v2822 = vadd.f32 %v2758, %v2790
          %v2823 = vadd.f32 %v2759, %v2791
          %v2824 = vadd.f32 %v2760, %v2792
          %v2825 = vadd.f32 %v2761, %v2793
          %v2826 = vadd.f32 %v2762, %v2794
          %v2827 = vadd.f32 %v2763, %v2795
          %v2828 = vadd.f32 %v2764, %v2796
          %v2829 = vadd.f32 %v2765, %v2797
          %v2830 = vadd.f32 %v2766, %v2798
          %v2831 = vadd.f32 %v2767, %v2799
          %v2832 = vadd.f32 %v2768, %v2800
          %v2833 = vadd.f32 %v2769, %v2801
          %v2834 = vadd.f32 %v2770, %v2802
          %v2835 = vadd.f32 %v2771, %v2803
          %v2836 = vld [vmem:[#allocation3] sm:$0xff]
          %v2837 = vld [vmem:[#allocation3 + $0x8] sm:$0xff]
          %v2838 = vld [vmem:[#allocation3 + $0x10] sm:$0xff]
          %v2839 = vld [vmem:[#allocation3 + $0x18] sm:$0xff]
          %v2840 = vld [vmem:[#allocation3 + $0x20] sm:$0xff]
          %v2841 = vld [vmem:[#allocation3 + $0x28] sm:$0xff]
          %v2842 = vld [vmem:[#allocation3 + $0x30] sm:$0xff]
          %v2843 = vld [vmem:[#allocation3 + $0x38] sm:$0xff]
          %v2844 = vld [vmem:[#allocation3 + $0x40] sm:$0xff]
          %v2845 = vld [vmem:[#allocation3 + $0x48] sm:$0xff]
          %v2846 = vld [vmem:[#allocation3 + $0x50] sm:$0xff]
          %v2847 = vld [vmem:[#allocation3 + $0x58] sm:$0xff]
          %v2848 = vld [vmem:[#allocation3 + $0x60] sm:$0xff]
          %v2849 = vld [vmem:[#allocation3 + $0x68] sm:$0xff]
          %v2850 = vld [vmem:[#allocation3 + $0x70] sm:$0xff]
          %v2851 = vld [vmem:[#allocation3 + $0x78] sm:$0xff]
          %v2852 = vld [vmem:[#allocation3 + $0x80] sm:$0xff]
          %v2853 = vld [vmem:[#allocation3 + $0x88] sm:$0xff]
          %v2854 = vld [vmem:[#allocation3 + $0x90] sm:$0xff]
          %v2855 = vld [vmem:[#allocation3 + $0x98] sm:$0xff]
          %v2856 = vld [vmem:[#allocation3 + $0xa0] sm:$0xff]
          %v2857 = vld [vmem:[#allocation3 + $0xa8] sm:$0xff]
          %v2858 = vld [vmem:[#allocation3 + $0xb0] sm:$0xff]
          %v2859 = vld [vmem:[#allocation3 + $0xb8] sm:$0xff]
          %v2860 = vld [vmem:[#allocation3 + $0xc0] sm:$0xff]
          %v2861 = vld [vmem:[#allocation3 + $0xc8] sm:$0xff]
          %v2862 = vld [vmem:[#allocation3 + $0xd0] sm:$0xff]
          %v2863 = vld [vmem:[#allocation3 + $0xd8] sm:$0xff]
          %v2864 = vld [vmem:[#allocation3 + $0xe0] sm:$0xff]
          %v2865 = vld [vmem:[#allocation3 + $0xe8] sm:$0xff]
          %v2866 = vld [vmem:[#allocation3 + $0xf0] sm:$0xff]
          %v2867 = vld [vmem:[#allocation3 + $0xf8] sm:$0xff]
          %v2868 = vlog2.pop %v2836
          %v2869 = vmul.f32 %v2868, 0.6931472
          %v2870 = vlog2.pop %v2837
          %v2871 = vmul.f32 %v2870, 0.6931472
          %v2872 = vlog2.pop %v2838
          %v2873 = vmul.f32 %v2872, 0.6931472
          %v2874 = vlog2.pop %v2839
          %v2875 = vmul.f32 %v2874, 0.6931472
          %v2876 = vlog2.pop %v2840
          %v2877 = vmul.f32 %v2876, 0.6931472
          %v2878 = vlog2.pop %v2841
          %v2879 = vmul.f32 %v2878, 0.6931472
          %v2880 = vlog2.pop %v2842
          %v2881 = vmul.f32 %v2880, 0.6931472
          %v2882 = vlog2.pop %v2843
          %v2883 = vmul.f32 %v2882, 0.6931472
          %v2884 = vlog2.pop %v2844
          %v2885 = vmul.f32 %v2884, 0.6931472
          %v2886 = vlog2.pop %v2845
          %v2887 = vmul.f32 %v2886, 0.6931472
          %v2888 = vlog2.pop %v2846
          %v2889 = vmul.f32 %v2888, 0.6931472
          %v2890 = vlog2.pop %v2847
          %v2891 = vmul.f32 %v2890, 0.6931472
          %v2892 = vlog2.pop %v2848
          %v2893 = vmul.f32 %v2892, 0.6931472
          %v2894 = vlog2.pop %v2849
          %v2895 = vmul.f32 %v2894, 0.6931472
          %v2896 = vlog2.pop %v2850
          %v2897 = vmul.f32 %v2896, 0.6931472
          %v2898 = vlog2.pop %v2851
          %v2899 = vmul.f32 %v2898, 0.6931472
          %v2900 = vlog2.pop %v2852
          %v2901 = vmul.f32 %v2900, 0.6931472
          %v2902 = vlog2.pop %v2853
          %v2903 = vmul.f32 %v2902, 0.6931472
          %v2904 = vlog2.pop %v2854
          %v2905 = vmul.f32 %v2904, 0.6931472
          %v2906 = vlog2.pop %v2855
          %v2907 = vmul.f32 %v2906, 0.6931472
          %v2908 = vlog2.pop %v2856
          %v2909 = vmul.f32 %v2908, 0.6931472
          %v2910 = vlog2.pop %v2857
          %v2911 = vmul.f32 %v2910, 0.6931472
          %v2912 = vlog2.pop %v2858
          %v2913 = vmul.f32 %v2912, 0.6931472
          %v2914 = vlog2.pop %v2859
          %v2915 = vmul.f32 %v2914, 0.6931472
          %v2916 = vlog2.pop %v2860
          %v2917 = vmul.f32 %v2916, 0.6931472
          %v2918 = vlog2.pop %v2861
          %v2919 = vmul.f32 %v2918, 0.6931472
          %v2920 = vlog2.pop %v2862
          %v2921 = vmul.f32 %v2920, 0.6931472
          %v2922 = vlog2.pop %v2863
          %v2923 = vmul.f32 %v2922, 0.6931472
          %v2924 = vlog2.pop %v2864
          %v2925 = vmul.f32 %v2924, 0.6931472
          %v2926 = vlog2.pop %v2865
          %v2927 = vmul.f32 %v2926, 0.6931472
          %v2928 = vlog2.pop %v2866
          %v2929 = vmul.f32 %v2928, 0.6931472
          %v2930 = vlog2.pop %v2867
          %v2931 = vmul.f32 %v2930, 0.6931472
          %v2932 = vadd.f32 %v2804, %v2869
          %v2933 = vadd.f32 %v2805, %v2871
          %v2934 = vadd.f32 %v2806, %v2873
          %v2935 = vadd.f32 %v2807, %v2875
          %v2936 = vadd.f32 %v2808, %v2877
          %v2937 = vadd.f32 %v2809, %v2879
          %v2938 = vadd.f32 %v2810, %v2881
          %v2939 = vadd.f32 %v2811, %v2883
          %v2940 = vadd.f32 %v2812, %v2885
          %v2941 = vadd.f32 %v2813, %v2887
          %v2942 = vadd.f32 %v2814, %v2889
          %v2943 = vadd.f32 %v2815, %v2891
          %v2944 = vadd.f32 %v2816, %v2893
          %v2945 = vadd.f32 %v2817, %v2895
          %v2946 = vadd.f32 %v2818, %v2897
          %v2947 = vadd.f32 %v2819, %v2899
          %v2948 = vadd.f32 %v2820, %v2901
          %v2949 = vadd.f32 %v2821, %v2903
          %v2950 = vadd.f32 %v2822, %v2905
          %v2951 = vadd.f32 %v2823, %v2907
          %v2952 = vadd.f32 %v2824, %v2909
          %v2953 = vadd.f32 %v2825, %v2911
          %v2954 = vadd.f32 %v2826, %v2913
          %v2955 = vadd.f32 %v2827, %v2915
          %v2956 = vadd.f32 %v2828, %v2917
          %v2957 = vadd.f32 %v2829, %v2919
          %v2958 = vadd.f32 %v2830, %v2921
          %v2959 = vadd.f32 %v2831, %v2923
          %v2960 = vadd.f32 %v2832, %v2925
          %v2961 = vadd.f32 %v2833, %v2927
          %v2962 = vadd.f32 %v2834, %v2929
          %v2963 = vadd.f32 %v2835, %v2931
          %vm2964 = vcmask 7168
          %2965 = vst.msk [vmem:[%s282] sm:$0xff] %vm2964, %v2932
          %2966 = vst.msk [vmem:[%s282 + $0x8] sm:$0xff] %vm2964, %v2933
          %2967 = vst.msk [vmem:[%s282 + $0x10] sm:$0xff] %vm2964, %v2934
          %2968 = vst.msk [vmem:[%s282 + $0x18] sm:$0xff] %vm2964, %v2935
          %2969 = vst.msk [vmem:[%s282 + $0x20] sm:$0xff] %vm2964, %v2936
          %2970 = vst.msk [vmem:[%s282 + $0x28] sm:$0xff] %vm2964, %v2937
          %2971 = vst.msk [vmem:[%s282 + $0x30] sm:$0xff] %vm2964, %v2938
          %2972 = vst.msk [vmem:[%s282 + $0x38] sm:$0xff] %vm2964, %v2939
          %2973 = vst.msk [vmem:[%s282 + $0x40] sm:$0xff] %vm2964, %v2940
          %2974 = vst.msk [vmem:[%s282 + $0x48] sm:$0xff] %vm2964, %v2941
          %2975 = vst.msk [vmem:[%s282 + $0x50] sm:$0xff] %vm2964, %v2942
          %2976 = vst.msk [vmem:[%s282 + $0x58] sm:$0xff] %vm2964, %v2943
          %2977 = vst.msk [vmem:[%s282 + $0x60] sm:$0xff] %vm2964, %v2944
          %2978 = vst.msk [vmem:[%s282 + $0x68] sm:$0xff] %vm2964, %v2945
          %2979 = vst.msk [vmem:[%s282 + $0x70] sm:$0xff] %vm2964, %v2946
          %2980 = vst.msk [vmem:[%s282 + $0x78] sm:$0xff] %vm2964, %v2947
          %2981 = vst.msk [vmem:[%s282 + $0x80] sm:$0xff] %vm2964, %v2948
          %2982 = vst.msk [vmem:[%s282 + $0x88] sm:$0xff] %vm2964, %v2949
          %2983 = vst.msk [vmem:[%s282 + $0x90] sm:$0xff] %vm2964, %v2950
          %2984 = vst.msk [vmem:[%s282 + $0x98] sm:$0xff] %vm2964, %v2951
          %2985 = vst.msk [vmem:[%s282 + $0xa0] sm:$0xff] %vm2964, %v2952
          %2986 = vst.msk [vmem:[%s282 + $0xa8] sm:$0xff] %vm2964, %v2953
          %2987 = vst.msk [vmem:[%s282 + $0xb0] sm:$0xff] %vm2964, %v2954
          %2988 = vst.msk [vmem:[%s282 + $0xb8] sm:$0xff] %vm2964, %v2955
          %2989 = vst.msk [vmem:[%s282 + $0xc0] sm:$0xff] %vm2964, %v2956
          %2990 = vst.msk [vmem:[%s282 + $0xc8] sm:$0xff] %vm2964, %v2957
          %2991 = vst.msk [vmem:[%s282 + $0xd0] sm:$0xff] %vm2964, %v2958
          %2992 = vst.msk [vmem:[%s282 + $0xd8] sm:$0xff] %vm2964, %v2959
          %2993 = vst.msk [vmem:[%s282 + $0xe0] sm:$0xff] %vm2964, %v2960
          %2994 = vst.msk [vmem:[%s282 + $0xe8] sm:$0xff] %vm2964, %v2961
          %2995 = vst.msk [vmem:[%s282 + $0xf0] sm:$0xff] %vm2964, %v2962
          %2996 = vst.msk [vmem:[%s282 + $0xf8] sm:$0xff] %vm2964, %v2963
        $region60: #{tpu_custom_call.1} parent=31 // pred_fallthru
          _
        %s2997 = smul.u32 32, %s24
        %p2998 = scmp.lt.s32.totalorder %s2997, 63
        %s2999 = scalar_select %p2998, %s2997, 63
        %s3000 = smul.addr %s2999, 8
        %s3001 = scalar_lea.vmem %s3, %s3000
        // Predicated region
        $region61: #{tpu_custom_call.1} parent=31 // pred_check
          %p3002 = pneg %p128
        $region62: #{tpu_custom_call.1} parent=31 // pred_check_branch
          %3004 = sbr.rel (%p3002) target = $region64
        $region63: #{tpu_custom_call.1} parent=31 // pred_region
          %s3005 = smul.u32 32, %s24
        $region64: #{tpu_custom_call.1} parent=31 // pred_fallthru
          _
      $region32: #{tpu_custom_call.1} parent=5 // pred_fallthru
        _
      %p3006 = scmp.le.s32.totalorder 2, %s15
      // Predicated region
      $region65: #{tpu_custom_call.1} parent=5 // pred_check
        %p3007 = pneg %p3006
      $region66: #{tpu_custom_call.1} parent=5 // pred_check_branch
        %3009 = sbr.rel (%p3007) target = $region68
      $region67: #{tpu_custom_call.1} parent=5 // pred_region
        %s3010 = ssub.s32 %s15, 2
        // Predicated region
        $region69: #{tpu_custom_call.1} parent=67 // pred_check
          %p3011 = pneg %p134
        $region70: #{tpu_custom_call.1} parent=67 // pred_check_branch
          %3013 = sbr.rel (%p3011) target = $region72
        $region71: #{tpu_custom_call.1} parent=67 // pred_region
          %s3014 = smul.u32 32, %s26
          %p3015 = scmp.lt.s32.totalorder %s3014, 63
          %s3016 = scalar_select %p3015, %s3014, 63
          %s3017 = smul.addr %s3016, 8
          %s3018 = scalar_lea.vmem %s3, %s3017
        $region72: #{tpu_custom_call.1} parent=67 // pred_fallthru
          _
      $region68: #{tpu_custom_call.1} parent=5 // pred_fallthru
        _
    $region6: #{tpu_custom_call.1} parent=1 // loop_footer
      %s19 = sadd.s32 1, %s15
    $region7: #{tpu_custom_call.1} parent=1 // loop_footer_branch
      %14 = sbr.rel target = $region3
    $region8: #{tpu_custom_call.1} parent=1 // loop_exit
      _
    %3019 = vsyncpa [#allocation5], 1
    %s3020 = scalar_lea.sflag [#allocation5], 1
    %3021 = vsyncpa %s3020, 1
    %3022 = vsyncpa [#allocation7], 1
    %s3023 = scalar_lea.sflag [#allocation7], 1
    %3024 = vsyncpa %s3023, 1

</llo_original>
